<compile_context>
chip_gen: v7x
topology: tpu7x:2x2x1
jax: 0.10.0
libtpu: 0.0.40
codegen_flags: <defaults>
</compile_context>

<pallas_src>
import numpy as np
import jax
import jax.numpy as jnp
from jax.experimental import pallas as pl
from jax.experimental.pallas import tpu as pltpu


# ---------------------------------------------------------------------------
# Fixed geometry of FastMNISTCNN (28x28 input is required by Linear(16*12*12)).
# ---------------------------------------------------------------------------
H0 = W0 = 28                 # input spatial
C1, H1, W1 = 8, 26, 26       # after conv1 (3x3 valid)
C2, H2, W2 = 16, 24, 24      # after conv2 (3x3 valid)
HP = WP = 12                 # after 2x2 max pool
NCLS = 10
K = 3

L1 = W1 * C1                 # 208 fused (width, channel) lanes after conv1
L2 = W2 * C2                 # 384 fused (width, channel) lanes after conv2
LP = L2 - C2                 # 368 lanes kept after the shifted width-max


# ---------------------------------------------------------------------------
# Fused forward kernel
# ---------------------------------------------------------------------------
def _fused_kernel(x_ref, t1_ref, b1_ref, t2_ref, b2_ref, wl_ref, bl_ref, o_ref):
    tb = x_ref.shape[0]
    x = x_ref[...]                                            # (TB, 28, 28)

    # ---- conv1 (1->8, 3x3 valid) + bias + ReLU: 3 MXU matmuls -------------
    acc1 = None
    for kh in range(K):
        xs = x[:, kh:kh + H1, :].reshape(tb * H1, W0)         # (TB*26, 28)
        d = jnp.dot(xs, t1_ref[kh], preferred_element_type=jnp.float32)
        acc1 = d if acc1 is None else acc1 + d                # (TB*26, 208)
    c1 = jnp.maximum(acc1 + b1_ref[...], 0.0).reshape(tb, H1, L1)

    # ---- conv2 (8->16, 3x3 valid) + bias + ReLU: 3 MXU matmuls ------------
    acc2 = None
    for kh in range(K):
        cs = c1[:, kh:kh + H2, :].reshape(tb * H2, L1)        # (TB*24, 208)
        d = jnp.dot(cs, t2_ref[kh], preferred_element_type=jnp.float32)
        acc2 = d if acc2 is None else acc2 + d                # (TB*24, 384)
    c2 = jnp.maximum(acc2 + b2_ref[...], 0.0).reshape(tb, H2, L2)

    # ---- 2x2 max pool as two shifted maxes --------------------------------
    # rows: max(h, h+1) -> valid pooled rows are the even ones.
    hm = jnp.maximum(c2[:, 0:H2 - 1, :], c2[:, 1:H2, :])      # (TB, 23, 384)
    # width: lanes are w*C2 + c, so the width neighbour is C2=16 lanes away;
    # valid pooled entries sit at even w (odd-w lanes are dropped because the
    # corresponding classifier weight rows are zero).
    m = jnp.maximum(hm[:, :, 0:LP], hm[:, :, C2:L2])          # (TB, 23, 368)

    # ---- classifier: 12 row-block matmuls (one per pooled row hp) ---------
    logits = None
    for hp in range(HP):
        d = jnp.dot(m[:, 2 * hp, :], wl_ref[hp],
                    preferred_element_type=jnp.float32)        # (TB, 10)
        logits = d if logits is None else logits + d
    o_ref[...] = logits + bl_ref[...]


# ---------------------------------------------------------------------------
# Wrapper-side weight restructuring (trace-time, constant w.r.t. activations)
# ---------------------------------------------------------------------------
def _conv_toeplitz(w, win, wout):
    """(Cout, Cin, 3, 3) -> (3, Win*Cin, Wout*Cout) block-Toeplitz matrices.

    Input lanes are (wi*Cin + ci), output lanes are (wo*Cout + co)."""
    cout, cin, k, _ = w.shape
    s = np.zeros((k, win, wout), np.float32)                  # S[kw, wi, wo]
    for kw in range(k):
        for wo in range(wout):
            s[kw, wo + kw, wo] = 1.0
    s = jnp.asarray(s)
    ts = []
    for kh in range(k):
        # A[wi, ci, wo, co] = sum_kw S[kw, wi, wo] * w[co, ci, kh, kw]
        a = jnp.einsum("kio,cdk->idoc", s, w[:, :, kh, :])
        ts.append(a.reshape(win * cin, wout * cout))
    return jnp.stack(ts, axis=0)


def _classifier_blocks(wl):
    """PyTorch Linear weight (10, 16*12*12) -> (12, 368, 10) blocks matching
    the kernel's pooled layout.  Block hp, row (w*16 + c) maps to feature
    c*144 + hp*12 + w//2 for even w; rows for odd w are zero."""
    lane = np.arange(LP)
    w = lane // C2                     # width index 0..22 in the shifted-max
    c = lane % C2
    valid = (w % 2) == 0
    wp = w // 2
    hp = np.arange(HP)[:, None]
    feat = c[None, :] * (HP * WP) + hp * WP + wp[None, :]     # (12, 368)
    feat = np.where(valid[None, :], feat, 0)
    gathered = jnp.asarray(wl, jnp.float32).T[jnp.asarray(feat)]   # (12,368,10)
    return jnp.where(jnp.asarray(valid)[None, :, None], gathered, 0.0)


def fast_mnist_cnn_forward(x_nchw, params, *, batch_tile=64):
    w1, b1, w2, b2, wl, bl = params
    x = jnp.asarray(x_nchw, jnp.float32)[:, 0]                # (B, 28, 28), Cin=1
    B = x.shape[0]

    tb = min(B, batch_tile)
    bp = ((B + tb - 1) // tb) * tb
    if bp != B:
        x = jnp.pad(x, ((0, bp - B), (0, 0), (0, 0)))

    t1 = _conv_toeplitz(jnp.asarray(w1, jnp.float32), W0, W1)       # (3, 28, 208)
    t2 = _conv_toeplitz(jnp.asarray(w2, jnp.float32), W1, W2)       # (3, 208, 384)
    b1_row = jnp.tile(jnp.asarray(b1, jnp.float32), W1)[None, :]    # (1, 208)
    b2_row = jnp.tile(jnp.asarray(b2, jnp.float32), W2)[None, :]    # (1, 384)
    wlb = _classifier_blocks(wl)                                    # (12, 368, 10)
    bl_row = jnp.asarray(bl, jnp.float32)[None, :]                  # (1, 10)

    flops = 2 * bp * (K * H1 * W0 * L1 + K * H2 * L1 * L2 + HP * LP * NCLS)
    bytes_accessed = 4 * (bp * H0 * W0 + bp * NCLS + t1.size + t2.size
                          + wlb.size + b1_row.size + b2_row.size + bl_row.size)

    out = pl.pallas_call(
        _fused_kernel,
        out_shape=jax.ShapeDtypeStruct((bp, NCLS), jnp.float32),
        grid=(bp // tb,),
        in_specs=[
            pl.BlockSpec((tb, H0, W0), lambda i: (i, 0, 0)),   # x batch tile
            pl.BlockSpec((K, W0, L1), lambda i: (0, 0, 0)),    # conv1 Toeplitz
            pl.BlockSpec((1, L1), lambda i: (0, 0)),           # conv1 bias row
            pl.BlockSpec((K, L1, L2), lambda i: (0, 0, 0)),    # conv2 Toeplitz
            pl.BlockSpec((1, L2), lambda i: (0, 0)),           # conv2 bias row
            pl.BlockSpec((HP, LP, NCLS), lambda i: (0, 0, 0)), # classifier blocks
            pl.BlockSpec((1, NCLS), lambda i: (0, 0)),         # classifier bias
        ],
        out_specs=pl.BlockSpec((tb, NCLS), lambda i: (i, 0)),
        compiler_params=pltpu.CompilerParams(
            dimension_semantics=("parallel",),
            vmem_limit_bytes=32 * 1024 * 1024,
        ),
        cost_estimate=pl.CostEstimate(flops=flops, transcendentals=0,
                                      bytes_accessed=bytes_accessed),
    )(x, t1, b1_row, t2, b2_row, wlb, bl_row)
    return out[:B]


# ---------------------------------------------------------------------------
# Deterministic parameter init (shapes from FastMNISTCNN.__init__)
# ---------------------------------------------------------------------------
def init_params(key):
    k1, k2, k3, k4, k5, k6 = jax.random.split(key, 6)
    w1 = jax.random.normal(k1, (8, 1, 3, 3), jnp.float32) / np.sqrt(1 * 9)
    b1 = jax.random.normal(k2, (8,), jnp.float32) * 0.1
    w2 = jax.random.normal(k3, (16, 8, 3, 3), jnp.float32) / np.sqrt(8 * 9)
    b2 = jax.random.normal(k4, (16,), jnp.float32) * 0.1
    wl = jax.random.normal(k5, (10, 16 * 12 * 12), jnp.float32) / np.sqrt(16 * 144)
    bl = jax.random.normal(k6, (10,), jnp.float32) * 0.1
    return (w1, b1, w2, b2, wl, bl)


# ---------------------------------------------------------------------------
# NumPy reference (exact PyTorch semantics) for verification
# ---------------------------------------------------------------------------
def _np_conv_relu(x, w, b):
    B, Cin, H, W = x.shape
    Cout, _, Kk, _ = w.shape
    Ho, Wo = H - Kk + 1, W - Kk + 1
    out = np.zeros((B, Cout, Ho, Wo), np.float32)
    for kh in range(Kk):
        for kw in range(Kk):
            out += np.einsum('bchw,oc->bohw',
                             x[:, :, kh:kh + Ho, kw:kw + Wo],
                             w[:, :, kh, kw]).astype(np.float32)
    out += b[None, :, None, None]
    return np.maximum(out, 0.0)


def ref_forward(x, w1, b1, w2, b2, wl, bl):
    a = _np_conv_relu(x, w1, b1)
    a = _np_conv_relu(a, w2, b2)
    B, C, H, W = a.shape
    a = a.reshape(B, C, H // 2, 2, W // 2, 2).max(axis=(3, 5))
    flat = a.reshape(B, -1)
    return flat @ wl.T + bl


if __name__ == "__main__":
    key = jax.random.PRNGKey(0)
    kx, kp = jax.random.split(key)
    # MNIST-shaped input (28x28 is required by the Linear(16*12*12, 10) head)
    x = jax.random.normal(kx, (2, 1, 28, 28), jnp.float32)
    params = init_params(kp)

    out = fast_mnist_cnn_forward(x, params)
    out = jax.block_until_ready(out)
    assert out.shape == (2, 10)

    ref = ref_forward(np.asarray(x), *[np.asarray(p) for p in params])
    np.testing.assert_allclose(np.asarray(out), ref, rtol=2e-2, atol=2e-2)

    print("KERNEL_OK")
</pallas_src>

<mosaic_0001>
module attributes {stable_mosaic.version = 11 : i64} {
  func.func @_fused_kernel(%arg0: i32, %arg1: memref<2x28x28xf32, #tpu.memory_space<vmem>>, %arg2: memref<3x28x208xf32, #tpu.memory_space<vmem>>, %arg3: memref<1x208xf32, #tpu.memory_space<vmem>>, %arg4: memref<3x208x384xf32, #tpu.memory_space<vmem>>, %arg5: memref<1x384xf32, #tpu.memory_space<vmem>>, %arg6: memref<12x368x10xf32, #tpu.memory_space<vmem>>, %arg7: memref<1x10xf32, #tpu.memory_space<vmem>>, %arg8: memref<2x10xf32, #tpu.memory_space<vmem>>) attributes {dimension_semantics = [#tpu.dimension_semantics<parallel>], iteration_bounds = array<i64: 1>, scalar_prefetch = 0 : i64, scratch_operands = 0 : i64, tpu.core_type = #tpu.core_type<tc>, window_params = [{transform_indices = @transform_0, window_bounds = array<i64: 2, 28, 28>}, {pipeline_mode = #tpu.pipeline_mode<synchronous>, transform_indices = @transform_1, window_bounds = array<i64: 3, 28, 208>}, {pipeline_mode = #tpu.pipeline_mode<synchronous>, transform_indices = @transform_2, window_bounds = array<i64: 1, 208>}, {pipeline_mode = #tpu.pipeline_mode<synchronous>, transform_indices = @transform_3, window_bounds = array<i64: 3, 208, 384>}, {pipeline_mode = #tpu.pipeline_mode<synchronous>, transform_indices = @transform_4, window_bounds = array<i64: 1, 384>}, {pipeline_mode = #tpu.pipeline_mode<synchronous>, transform_indices = @transform_5, window_bounds = array<i64: 12, 368, 10>}, {pipeline_mode = #tpu.pipeline_mode<synchronous>, transform_indices = @transform_6, window_bounds = array<i64: 1, 10>}, {transform_indices = @transform_7, window_bounds = array<i64: 2, 10>}]} {
    %c0 = arith.constant 0 : index
    %c0_0 = arith.constant 0 : index
    %c0_1 = arith.constant 0 : index
    %0 = vector.load %arg1[%c0, %c0_0, %c0_1] : memref<2x28x28xf32, #tpu.memory_space<vmem>>, vector<2x28x28xf32>
    %1 = vector.extract_strided_slice %0 {offsets = [0, 0, 0], sizes = [2, 26, 28], strides = [1, 1, 1]} : vector<2x28x28xf32> to vector<2x26x28xf32>
    %2 = vector.shape_cast %1 : vector<2x26x28xf32> to vector<52x28xf32>
    %c0_2 = arith.constant 0 : index
    %c0_3 = arith.constant 0 : index
    %c0_4 = arith.constant 0 : index
    %3 = vector.load %arg2[%c0_2, %c0_3, %c0_4] : memref<3x28x208xf32, #tpu.memory_space<vmem>>, vector<1x28x208xf32>
    %4 = vector.shape_cast %3 : vector<1x28x208xf32> to vector<28x208xf32>
    %cst = arith.constant dense<0.000000e+00> : vector<52x208xf32>
    %5 = tpu.matmul %2, %4, %cst {dimension_numbers = #tpu.dot_dimension_numbers<[1], [0], [0], [1], [0, 0, 1, 1], [], []>} : vector<52x28xf32>, vector<28x208xf32>, vector<52x208xf32> -> vector<52x208xf32>
    %6 = vector.extract_strided_slice %0 {offsets = [0, 1, 0], sizes = [2, 26, 28], strides = [1, 1, 1]} : vector<2x28x28xf32> to vector<2x26x28xf32>
    %7 = vector.shape_cast %6 : vector<2x26x28xf32> to vector<52x28xf32>
    %c1 = arith.constant 1 : index
    %c0_5 = arith.constant 0 : index
    %c0_6 = arith.constant 0 : index
    %8 = vector.load %arg2[%c1, %c0_5, %c0_6] : memref<3x28x208xf32, #tpu.memory_space<vmem>>, vector<1x28x208xf32>
    %9 = vector.shape_cast %8 : vector<1x28x208xf32> to vector<28x208xf32>
    %cst_7 = arith.constant dense<0.000000e+00> : vector<52x208xf32>
    %10 = tpu.matmul %7, %9, %cst_7 {dimension_numbers = #tpu.dot_dimension_numbers<[1], [0], [0], [1], [0, 0, 1, 1], [], []>} : vector<52x28xf32>, vector<28x208xf32>, vector<52x208xf32> -> vector<52x208xf32>
    %11 = arith.addf %5, %10 : vector<52x208xf32>
    %12 = vector.extract_strided_slice %0 {offsets = [0, 2, 0], sizes = [2, 26, 28], strides = [1, 1, 1]} : vector<2x28x28xf32> to vector<2x26x28xf32>
    %13 = vector.shape_cast %12 : vector<2x26x28xf32> to vector<52x28xf32>
    %c2 = arith.constant 2 : index
    %c0_8 = arith.constant 0 : index
    %c0_9 = arith.constant 0 : index
    %14 = vector.load %arg2[%c2, %c0_8, %c0_9] : memref<3x28x208xf32, #tpu.memory_space<vmem>>, vector<1x28x208xf32>
    %15 = vector.shape_cast %14 : vector<1x28x208xf32> to vector<28x208xf32>
    %cst_10 = arith.constant dense<0.000000e+00> : vector<52x208xf32>
    %16 = tpu.matmul %13, %15, %cst_10 {dimension_numbers = #tpu.dot_dimension_numbers<[1], [0], [0], [1], [0, 0, 1, 1], [], []>} : vector<52x28xf32>, vector<28x208xf32>, vector<52x208xf32> -> vector<52x208xf32>
    %17 = arith.addf %11, %16 : vector<52x208xf32>
    %c0_11 = arith.constant 0 : index
    %c0_12 = arith.constant 0 : index
    %18 = vector.load %arg3[%c0_11, %c0_12] : memref<1x208xf32, #tpu.memory_space<vmem>>, vector<1x208xf32>
    %19 = vector.broadcast %18 : vector<1x208xf32> to vector<52x208xf32>
    %20 = arith.addf %17, %19 : vector<52x208xf32>
    %cst_13 = arith.constant 0.000000e+00 : f32
    %21 = vector.broadcast %cst_13 : f32 to vector<52x208xf32>
    %22 = arith.maximumf %20, %21 : vector<52x208xf32>
    %23 = vector.shape_cast %22 : vector<52x208xf32> to vector<2x26x208xf32>
    %24 = vector.extract_strided_slice %23 {offsets = [0, 0, 0], sizes = [2, 24, 208], strides = [1, 1, 1]} : vector<2x26x208xf32> to vector<2x24x208xf32>
    %25 = vector.shape_cast %24 : vector<2x24x208xf32> to vector<48x208xf32>
    %c0_14 = arith.constant 0 : index
    %c0_15 = arith.constant 0 : index
    %c0_16 = arith.constant 0 : index
    %26 = vector.load %arg4[%c0_14, %c0_15, %c0_16] : memref<3x208x384xf32, #tpu.memory_space<vmem>>, vector<1x208x384xf32>
    %27 = vector.shape_cast %26 : vector<1x208x384xf32> to vector<208x384xf32>
    %cst_17 = arith.constant dense<0.000000e+00> : vector<48x384xf32>
    %28 = tpu.matmul %25, %27, %cst_17 {dimension_numbers = #tpu.dot_dimension_numbers<[1], [0], [0], [1], [0, 0, 1, 1], [], []>} : vector<48x208xf32>, vector<208x384xf32>, vector<48x384xf32> -> vector<48x384xf32>
    %29 = vector.extract_strided_slice %23 {offsets = [0, 1, 0], sizes = [2, 24, 208], strides = [1, 1, 1]} : vector<2x26x208xf32> to vector<2x24x208xf32>
    %30 = vector.shape_cast %29 : vector<2x24x208xf32> to vector<48x208xf32>
    %c1_18 = arith.constant 1 : index
    %c0_19 = arith.constant 0 : index
    %c0_20 = arith.constant 0 : index
    %31 = vector.load %arg4[%c1_18, %c0_19, %c0_20] : memref<3x208x384xf32, #tpu.memory_space<vmem>>, vector<1x208x384xf32>
    %32 = vector.shape_cast %31 : vector<1x208x384xf32> to vector<208x384xf32>
    %cst_21 = arith.constant dense<0.000000e+00> : vector<48x384xf32>
    %33 = tpu.matmul %30, %32, %cst_21 {dimension_numbers = #tpu.dot_dimension_numbers<[1], [0], [0], [1], [0, 0, 1, 1], [], []>} : vector<48x208xf32>, vector<208x384xf32>, vector<48x384xf32> -> vector<48x384xf32>
    %34 = arith.addf %28, %33 : vector<48x384xf32>
    %35 = vector.extract_strided_slice %23 {offsets = [0, 2, 0], sizes = [2, 24, 208], strides = [1, 1, 1]} : vector<2x26x208xf32> to vector<2x24x208xf32>
    %36 = vector.shape_cast %35 : vector<2x24x208xf32> to vector<48x208xf32>
    %c2_22 = arith.constant 2 : index
    %c0_23 = arith.constant 0 : index
    %c0_24 = arith.constant 0 : index
    %37 = vector.load %arg4[%c2_22, %c0_23, %c0_24] : memref<3x208x384xf32, #tpu.memory_space<vmem>>, vector<1x208x384xf32>
    %38 = vector.shape_cast %37 : vector<1x208x384xf32> to vector<208x384xf32>
    %cst_25 = arith.constant dense<0.000000e+00> : vector<48x384xf32>
    %39 = tpu.matmul %36, %38, %cst_25 {dimension_numbers = #tpu.dot_dimension_numbers<[1], [0], [0], [1], [0, 0, 1, 1], [], []>} : vector<48x208xf32>, vector<208x384xf32>, vector<48x384xf32> -> vector<48x384xf32>
    %40 = arith.addf %34, %39 : vector<48x384xf32>
    %c0_26 = arith.constant 0 : index
    %c0_27 = arith.constant 0 : index
    %41 = vector.load %arg5[%c0_26, %c0_27] : memref<1x384xf32, #tpu.memory_space<vmem>>, vector<1x384xf32>
    %42 = vector.broadcast %41 : vector<1x384xf32> to vector<48x384xf32>
    %43 = arith.addf %40, %42 : vector<48x384xf32>
    %cst_28 = arith.constant 0.000000e+00 : f32
    %44 = vector.broadcast %cst_28 : f32 to vector<48x384xf32>
    %45 = arith.maximumf %43, %44 : vector<48x384xf32>
    %46 = vector.shape_cast %45 : vector<48x384xf32> to vector<2x24x384xf32>
    %47 = vector.extract_strided_slice %46 {offsets = [0, 0, 0], sizes = [2, 23, 384], strides = [1, 1, 1]} : vector<2x24x384xf32> to vector<2x23x384xf32>
    %48 = vector.extract_strided_slice %46 {offsets = [0, 1, 0], sizes = [2, 23, 384], strides = [1, 1, 1]} : vector<2x24x384xf32> to vector<2x23x384xf32>
    %49 = arith.maximumf %47, %48 : vector<2x23x384xf32>
    %50 = vector.extract_strided_slice %49 {offsets = [0, 0, 0], sizes = [2, 23, 368], strides = [1, 1, 1]} : vector<2x23x384xf32> to vector<2x23x368xf32>
    %51 = vector.extract_strided_slice %49 {offsets = [0, 0, 16], sizes = [2, 23, 368], strides = [1, 1, 1]} : vector<2x23x384xf32> to vector<2x23x368xf32>
    %52 = arith.maximumf %50, %51 : vector<2x23x368xf32>
    %53 = vector.extract_strided_slice %52 {offsets = [0, 0, 0], sizes = [2, 1, 368], strides = [1, 1, 1]} : vector<2x23x368xf32> to vector<2x1x368xf32>
    %54 = vector.shape_cast %53 : vector<2x1x368xf32> to vector<2x368xf32>
    %c0_29 = arith.constant 0 : index
    %c0_30 = arith.constant 0 : index
    %c0_31 = arith.constant 0 : index
    %55 = vector.load %arg6[%c0_29, %c0_30, %c0_31] : memref<12x368x10xf32, #tpu.memory_space<vmem>>, vector<1x368x10xf32>
    %56 = vector.shape_cast %55 : vector<1x368x10xf32> to vector<368x10xf32>
    %cst_32 = arith.constant dense<0.000000e+00> : vector<2x10xf32>
    %57 = tpu.matmul %54, %56, %cst_32 {dimension_numbers = #tpu.dot_dimension_numbers<[1], [0], [0], [1], [0, 0, 1, 1], [], []>} : vector<2x368xf32>, vector<368x10xf32>, vector<2x10xf32> -> vector<2x10xf32>
    %58 = vector.extract_strided_slice %52 {offsets = [0, 2, 0], sizes = [2, 1, 368], strides = [1, 1, 1]} : vector<2x23x368xf32> to vector<2x1x368xf32>
    %59 = vector.shape_cast %58 : vector<2x1x368xf32> to vector<2x368xf32>
    %c1_33 = arith.constant 1 : index
    %c0_34 = arith.constant 0 : index
    %c0_35 = arith.constant 0 : index
    %60 = vector.load %arg6[%c1_33, %c0_34, %c0_35] : memref<12x368x10xf32, #tpu.memory_space<vmem>>, vector<1x368x10xf32>
    %61 = vector.shape_cast %60 : vector<1x368x10xf32> to vector<368x10xf32>
    %cst_36 = arith.constant dense<0.000000e+00> : vector<2x10xf32>
    %62 = tpu.matmul %59, %61, %cst_36 {dimension_numbers = #tpu.dot_dimension_numbers<[1], [0], [0], [1], [0, 0, 1, 1], [], []>} : vector<2x368xf32>, vector<368x10xf32>, vector<2x10xf32> -> vector<2x10xf32>
    %63 = arith.addf %57, %62 : vector<2x10xf32>
    %64 = vector.extract_strided_slice %52 {offsets = [0, 4, 0], sizes = [2, 1, 368], strides = [1, 1, 1]} : vector<2x23x368xf32> to vector<2x1x368xf32>
    %65 = vector.shape_cast %64 : vector<2x1x368xf32> to vector<2x368xf32>
    %c2_37 = arith.constant 2 : index
    %c0_38 = arith.constant 0 : index
    %c0_39 = arith.constant 0 : index
    %66 = vector.load %arg6[%c2_37, %c0_38, %c0_39] : memref<12x368x10xf32, #tpu.memory_space<vmem>>, vector<1x368x10xf32>
    %67 = vector.shape_cast %66 : vector<1x368x10xf32> to vector<368x10xf32>
    %cst_40 = arith.constant dense<0.000000e+00> : vector<2x10xf32>
    %68 = tpu.matmul %65, %67, %cst_40 {dimension_numbers = #tpu.dot_dimension_numbers<[1], [0], [0], [1], [0, 0, 1, 1], [], []>} : vector<2x368xf32>, vector<368x10xf32>, vector<2x10xf32> -> vector<2x10xf32>
    %69 = arith.addf %63, %68 : vector<2x10xf32>
    %70 = vector.extract_strided_slice %52 {offsets = [0, 6, 0], sizes = [2, 1, 368], strides = [1, 1, 1]} : vector<2x23x368xf32> to vector<2x1x368xf32>
    %71 = vector.shape_cast %70 : vector<2x1x368xf32> to vector<2x368xf32>
    %c3 = arith.constant 3 : index
    %c0_41 = arith.constant 0 : index
    %c0_42 = arith.constant 0 : index
    %72 = vector.load %arg6[%c3, %c0_41, %c0_42] : memref<12x368x10xf32, #tpu.memory_space<vmem>>, vector<1x368x10xf32>
    %73 = vector.shape_cast %72 : vector<1x368x10xf32> to vector<368x10xf32>
    %cst_43 = arith.constant dense<0.000000e+00> : vector<2x10xf32>
    %74 = tpu.matmul %71, %73, %cst_43 {dimension_numbers = #tpu.dot_dimension_numbers<[1], [0], [0], [1], [0, 0, 1, 1], [], []>} : vector<2x368xf32>, vector<368x10xf32>, vector<2x10xf32> -> vector<2x10xf32>
    %75 = arith.addf %69, %74 : vector<2x10xf32>
    %76 = vector.extract_strided_slice %52 {offsets = [0, 8, 0], sizes = [2, 1, 368], strides = [1, 1, 1]} : vector<2x23x368xf32> to vector<2x1x368xf32>
    %77 = vector.shape_cast %76 : vector<2x1x368xf32> to vector<2x368xf32>
    %c4 = arith.constant 4 : index
    %c0_44 = arith.constant 0 : index
    %c0_45 = arith.constant 0 : index
    %78 = vector.load %arg6[%c4, %c0_44, %c0_45] : memref<12x368x10xf32, #tpu.memory_space<vmem>>, vector<1x368x10xf32>
    %79 = vector.shape_cast %78 : vector<1x368x10xf32> to vector<368x10xf32>
    %cst_46 = arith.constant dense<0.000000e+00> : vector<2x10xf32>
    %80 = tpu.matmul %77, %79, %cst_46 {dimension_numbers = #tpu.dot_dimension_numbers<[1], [0], [0], [1], [0, 0, 1, 1], [], []>} : vector<2x368xf32>, vector<368x10xf32>, vector<2x10xf32> -> vector<2x10xf32>
    %81 = arith.addf %75, %80 : vector<2x10xf32>
    %82 = vector.extract_strided_slice %52 {offsets = [0, 10, 0], sizes = [2, 1, 368], strides = [1, 1, 1]} : vector<2x23x368xf32> to vector<2x1x368xf32>
    %83 = vector.shape_cast %82 : vector<2x1x368xf32> to vector<2x368xf32>
    %c5 = arith.constant 5 : index
    %c0_47 = arith.constant 0 : index
    %c0_48 = arith.constant 0 : index
    %84 = vector.load %arg6[%c5, %c0_47, %c0_48] : memref<12x368x10xf32, #tpu.memory_space<vmem>>, vector<1x368x10xf32>
    %85 = vector.shape_cast %84 : vector<1x368x10xf32> to vector<368x10xf32>
    %cst_49 = arith.constant dense<0.000000e+00> : vector<2x10xf32>
    %86 = tpu.matmul %83, %85, %cst_49 {dimension_numbers = #tpu.dot_dimension_numbers<[1], [0], [0], [1], [0, 0, 1, 1], [], []>} : vector<2x368xf32>, vector<368x10xf32>, vector<2x10xf32> -> vector<2x10xf32>
    %87 = arith.addf %81, %86 : vector<2x10xf32>
    %88 = vector.extract_strided_slice %52 {offsets = [0, 12, 0], sizes = [2, 1, 368], strides = [1, 1, 1]} : vector<2x23x368xf32> to vector<2x1x368xf32>
    %89 = vector.shape_cast %88 : vector<2x1x368xf32> to vector<2x368xf32>
    %c6 = arith.constant 6 : index
    %c0_50 = arith.constant 0 : index
    %c0_51 = arith.constant 0 : index
    %90 = vector.load %arg6[%c6, %c0_50, %c0_51] : memref<12x368x10xf32, #tpu.memory_space<vmem>>, vector<1x368x10xf32>
    %91 = vector.shape_cast %90 : vector<1x368x10xf32> to vector<368x10xf32>
    %cst_52 = arith.constant dense<0.000000e+00> : vector<2x10xf32>
    %92 = tpu.matmul %89, %91, %cst_52 {dimension_numbers = #tpu.dot_dimension_numbers<[1], [0], [0], [1], [0, 0, 1, 1], [], []>} : vector<2x368xf32>, vector<368x10xf32>, vector<2x10xf32> -> vector<2x10xf32>
    %93 = arith.addf %87, %92 : vector<2x10xf32>
    %94 = vector.extract_strided_slice %52 {offsets = [0, 14, 0], sizes = [2, 1, 368], strides = [1, 1, 1]} : vector<2x23x368xf32> to vector<2x1x368xf32>
    %95 = vector.shape_cast %94 : vector<2x1x368xf32> to vector<2x368xf32>
    %c7 = arith.constant 7 : index
    %c0_53 = arith.constant 0 : index
    %c0_54 = arith.constant 0 : index
    %96 = vector.load %arg6[%c7, %c0_53, %c0_54] : memref<12x368x10xf32, #tpu.memory_space<vmem>>, vector<1x368x10xf32>
    %97 = vector.shape_cast %96 : vector<1x368x10xf32> to vector<368x10xf32>
    %cst_55 = arith.constant dense<0.000000e+00> : vector<2x10xf32>
    %98 = tpu.matmul %95, %97, %cst_55 {dimension_numbers = #tpu.dot_dimension_numbers<[1], [0], [0], [1], [0, 0, 1, 1], [], []>} : vector<2x368xf32>, vector<368x10xf32>, vector<2x10xf32> -> vector<2x10xf32>
    %99 = arith.addf %93, %98 : vector<2x10xf32>
    %100 = vector.extract_strided_slice %52 {offsets = [0, 16, 0], sizes = [2, 1, 368], strides = [1, 1, 1]} : vector<2x23x368xf32> to vector<2x1x368xf32>
    %101 = vector.shape_cast %100 : vector<2x1x368xf32> to vector<2x368xf32>
    %c8 = arith.constant 8 : index
    %c0_56 = arith.constant 0 : index
    %c0_57 = arith.constant 0 : index
    %102 = vector.load %arg6[%c8, %c0_56, %c0_57] : memref<12x368x10xf32, #tpu.memory_space<vmem>>, vector<1x368x10xf32>
    %103 = vector.shape_cast %102 : vector<1x368x10xf32> to vector<368x10xf32>
    %cst_58 = arith.constant dense<0.000000e+00> : vector<2x10xf32>
    %104 = tpu.matmul %101, %103, %cst_58 {dimension_numbers = #tpu.dot_dimension_numbers<[1], [0], [0], [1], [0, 0, 1, 1], [], []>} : vector<2x368xf32>, vector<368x10xf32>, vector<2x10xf32> -> vector<2x10xf32>
    %105 = arith.addf %99, %104 : vector<2x10xf32>
    %106 = vector.extract_strided_slice %52 {offsets = [0, 18, 0], sizes = [2, 1, 368], strides = [1, 1, 1]} : vector<2x23x368xf32> to vector<2x1x368xf32>
    %107 = vector.shape_cast %106 : vector<2x1x368xf32> to vector<2x368xf32>
    %c9 = arith.constant 9 : index
    %c0_59 = arith.constant 0 : index
    %c0_60 = arith.constant 0 : index
    %108 = vector.load %arg6[%c9, %c0_59, %c0_60] : memref<12x368x10xf32, #tpu.memory_space<vmem>>, vector<1x368x10xf32>
    %109 = vector.shape_cast %108 : vector<1x368x10xf32> to vector<368x10xf32>
    %cst_61 = arith.constant dense<0.000000e+00> : vector<2x10xf32>
    %110 = tpu.matmul %107, %109, %cst_61 {dimension_numbers = #tpu.dot_dimension_numbers<[1], [0], [0], [1], [0, 0, 1, 1], [], []>} : vector<2x368xf32>, vector<368x10xf32>, vector<2x10xf32> -> vector<2x10xf32>
    %111 = arith.addf %105, %110 : vector<2x10xf32>
    %112 = vector.extract_strided_slice %52 {offsets = [0, 20, 0], sizes = [2, 1, 368], strides = [1, 1, 1]} : vector<2x23x368xf32> to vector<2x1x368xf32>
    %113 = vector.shape_cast %112 : vector<2x1x368xf32> to vector<2x368xf32>
    %c10 = arith.constant 10 : index
    %c0_62 = arith.constant 0 : index
    %c0_63 = arith.constant 0 : index
    %114 = vector.load %arg6[%c10, %c0_62, %c0_63] : memref<12x368x10xf32, #tpu.memory_space<vmem>>, vector<1x368x10xf32>
    %115 = vector.shape_cast %114 : vector<1x368x10xf32> to vector<368x10xf32>
    %cst_64 = arith.constant dense<0.000000e+00> : vector<2x10xf32>
    %116 = tpu.matmul %113, %115, %cst_64 {dimension_numbers = #tpu.dot_dimension_numbers<[1], [0], [0], [1], [0, 0, 1, 1], [], []>} : vector<2x368xf32>, vector<368x10xf32>, vector<2x10xf32> -> vector<2x10xf32>
    %117 = arith.addf %111, %116 : vector<2x10xf32>
    %118 = vector.extract_strided_slice %52 {offsets = [0, 22, 0], sizes = [2, 1, 368], strides = [1, 1, 1]} : vector<2x23x368xf32> to vector<2x1x368xf32>
    %119 = vector.shape_cast %118 : vector<2x1x368xf32> to vector<2x368xf32>
    %c11 = arith.constant 11 : index
    %c0_65 = arith.constant 0 : index
    %c0_66 = arith.constant 0 : index
    %120 = vector.load %arg6[%c11, %c0_65, %c0_66] : memref<12x368x10xf32, #tpu.memory_space<vmem>>, vector<1x368x10xf32>
    %121 = vector.shape_cast %120 : vector<1x368x10xf32> to vector<368x10xf32>
    %cst_67 = arith.constant dense<0.000000e+00> : vector<2x10xf32>
    %122 = tpu.matmul %119, %121, %cst_67 {dimension_numbers = #tpu.dot_dimension_numbers<[1], [0], [0], [1], [0, 0, 1, 1], [], []>} : vector<2x368xf32>, vector<368x10xf32>, vector<2x10xf32> -> vector<2x10xf32>
    %123 = arith.addf %117, %122 : vector<2x10xf32>
    %c0_68 = arith.constant 0 : index
    %c0_69 = arith.constant 0 : index
    %124 = vector.load %arg7[%c0_68, %c0_69] : memref<1x10xf32, #tpu.memory_space<vmem>>, vector<1x10xf32>
    %125 = vector.broadcast %124 : vector<1x10xf32> to vector<2x10xf32>
    %126 = arith.addf %123, %125 : vector<2x10xf32>
    %c0_70 = arith.constant 0 : index
    %c0_71 = arith.constant 0 : index
    %127 = vector.load %arg8[%c0_70, %c0_71] : memref<2x10xf32, #tpu.memory_space<vmem>>, vector<2x10xf32>
    tpu.vector_store %arg8[%c0_70, %c0_71], %126 {strides = array<i32>} : memref<2x10xf32, #tpu.memory_space<vmem>>, vector<2x10xf32>,
    return
  }
  func.func @transform_0(%arg0: i32) -> (i32, i32, i32) {
    %c0_i32 = arith.constant 0 : i32
    %c0_i32_0 = arith.constant 0 : i32
    %c0_i32_1 = arith.constant 0 : i32
    return %arg0, %c0_i32, %c0_i32_0 : i32, i32, i32
  }
  func.func @transform_1(%arg0: i32) -> (i32, i32, i32) {
    %c0_i32 = arith.constant 0 : i32
    %c0_i32_0 = arith.constant 0 : i32
    %c0_i32_1 = arith.constant 0 : i32
    %c0_i32_2 = arith.constant 0 : i32
    return %c0_i32, %c0_i32_0, %c0_i32_1 : i32, i32, i32
  }
  func.func @transform_2(%arg0: i32) -> (i32, i32) {
    %c0_i32 = arith.constant 0 : i32
    %c0_i32_0 = arith.constant 0 : i32
    %c0_i32_1 = arith.constant 0 : i32
    return %c0_i32, %c0_i32_0 : i32, i32
  }
  func.func @transform_3(%arg0: i32) -> (i32, i32, i32) {
    %c0_i32 = arith.constant 0 : i32
    %c0_i32_0 = arith.constant 0 : i32
    %c0_i32_1 = arith.constant 0 : i32
    %c0_i32_2 = arith.constant 0 : i32
    return %c0_i32, %c0_i32_0, %c0_i32_1 : i32, i32, i32
  }
  func.func @transform_4(%arg0: i32) -> (i32, i32) {
    %c0_i32 = arith.constant 0 : i32
    %c0_i32_0 = arith.constant 0 : i32
    %c0_i32_1 = arith.constant 0 : i32
    return %c0_i32, %c0_i32_0 : i32, i32
  }
  func.func @transform_5(%arg0: i32) -> (i32, i32, i32) {
    %c0_i32 = arith.constant 0 : i32
    %c0_i32_0 = arith.constant 0 : i32
    %c0_i32_1 = arith.constant 0 : i32
    %c0_i32_2 = arith.constant 0 : i32
    return %c0_i32, %c0_i32_0, %c0_i32_1 : i32, i32, i32
  }
  func.func @transform_6(%arg0: i32) -> (i32, i32) {
    %c0_i32 = arith.constant 0 : i32
    %c0_i32_0 = arith.constant 0 : i32
    %c0_i32_1 = arith.constant 0 : i32
    return %c0_i32, %c0_i32_0 : i32, i32
  }
  func.func @transform_7(%arg0: i32) -> (i32, i32) {
    %c0_i32 = arith.constant 0 : i32
    %c0_i32_0 = arith.constant 0 : i32
    return %arg0, %c0_i32 : i32, i32
  }
}

</mosaic_0001>

<llo_original>
// kernel: tpu_custom_call.1
$region0: #{tpu_custom_call.1}
  #allocation0 [shape = 'u32[]', space=smem, size = 0x4, offset = 0x4, fixed_abs, tag = 'smem constant byte address 0x4 - core index']
  #allocation1 [shape = 'u32[144,128]{1,0:T(1,128)}', space=vmem, size = 0x12000, scoped, tag = 'internal scratch']
  %s0 = inlined_call_operand.vmem [shape: f32[2,28,28], index: 0, kind: input, shape index: {}]
  %s1 = inlined_call_operand.vmem [shape: f32[3,28,208], index: 1, kind: input, shape index: {}]
  %s2 = inlined_call_operand.vmem [shape: f32[1,208], index: 2, kind: input, shape index: {}]
  %s3 = inlined_call_operand.vmem [shape: f32[3,208,384], index: 3, kind: input, shape index: {}]
  %s4 = inlined_call_operand.vmem [shape: f32[1,384], index: 4, kind: input, shape index: {}]
  %s5 = inlined_call_operand.vmem [shape: f32[12,368,10], index: 5, kind: input, shape index: {}]
  %s6 = inlined_call_operand.vmem [shape: f32[1,10], index: 6, kind: input, shape index: {}]
  %s7 = inlined_call_operand.hbm [shape: f32[2,10], index: 7, kind: output, shape index: {}]
  %s8 = sld [smem:[#allocation0]]
  $region38: #{tpu_custom_call.1} parent=0
    _
  %s10 = ssub.s32 1, %s8
  %s11 = scalar_select 0, %s10, %s8
  $region1: #{tpu_custom_call.1} parent=0
    #allocation2 [shape = 'u8[1024]{0}', space=vmem, size = 0x400, scoped, tag = 'output window, operand 0, single buffered']
    #allocation3 [shape = 's32[1]{0}', space=sflag, size = 0x4, scoped, tag = 'scoped memory for tpu_custom_call.1']
    %12 = vsyncpa [#allocation3], 0
    // Predicated region
    $region2: #{tpu_custom_call.1} parent=1 // pred_check
      _
    $region3: #{tpu_custom_call.1} parent=1 // pred_check_branch
      %14 = sbr.rel (0) target = $region5
    $region4: #{tpu_custom_call.1} parent=1 // pred_region
      _
    $region5: #{tpu_custom_call.1} parent=1 // pred_fallthru
      _
    // Predicated region
    $region6: #{tpu_custom_call.1} parent=1 // pred_check
      _
    $region7: #{tpu_custom_call.1} parent=1 // pred_check_branch
      %16 = sbr.rel (0) target = $region9
    $region8: #{tpu_custom_call.1} parent=1 // pred_region
      _
    $region9: #{tpu_custom_call.1} parent=1 // pred_fallthru
      _
    // Predicated region
    $region10: #{tpu_custom_call.1} parent=1 // pred_check
      _
    $region11: #{tpu_custom_call.1} parent=1 // pred_check_branch
      %18 = sbr.rel (0) target = $region13
    $region12: #{tpu_custom_call.1} parent=1 // pred_region
      _
    $region13: #{tpu_custom_call.1} parent=1 // pred_fallthru
      _
    // Predicated region
    $region14: #{tpu_custom_call.1} parent=1 // pred_check
      _
    $region15: #{tpu_custom_call.1} parent=1 // pred_check_branch
      %20 = sbr.rel (0) target = $region17
    $region16: #{tpu_custom_call.1} parent=1 // pred_region
      _
    $region17: #{tpu_custom_call.1} parent=1 // pred_fallthru
      _
    // Predicated region
    $region18: #{tpu_custom_call.1} parent=1 // pred_check
      _
    $region19: #{tpu_custom_call.1} parent=1 // pred_check_branch
      %22 = sbr.rel (0) target = $region21
    $region20: #{tpu_custom_call.1} parent=1 // pred_region
      _
    $region21: #{tpu_custom_call.1} parent=1 // pred_fallthru
      _
    // Predicated region
    $region22: #{tpu_custom_call.1} parent=1 // pred_check
      _
    $region23: #{tpu_custom_call.1} parent=1 // pred_check_branch
      %24 = sbr.rel (0) target = $region25
    $region24: #{tpu_custom_call.1} parent=1 // pred_region
      _
    $region25: #{tpu_custom_call.1} parent=1 // pred_fallthru
      _
    // Predicated region
    $region26: #{tpu_custom_call.1} parent=1 // pred_check
      _
    $region27: #{tpu_custom_call.1} parent=1 // pred_check_branch
      %26 = sbr.rel (0) target = $region29
    $region28: #{tpu_custom_call.1} parent=1 // pred_region
      _
    $region29: #{tpu_custom_call.1} parent=1 // pred_fallthru
      _
    %v27 = vld [vmem:[%s0] sm:$0xff]
    %v28 = vld [vmem:[%s0 + $0x8] sm:$0xff]
    %v29 = vld [vmem:[%s0 + $0x10] sm:$0xff]
    %v30 = vld [vmem:[%s0 + $0x18] sm:$0xf]
    %v31 = vld [vmem:[%s0 + $0x20] sm:$0xff]
    %v32 = vld [vmem:[%s0 + $0x28] sm:$0xff]
    %v33 = vld [vmem:[%s0 + $0x30] sm:$0xff]
    %v34 = vld [vmem:[%s0 + $0x38] sm:$0xf]
    %v43 = vcombine.high %v27, %v27
    %v45 = vunpack.c.l.s4 1983009808
    %v46 = vunpack.c.0.s8 %v45
    %v47 = vlaneseq
    %v48 = vshrl.u32 %v47, 7
    %v49 = vsub.s32 %v46, %v48
    %v50 = vrot.slane %v27, %v49
    %v52 = vunpack.c.l.s4 1983009808
    %v53 = vunpack.c.0.s8 %v52
    %v54 = vlaneseq
    %v55 = vshrl.u32 %v54, 7
    %v56 = vsub.s32 %v53, %v55
    %v57 = vrot.slane %v43, %v56
    %v58 = vcombine.high %v50, %v50
    %v59 = vcombine.high %v57, %v57
    %v60 = vcombine.high %v28, %v28
    %v62 = vunpack.c.l.s4 1983009808
    %v63 = vunpack.c.0.s8 %v62
    %v64 = vlaneseq
    %v65 = vshrl.u32 %v64, 7
    %v66 = vsub.s32 %v63, %v65
    %v67 = vrot.slane %v28, %v66
    %v69 = vunpack.c.l.s4 1983009808
    %v70 = vunpack.c.0.s8 %v69
    %v71 = vlaneseq
    %v72 = vshrl.u32 %v71, 7
    %v73 = vsub.s32 %v70, %v72
    %v74 = vrot.slane %v60, %v73
    %v75 = vcombine.high %v67, %v67
    %v76 = vcombine.high %v74, %v74
    %v77 = vcombine.high %v29, %v29
    %v79 = vunpack.c.l.s4 1983009808
    %v80 = vunpack.c.0.s8 %v79
    %v81 = vlaneseq
    %v82 = vshrl.u32 %v81, 7
    %v83 = vsub.s32 %v80, %v82
    %v84 = vrot.slane %v29, %v83
    %v86 = vunpack.c.l.s4 1983009808
    %v87 = vunpack.c.0.s8 %v86
    %v88 = vlaneseq
    %v89 = vshrl.u32 %v88, 7
    %v90 = vsub.s32 %v87, %v89
    %v91 = vrot.slane %v77, %v90
    %v92 = vcombine.high %v84, %v84
    %v93 = vcombine.high %v91, %v91
    %v95 = vunpack.c.l.s4 1983009808
    %v96 = vunpack.c.0.s8 %v95
    %v97 = vlaneseq
    %v98 = vshrl.u32 %v97, 7
    %v99 = vsub.s32 %v96, %v98
    %v100 = vrot.slane %v30, %v99
    %v101 = vcombine.high %v31, %v31
    %v103 = vunpack.c.l.s4 1983009808
    %v104 = vunpack.c.0.s8 %v103
    %v105 = vlaneseq
    %v106 = vshrl.u32 %v105, 7
    %v107 = vsub.s32 %v104, %v106
    %v108 = vrot.slane %v31, %v107
    %v110 = vunpack.c.l.s4 1983009808
    %v111 = vunpack.c.0.s8 %v110
    %v112 = vlaneseq
    %v113 = vshrl.u32 %v112, 7
    %v114 = vsub.s32 %v111, %v113
    %v115 = vrot.slane %v101, %v114
    %v116 = vcombine.high %v108, %v108
    %v117 = vcombine.high %v115, %v115
    %v118 = vcombine.high %v32, %v32
    %v120 = vunpack.c.l.s4 1983009808
    %v121 = vunpack.c.0.s8 %v120
    %v122 = vlaneseq
    %v123 = vshrl.u32 %v122, 7
    %v124 = vsub.s32 %v121, %v123
    %v125 = vrot.slane %v32, %v124
    %v127 = vunpack.c.l.s4 1983009808
    %v128 = vunpack.c.0.s8 %v127
    %v129 = vlaneseq
    %v130 = vshrl.u32 %v129, 7
    %v131 = vsub.s32 %v128, %v130
    %v132 = vrot.slane %v118, %v131
    %v133 = vcombine.high %v125, %v125
    %v134 = vcombine.high %v132, %v132
    %v135 = vcombine.high %v33, %v33
    %v137 = vunpack.c.l.s4 1983009808
    %v138 = vunpack.c.0.s8 %v137
    %v139 = vlaneseq
    %v140 = vshrl.u32 %v139, 7
    %v141 = vsub.s32 %v138, %v140
    %v142 = vrot.slane %v33, %v141
    %v144 = vunpack.c.l.s4 1983009808
    %v145 = vunpack.c.0.s8 %v144
    %v146 = vlaneseq
    %v147 = vshrl.u32 %v146, 7
    %v148 = vsub.s32 %v145, %v147
    %v149 = vrot.slane %v135, %v148
    %v150 = vcombine.high %v142, %v142
    %v151 = vcombine.high %v149, %v149
    %v153 = vunpack.c.l.s4 1983009808
    %v154 = vunpack.c.0.s8 %v153
    %v155 = vlaneseq
    %v156 = vshrl.u32 %v155, 7
    %v157 = vsub.s32 %v154, %v156
    %v158 = vrot.slane %v34, %v157
    %v159 = vld [vmem:[%s1] sm:$0xff]
    %v160 = vld [vmem:[%s1 + $0x8] sm:$0xff]
    %v161 = vld [vmem:[%s1 + $0x10] sm:$0xff]
    %v162 = vld [vmem:[%s1 + $0x18] sm:$0xff]
    %v163 = vld [vmem:[%s1 + $0x20] sm:$0xff]
    %v164 = vld [vmem:[%s1 + $0x28] sm:$0xff]
    %v165 = vld [vmem:[%s1 + $0x30] sm:$0xf]
    %v166 = vld [vmem:[%s1 + $0x38] sm:$0xf]
    %v167 = vcombine.high %v100, %v100
    %v168 = vcombine.high %v158, %v158
    %vm169 = vcmask 1040384
    %vm170 = vcmask 1042434
    %vm171 = vmor %vm169, %vm170
    %vm172 = vcmask 1044484
    %vm173 = vmor %vm171, %vm172
    %vm174 = vcmask 1046534
    %vm175 = vmor %vm173, %vm174
    %v176 = vrot.slane %v50, 7
    %v177 = vrot.slane %v176, 2
    %v178 = vrot.slane %v58, 7
    %v179 = vsel %vm175, %v177, %v178
    %v180 = vrot.slane %v178, 2
    %v181 = vrot.slane %v57, 7
    %v182 = vsel %vm175, %v180, %v181
    %v183 = vrot.slane %v181, 2
    %v184 = vrot.slane %v59, 7
    %v185 = vsel %vm175, %v183, %v184
    %v186 = vrot.slane %v184, 2
    %v187 = vrot.slane %v67, 7
    %v188 = vsel %vm175, %v186, %v187
    %v189 = vrot.slane %v187, 2
    %v190 = vrot.slane %v75, 7
    %v191 = vsel %vm175, %v189, %v190
    %v192 = vrot.slane %v190, 2
    %v193 = vrot.slane %v74, 7
    %v194 = vsel %vm175, %v192, %v193
    %v195 = vrot.slane %v193, 2
    %v196 = vrot.slane %v76, 7
    %v197 = vsel %vm175, %v195, %v196
    %v198 = vrot.slane %v196, 2
    %v199 = vrot.slane %v84, 7
    %v200 = vsel %vm175, %v198, %v199
    %v201 = vrot.slane %v199, 2
    %v202 = vrot.slane %v92, 7
    %v203 = vsel %vm175, %v201, %v202
    %v204 = vrot.slane %v202, 2
    %v205 = vrot.slane %v91, 7
    %v206 = vsel %vm175, %v204, %v205
    %v207 = vrot.slane %v205, 2
    %v208 = vrot.slane %v93, 7
    %v209 = vsel %vm175, %v207, %v208
    %v210 = vrot.slane %v208, 2
    %v211 = vrot.slane %v100, 7
    %v212 = vsel %vm175, %v210, %v211
    %v213 = vrot.slane %v211, 2
    %v214 = vrot.slane %v167, 7
    %v215 = vsel %vm175, %v213, %v214
    %v216 = vrot.slane %v108, 7
    %v217 = vrot.slane %v216, 2
    %v218 = vrot.slane %v116, 7
    %v219 = vsel %vm175, %v217, %v218
    %v220 = vrot.slane %v218, 2
    %v221 = vrot.slane %v115, 7
    %v222 = vsel %vm175, %v220, %v221
    %v223 = vrot.slane %v221, 2
    %v224 = vrot.slane %v117, 7
    %v225 = vsel %vm175, %v223, %v224
    %v226 = vrot.slane %v224, 2
    %v227 = vrot.slane %v125, 7
    %v228 = vsel %vm175, %v226, %v227
    %v229 = vrot.slane %v227, 2
    %v230 = vrot.slane %v133, 7
    %v231 = vsel %vm175, %v229, %v230
    %v232 = vrot.slane %v230, 2
    %v233 = vrot.slane %v132, 7
    %v234 = vsel %vm175, %v232, %v233
    %v235 = vrot.slane %v233, 2
    %v236 = vrot.slane %v134, 7
    %v237 = vsel %vm175, %v235, %v236
    %v238 = vrot.slane %v236, 2
    %v239 = vrot.slane %v142, 7
    %v240 = vsel %vm175, %v238, %v239
    %v241 = vrot.slane %v239, 2
    %v242 = vrot.slane %v150, 7
    %v243 = vsel %vm175, %v241, %v242
    %v244 = vrot.slane %v242, 2
    %v245 = vrot.slane %v149, 7
    %v246 = vsel %vm175, %v244, %v245
    %v247 = vrot.slane %v245, 2
    %v248 = vrot.slane %v151, 7
    %v249 = vsel %vm175, %v247, %v248
    %v250 = vrot.slane %v248, 2
    %v251 = vrot.slane %v158, 7
    %v252 = vsel %vm175, %v250, %v251
    %v253 = vrot.slane %v251, 2
    %v254 = vrot.slane %v168, 7
    %v255 = vsel %vm175, %v253, %v254
    %s256 = scalar_lea.vmem %s1, 64
    %v257 = vld [vmem:[%s256] sm:$0xff]
    %v258 = vld [vmem:[%s256 + $0x8] sm:$0xff]
    %v259 = vld [vmem:[%s256 + $0x10] sm:$0xff]
    %v260 = vld [vmem:[%s256 + $0x18] sm:$0xff]
    %v261 = vld [vmem:[%s256 + $0x20] sm:$0xff]
    %v262 = vld [vmem:[%s256 + $0x28] sm:$0xff]
    %v263 = vld [vmem:[%s256 + $0x30] sm:$0xf]
    %v264 = vld [vmem:[%s256 + $0x38] sm:$0xf]
    %v265 = vcombine.low %v179, %v182
    %v266 = vcombine.low %v185, %v188
    %v268 = vunpack.c.l.s4 1983009808
    %v269 = vunpack.c.0.s8 %v268
    %v270 = vlaneseq
    %v271 = vshrl.u32 %v270, 7
    %v272 = vsub.s32 %v269, %v271
    %v273 = vrot.slane %v265, %v272
    %v275 = vunpack.c.l.s4 1983009808
    %v276 = vunpack.c.0.s8 %v275
    %v277 = vlaneseq
    %v278 = vshrl.u32 %v277, 7
    %v279 = vsub.s32 %v276, %v278
    %v280 = vrot.slane %v266, %v279
    %v281 = vcombine.low %v273, %v280
    %v282 = vcombine.low %v191, %v194
    %v283 = vcombine.low %v197, %v200
    %v285 = vunpack.c.l.s4 1983009808
    %v286 = vunpack.c.0.s8 %v285
    %v287 = vlaneseq
    %v288 = vshrl.u32 %v287, 7
    %v289 = vsub.s32 %v286, %v288
    %v290 = vrot.slane %v282, %v289
    %v292 = vunpack.c.l.s4 1983009808
    %v293 = vunpack.c.0.s8 %v292
    %v294 = vlaneseq
    %v295 = vshrl.u32 %v294, 7
    %v296 = vsub.s32 %v293, %v295
    %v297 = vrot.slane %v283, %v296
    %v298 = vcombine.low %v290, %v297
    %v299 = vcombine.low %v203, %v206
    %v300 = vcombine.low %v209, %v212
    %v302 = vunpack.c.l.s4 1983009808
    %v303 = vunpack.c.0.s8 %v302
    %v304 = vlaneseq
    %v305 = vshrl.u32 %v304, 7
    %v306 = vsub.s32 %v303, %v305
    %v307 = vrot.slane %v299, %v306
    %v309 = vunpack.c.l.s4 1983009808
    %v310 = vunpack.c.0.s8 %v309
    %v311 = vlaneseq
    %v312 = vshrl.u32 %v311, 7
    %v313 = vsub.s32 %v310, %v312
    %v314 = vrot.slane %v300, %v313
    %v315 = vcombine.low %v307, %v314
    %v316 = vcombine.low %v215, %v219
    %v317 = vcombine.low %v222, %v225
    %v319 = vunpack.c.l.s4 1983009808
    %v320 = vunpack.c.0.s8 %v319
    %v321 = vlaneseq
    %v322 = vshrl.u32 %v321, 7
    %v323 = vsub.s32 %v320, %v322
    %v324 = vrot.slane %v316, %v323
    %v326 = vunpack.c.l.s4 1983009808
    %v327 = vunpack.c.0.s8 %v326
    %v328 = vlaneseq
    %v329 = vshrl.u32 %v328, 7
    %v330 = vsub.s32 %v327, %v329
    %v331 = vrot.slane %v317, %v330
    %v332 = vcombine.low %v324, %v331
    %v333 = vcombine.low %v228, %v231
    %v334 = vcombine.low %v234, %v237
    %v336 = vunpack.c.l.s4 1983009808
    %v337 = vunpack.c.0.s8 %v336
    %v338 = vlaneseq
    %v339 = vshrl.u32 %v338, 7
    %v340 = vsub.s32 %v337, %v339
    %v341 = vrot.slane %v333, %v340
    %v343 = vunpack.c.l.s4 1983009808
    %v344 = vunpack.c.0.s8 %v343
    %v345 = vlaneseq
    %v346 = vshrl.u32 %v345, 7
    %v347 = vsub.s32 %v344, %v346
    %v348 = vrot.slane %v334, %v347
    %v349 = vcombine.low %v341, %v348
    %v350 = vcombine.low %v240, %v243
    %v351 = vcombine.low %v246, %v249
    %v353 = vunpack.c.l.s4 1983009808
    %v354 = vunpack.c.0.s8 %v353
    %v355 = vlaneseq
    %v356 = vshrl.u32 %v355, 7
    %v357 = vsub.s32 %v354, %v356
    %v358 = vrot.slane %v350, %v357
    %v360 = vunpack.c.l.s4 1983009808
    %v361 = vunpack.c.0.s8 %v360
    %v362 = vlaneseq
    %v363 = vshrl.u32 %v362, 7
    %v364 = vsub.s32 %v361, %v363
    %v365 = vrot.slane %v351, %v364
    %v366 = vcombine.low %v358, %v365
    %v367 = vcombine.low %v252, %v255
    %v369 = vunpack.c.l.s4 1983009808
    %v370 = vunpack.c.0.s8 %v369
    %v371 = vlaneseq
    %v372 = vshrl.u32 %v371, 7
    %v373 = vsub.s32 %v370, %v372
    %v374 = vrot.slane %v367, %v373
    %vm375 = vcmask 228352
    %v376 = vsel %vm375, %v281, 0
    %v378 = vsel %vm375, %v298, 0
    %v380 = vsel %vm375, %v315, 0
    %v382 = vsel %vm375, %v332, 0
    %v384 = vsel %vm375, %v349, 0
    %v386 = vsel %vm375, %v366, 0
    %v388 = vsel %vm375, %v374, 0
    %vm390 = vcmask 1043456
    %v392 = vsel %vm390, %v263, 0
    %v395 = vsel %vm390, %v264, 0
    %397 = vmatprep.subr.mxu0 %v258
    %398 = vmatpush1.msra.mxu0 %v257
    %399 = vmatprep.subr.mxu0 %v260
    %400 = vmatpush1.msra.mxu0 %v259
    %401 = vmatprep.subr.mxu0 %v262
    %402 = vmatpush1.msra.mxu0 %v261
    %403 = vmatprep.subr.mxu0 %v395
    %404 = vmatpush1.msra.mxu0 %v392
    %405 = vmatprep.subr.mxu0 0.0
    %406 = vmatpush1.msra.mxu0 0.0
    %407 = vmatprep.subr.mxu0 0.0
    %408 = vmatpush1.msra.mxu0 0.0
    %409 = vmatprep.subr.mxu0 0.0
    %410 = vmatpush1.msra.mxu0 0.0
    %411 = vmatprep.subr.mxu0 0.0
    %412 = vmatpush1.msra.mxu0 0.0
    %413 = vmatprep.subr.mxu0 0.0
    %414 = vmatpush1.msra.mxu0 0.0
    %415 = vmatprep.subr.mxu0 0.0
    %416 = vmatpush1.msra.mxu0 0.0
    %417 = vmatprep.subr.mxu0 0.0
    %418 = vmatpush1.msra.mxu0 0.0
    %419 = vmatprep.subr.mxu0 0.0
    %420 = vmatpush1.msra.mxu0 0.0
    %421 = vmatprep.subr.mxu0 0.0
    %422 = vmatpush1.msra.mxu0 0.0
    %423 = vmatprep.subr.mxu0 0.0
    %424 = vmatpush1.msra.mxu0 0.0
    %425 = vmatprep.subr.mxu0 0.0
    %426 = vmatpush1.msra.mxu0 0.0
    %427 = vmatprep.subr.mxu0 0.0
    %428 = vmatpush1.msra.mxu0 0.0
    %429 = vmatprep.subr.mxu0 0.0
    %430 = vmatpush1.msra.mxu0 0.0
    %431 = vmatprep.subr.mxu0 0.0
    %432 = vmatpush1.msra.mxu0 0.0
    %433 = vmatprep.subr.mxu0 0.0
    %434 = vmatpush1.msra.mxu0 0.0
    %435 = vmatprep.subr.mxu0 0.0
    %436 = vmatpush1.msra.mxu0 0.0
    %437 = vmatprep.subr.mxu0 0.0
    %438 = vmatpush1.msra.mxu0 0.0
    %439 = vmatprep.subr.mxu0 0.0
    %440 = vmatpush1.msra.mxu0 0.0
    %441 = vmatprep.subr.mxu0 0.0
    %442 = vmatpush1.msra.mxu0 0.0
    %443 = vmatprep.subr.mxu0 0.0
    %444 = vmatpush1.msra.mxu0 0.0
    %445 = vmatprep.subr.mxu0 0.0
    %446 = vmatpush1.msra.mxu0 0.0
    %447 = vmatprep.subr.mxu0 0.0
    %448 = vmatpush1.msra.mxu0 0.0
    %449 = vmatprep.subr.mxu0 0.0
    %450 = vmatpush1.msra.mxu0 0.0
    %451 = vmatprep.subr.mxu0 0.0
    %452 = vmatpush1.msra.mxu0 0.0
    %453 = vmatprep.subr.mxu0 0.0
    %454 = vmatpush1.msra.mxu0 0.0
    %455 = vmatprep.subr.mxu0 0.0
    %456 = vmatpush1.msra.mxu0 0.0
    %457 = vmatprep.subr.mxu0 0.0
    %458 = vmatpush1.msra.mxu0 0.0
    %459 = vmatprep.subr.mxu0 0.0
    %460 = vmatpush1.msra.mxu0 0.0
    %461 = vmatprep.mubr.f32.mxu0 0.0
    %462 = vmatmul.mubr.f32.gmra.mrb[0].mxu0 %v376
    %v463 = vpop.f32.mrb[0].mxu0
    %v464 = vadd.f32 0.0, %v463
    %v465 = vpop.f32.mrb[0].mxu0
    %v466 = vadd.f32 0.0, %v465
    %467 = vmatprep.mubr.f32.mxu0 0.0
    %468 = vmatmul.mubr.f32.gmra.mrb[0].mxu0 %v378
    %v469 = vpop.f32.mrb[0].mxu0
    %v470 = vadd.f32 0.0, %v469
    %v471 = vpop.f32.mrb[0].mxu0
    %v472 = vadd.f32 0.0, %v471
    %473 = vmatprep.mubr.f32.mxu0 0.0
    %474 = vmatmul.mubr.f32.gmra.mrb[0].mxu0 %v380
    %v475 = vpop.f32.mrb[0].mxu0
    %v476 = vadd.f32 0.0, %v475
    %v477 = vpop.f32.mrb[0].mxu0
    %v478 = vadd.f32 0.0, %v477
    %479 = vmatprep.mubr.f32.mxu0 0.0
    %480 = vmatmul.mubr.f32.gmra.mrb[0].mxu0 %v382
    %v481 = vpop.f32.mrb[0].mxu0
    %v482 = vadd.f32 0.0, %v481
    %v483 = vpop.f32.mrb[0].mxu0
    %v484 = vadd.f32 0.0, %v483
    %485 = vmatprep.mubr.f32.mxu0 0.0
    %486 = vmatmul.mubr.f32.gmra.mrb[0].mxu0 %v384
    %v487 = vpop.f32.mrb[0].mxu0
    %v488 = vadd.f32 0.0, %v487
    %v489 = vpop.f32.mrb[0].mxu0
    %v490 = vadd.f32 0.0, %v489
    %491 = vmatprep.mubr.f32.mxu0 0.0
    %492 = vmatmul.mubr.f32.gmra.mrb[0].mxu0 %v386
    %v493 = vpop.f32.mrb[0].mxu0
    %v494 = vadd.f32 0.0, %v493
    %v495 = vpop.f32.mrb[0].mxu0
    %v496 = vadd.f32 0.0, %v495
    %497 = vmatprep.mubr.f32.mxu0 0.0
    %498 = vmatmul.mubr.f32.gmra.mrb[0].mxu0 %v388
    %v499 = vpop.f32.mrb[0].mxu0
    %v500 = vadd.f32 0.0, %v499
    %v501 = vpop.f32.mrb[0].mxu0
    %v502 = vadd.f32 0.0, %v501
    %503 = vdwg.mxu0
    %v504 = vcombine.low %v50, %v58
    %v505 = vcombine.low %v57, %v59
    %v507 = vunpack.c.l.s4 1983009808
    %v508 = vunpack.c.0.s8 %v507
    %v509 = vlaneseq
    %v510 = vshrl.u32 %v509, 7
    %v511 = vsub.s32 %v508, %v510
    %v512 = vrot.slane %v504, %v511
    %v514 = vunpack.c.l.s4 1983009808
    %v515 = vunpack.c.0.s8 %v514
    %v516 = vlaneseq
    %v517 = vshrl.u32 %v516, 7
    %v518 = vsub.s32 %v515, %v517
    %v519 = vrot.slane %v505, %v518
    %v520 = vcombine.low %v512, %v519
    %v521 = vcombine.low %v67, %v75
    %v522 = vcombine.low %v74, %v76
    %v524 = vunpack.c.l.s4 1983009808
    %v525 = vunpack.c.0.s8 %v524
    %v526 = vlaneseq
    %v527 = vshrl.u32 %v526, 7
    %v528 = vsub.s32 %v525, %v527
    %v529 = vrot.slane %v521, %v528
    %v531 = vunpack.c.l.s4 1983009808
    %v532 = vunpack.c.0.s8 %v531
    %v533 = vlaneseq
    %v534 = vshrl.u32 %v533, 7
    %v535 = vsub.s32 %v532, %v534
    %v536 = vrot.slane %v522, %v535
    %v537 = vcombine.low %v529, %v536
    %v538 = vcombine.low %v84, %v92
    %v539 = vcombine.low %v91, %v93
    %v541 = vunpack.c.l.s4 1983009808
    %v542 = vunpack.c.0.s8 %v541
    %v543 = vlaneseq
    %v544 = vshrl.u32 %v543, 7
    %v545 = vsub.s32 %v542, %v544
    %v546 = vrot.slane %v538, %v545
    %v548 = vunpack.c.l.s4 1983009808
    %v549 = vunpack.c.0.s8 %v548
    %v550 = vlaneseq
    %v551 = vshrl.u32 %v550, 7
    %v552 = vsub.s32 %v549, %v551
    %v553 = vrot.slane %v539, %v552
    %v554 = vcombine.low %v546, %v553
    %v555 = vcombine.low %v100, %v108
    %v556 = vcombine.low %v116, %v115
    %v558 = vunpack.c.l.s4 1983009808
    %v559 = vunpack.c.0.s8 %v558
    %v560 = vlaneseq
    %v561 = vshrl.u32 %v560, 7
    %v562 = vsub.s32 %v559, %v561
    %v563 = vrot.slane %v555, %v562
    %v565 = vunpack.c.l.s4 1983009808
    %v566 = vunpack.c.0.s8 %v565
    %v567 = vlaneseq
    %v568 = vshrl.u32 %v567, 7
    %v569 = vsub.s32 %v566, %v568
    %v570 = vrot.slane %v556, %v569
    %v571 = vcombine.low %v563, %v570
    %v572 = vcombine.low %v117, %v125
    %v573 = vcombine.low %v133, %v132
    %v575 = vunpack.c.l.s4 1983009808
    %v576 = vunpack.c.0.s8 %v575
    %v577 = vlaneseq
    %v578 = vshrl.u32 %v577, 7
    %v579 = vsub.s32 %v576, %v578
    %v580 = vrot.slane %v572, %v579
    %v582 = vunpack.c.l.s4 1983009808
    %v583 = vunpack.c.0.s8 %v582
    %v584 = vlaneseq
    %v585 = vshrl.u32 %v584, 7
    %v586 = vsub.s32 %v583, %v585
    %v587 = vrot.slane %v573, %v586
    %v588 = vcombine.low %v580, %v587
    %v589 = vcombine.low %v134, %v142
    %v590 = vcombine.low %v150, %v149
    %v592 = vunpack.c.l.s4 1983009808
    %v593 = vunpack.c.0.s8 %v592
    %v594 = vlaneseq
    %v595 = vshrl.u32 %v594, 7
    %v596 = vsub.s32 %v593, %v595
    %v597 = vrot.slane %v589, %v596
    %v599 = vunpack.c.l.s4 1983009808
    %v600 = vunpack.c.0.s8 %v599
    %v601 = vlaneseq
    %v602 = vshrl.u32 %v601, 7
    %v603 = vsub.s32 %v600, %v602
    %v604 = vrot.slane %v590, %v603
    %v605 = vcombine.low %v597, %v604
    %v606 = vcombine.low %v151, %v158
    %v608 = vunpack.c.l.s4 1983009808
    %v609 = vunpack.c.0.s8 %v608
    %v610 = vlaneseq
    %v611 = vshrl.u32 %v610, 7
    %v612 = vsub.s32 %v609, %v611
    %v613 = vrot.slane %v606, %v612
    %v614 = vsel %vm375, %v520, 0
    %v616 = vsel %vm375, %v537, 0
    %v618 = vsel %vm375, %v554, 0
    %v620 = vsel %vm375, %v571, 0
    %v622 = vsel %vm375, %v588, 0
    %v624 = vsel %vm375, %v605, 0
    %v626 = vsel %vm375, %v613, 0
    %v629 = vsel %vm390, %v165, 0
    %v632 = vsel %vm390, %v166, 0
    %634 = vmatprep.subr.mxu0 %v160
    %635 = vmatpush1.msra.mxu0 %v159
    %636 = vmatprep.subr.mxu0 %v162
    %637 = vmatpush1.msra.mxu0 %v161
    %638 = vmatprep.subr.mxu0 %v164
    %639 = vmatpush1.msra.mxu0 %v163
    %640 = vmatprep.subr.mxu0 %v632
    %641 = vmatpush1.msra.mxu0 %v629
    %642 = vmatprep.subr.mxu0 0.0
    %643 = vmatpush1.msra.mxu0 0.0
    %644 = vmatprep.subr.mxu0 0.0
    %645 = vmatpush1.msra.mxu0 0.0
    %646 = vmatprep.subr.mxu0 0.0
    %647 = vmatpush1.msra.mxu0 0.0
    %648 = vmatprep.subr.mxu0 0.0
    %649 = vmatpush1.msra.mxu0 0.0
    %650 = vmatprep.subr.mxu0 0.0
    %651 = vmatpush1.msra.mxu0 0.0
    %652 = vmatprep.subr.mxu0 0.0
    %653 = vmatpush1.msra.mxu0 0.0
    %654 = vmatprep.subr.mxu0 0.0
    %655 = vmatpush1.msra.mxu0 0.0
    %656 = vmatprep.subr.mxu0 0.0
    %657 = vmatpush1.msra.mxu0 0.0
    %658 = vmatprep.subr.mxu0 0.0
    %659 = vmatpush1.msra.mxu0 0.0
    %660 = vmatprep.subr.mxu0 0.0
    %661 = vmatpush1.msra.mxu0 0.0
    %662 = vmatprep.subr.mxu0 0.0
    %663 = vmatpush1.msra.mxu0 0.0
    %664 = vmatprep.subr.mxu0 0.0
    %665 = vmatpush1.msra.mxu0 0.0
    %666 = vmatprep.subr.mxu0 0.0
    %667 = vmatpush1.msra.mxu0 0.0
    %668 = vmatprep.subr.mxu0 0.0
    %669 = vmatpush1.msra.mxu0 0.0
    %670 = vmatprep.subr.mxu0 0.0
    %671 = vmatpush1.msra.mxu0 0.0
    %672 = vmatprep.subr.mxu0 0.0
    %673 = vmatpush1.msra.mxu0 0.0
    %674 = vmatprep.subr.mxu0 0.0
    %675 = vmatpush1.msra.mxu0 0.0
    %676 = vmatprep.subr.mxu0 0.0
    %677 = vmatpush1.msra.mxu0 0.0
    %678 = vmatprep.subr.mxu0 0.0
    %679 = vmatpush1.msra.mxu0 0.0
    %680 = vmatprep.subr.mxu0 0.0
    %681 = vmatpush1.msra.mxu0 0.0
    %682 = vmatprep.subr.mxu0 0.0
    %683 = vmatpush1.msra.mxu0 0.0
    %684 = vmatprep.subr.mxu0 0.0
    %685 = vmatpush1.msra.mxu0 0.0
    %686 = vmatprep.subr.mxu0 0.0
    %687 = vmatpush1.msra.mxu0 0.0
    %688 = vmatprep.subr.mxu0 0.0
    %689 = vmatpush1.msra.mxu0 0.0
    %690 = vmatprep.subr.mxu0 0.0
    %691 = vmatpush1.msra.mxu0 0.0
    %692 = vmatprep.subr.mxu0 0.0
    %693 = vmatpush1.msra.mxu0 0.0
    %694 = vmatprep.subr.mxu0 0.0
    %695 = vmatpush1.msra.mxu0 0.0
    %696 = vmatprep.subr.mxu0 0.0
    %697 = vmatpush1.msra.mxu0 0.0
    %698 = vmatprep.mubr.f32.mxu0 0.0
    %699 = vmatmul.mubr.f32.gmra.mrb[0].mxu0 %v614
    %v700 = vpop.f32.mrb[0].mxu0
    %v701 = vadd.f32 %v464, %v700
    %v702 = vpop.f32.mrb[0].mxu0
    %v703 = vadd.f32 %v466, %v702
    %704 = vmatprep.mubr.f32.mxu0 0.0
    %705 = vmatmul.mubr.f32.gmra.mrb[0].mxu0 %v616
    %v706 = vpop.f32.mrb[0].mxu0
    %v707 = vadd.f32 %v470, %v706
    %v708 = vpop.f32.mrb[0].mxu0
    %v709 = vadd.f32 %v472, %v708
    %710 = vmatprep.mubr.f32.mxu0 0.0
    %711 = vmatmul.mubr.f32.gmra.mrb[0].mxu0 %v618
    %v712 = vpop.f32.mrb[0].mxu0
    %v713 = vadd.f32 %v476, %v712
    %v714 = vpop.f32.mrb[0].mxu0
    %v715 = vadd.f32 %v478, %v714
    %716 = vmatprep.mubr.f32.mxu0 0.0
    %717 = vmatmul.mubr.f32.gmra.mrb[0].mxu0 %v620
    %v718 = vpop.f32.mrb[0].mxu0
    %v719 = vadd.f32 %v482, %v718
    %v720 = vpop.f32.mrb[0].mxu0
    %v721 = vadd.f32 %v484, %v720
    %722 = vmatprep.mubr.f32.mxu0 0.0
    %723 = vmatmul.mubr.f32.gmra.mrb[0].mxu0 %v622
    %v724 = vpop.f32.mrb[0].mxu0
    %v725 = vadd.f32 %v488, %v724
    %v726 = vpop.f32.mrb[0].mxu0
    %v727 = vadd.f32 %v490, %v726
    %728 = vmatprep.mubr.f32.mxu0 0.0
    %729 = vmatmul.mubr.f32.gmra.mrb[0].mxu0 %v624
    %v730 = vpop.f32.mrb[0].mxu0
    %v731 = vadd.f32 %v494, %v730
    %v732 = vpop.f32.mrb[0].mxu0
    %v733 = vadd.f32 %v496, %v732
    %734 = vmatprep.mubr.f32.mxu0 0.0
    %735 = vmatmul.mubr.f32.gmra.mrb[0].mxu0 %v626
    %v736 = vpop.f32.mrb[0].mxu0
    %v737 = vadd.f32 %v500, %v736
    %v738 = vpop.f32.mrb[0].mxu0
    %v739 = vadd.f32 %v502, %v738
    %740 = vdwg.mxu0
    %s741 = scalar_lea.vmem %s1, 128
    %v742 = vld [vmem:[%s741] sm:$0xff]
    %v743 = vld [vmem:[%s741 + $0x8] sm:$0xff]
    %v744 = vld [vmem:[%s741 + $0x10] sm:$0xff]
    %v745 = vld [vmem:[%s741 + $0x18] sm:$0xff]
    %v746 = vld [vmem:[%s741 + $0x20] sm:$0xff]
    %v747 = vld [vmem:[%s741 + $0x28] sm:$0xff]
    %v748 = vld [vmem:[%s741 + $0x30] sm:$0xf]
    %v749 = vld [vmem:[%s741 + $0x38] sm:$0xf]
    %v750 = vcombine.low %v58, %v57
    %v751 = vcombine.low %v59, %v67
    %v753 = vunpack.c.l.s4 1983009808
    %v754 = vunpack.c.0.s8 %v753
    %v755 = vlaneseq
    %v756 = vshrl.u32 %v755, 7
    %v757 = vsub.s32 %v754, %v756
    %v758 = vrot.slane %v750, %v757
    %v760 = vunpack.c.l.s4 1983009808
    %v761 = vunpack.c.0.s8 %v760
    %v762 = vlaneseq
    %v763 = vshrl.u32 %v762, 7
    %v764 = vsub.s32 %v761, %v763
    %v765 = vrot.slane %v751, %v764
    %v766 = vcombine.low %v758, %v765
    %v767 = vcombine.low %v75, %v74
    %v768 = vcombine.low %v76, %v84
    %v770 = vunpack.c.l.s4 1983009808
    %v771 = vunpack.c.0.s8 %v770
    %v772 = vlaneseq
    %v773 = vshrl.u32 %v772, 7
    %v774 = vsub.s32 %v771, %v773
    %v775 = vrot.slane %v767, %v774
    %v777 = vunpack.c.l.s4 1983009808
    %v778 = vunpack.c.0.s8 %v777
    %v779 = vlaneseq
    %v780 = vshrl.u32 %v779, 7
    %v781 = vsub.s32 %v778, %v780
    %v782 = vrot.slane %v768, %v781
    %v783 = vcombine.low %v775, %v782
    %v784 = vcombine.low %v92, %v91
    %v785 = vcombine.low %v93, %v100
    %v787 = vunpack.c.l.s4 1983009808
    %v788 = vunpack.c.0.s8 %v787
    %v789 = vlaneseq
    %v790 = vshrl.u32 %v789, 7
    %v791 = vsub.s32 %v788, %v790
    %v792 = vrot.slane %v784, %v791
    %v794 = vunpack.c.l.s4 1983009808
    %v795 = vunpack.c.0.s8 %v794
    %v796 = vlaneseq
    %v797 = vshrl.u32 %v796, 7
    %v798 = vsub.s32 %v795, %v797
    %v799 = vrot.slane %v785, %v798
    %v800 = vcombine.low %v792, %v799
    %v801 = vcombine.low %v167, %v116
    %v802 = vcombine.low %v115, %v117
    %v804 = vunpack.c.l.s4 1983009808
    %v805 = vunpack.c.0.s8 %v804
    %v806 = vlaneseq
    %v807 = vshrl.u32 %v806, 7
    %v808 = vsub.s32 %v805, %v807
    %v809 = vrot.slane %v801, %v808
    %v811 = vunpack.c.l.s4 1983009808
    %v812 = vunpack.c.0.s8 %v811
    %v813 = vlaneseq
    %v814 = vshrl.u32 %v813, 7
    %v815 = vsub.s32 %v812, %v814
    %v816 = vrot.slane %v802, %v815
    %v817 = vcombine.low %v809, %v816
    %v818 = vcombine.low %v125, %v133
    %v819 = vcombine.low %v132, %v134
    %v821 = vunpack.c.l.s4 1983009808
    %v822 = vunpack.c.0.s8 %v821
    %v823 = vlaneseq
    %v824 = vshrl.u32 %v823, 7
    %v825 = vsub.s32 %v822, %v824
    %v826 = vrot.slane %v818, %v825
    %v828 = vunpack.c.l.s4 1983009808
    %v829 = vunpack.c.0.s8 %v828
    %v830 = vlaneseq
    %v831 = vshrl.u32 %v830, 7
    %v832 = vsub.s32 %v829, %v831
    %v833 = vrot.slane %v819, %v832
    %v834 = vcombine.low %v826, %v833
    %v835 = vcombine.low %v142, %v150
    %v836 = vcombine.low %v149, %v151
    %v838 = vunpack.c.l.s4 1983009808
    %v839 = vunpack.c.0.s8 %v838
    %v840 = vlaneseq
    %v841 = vshrl.u32 %v840, 7
    %v842 = vsub.s32 %v839, %v841
    %v843 = vrot.slane %v835, %v842
    %v845 = vunpack.c.l.s4 1983009808
    %v846 = vunpack.c.0.s8 %v845
    %v847 = vlaneseq
    %v848 = vshrl.u32 %v847, 7
    %v849 = vsub.s32 %v846, %v848
    %v850 = vrot.slane %v836, %v849
    %v851 = vcombine.low %v843, %v850
    %v852 = vcombine.low %v158, %v168
    %v854 = vunpack.c.l.s4 1983009808
    %v855 = vunpack.c.0.s8 %v854
    %v856 = vlaneseq
    %v857 = vshrl.u32 %v856, 7
    %v858 = vsub.s32 %v855, %v857
    %v859 = vrot.slane %v852, %v858
    %v860 = vsel %vm375, %v766, 0
    %v862 = vsel %vm375, %v783, 0
    %v864 = vsel %vm375, %v800, 0
    %v866 = vsel %vm375, %v817, 0
    %v868 = vsel %vm375, %v834, 0
    %v870 = vsel %vm375, %v851, 0
    %v872 = vsel %vm375, %v859, 0
    %v875 = vsel %vm390, %v748, 0
    %v878 = vsel %vm390, %v749, 0
    %880 = vmatprep.subr.mxu0 %v743
    %881 = vmatpush1.msra.mxu0 %v742
    %882 = vmatprep.subr.mxu0 %v745
    %883 = vmatpush1.msra.mxu0 %v744
    %884 = vmatprep.subr.mxu0 %v747
    %885 = vmatpush1.msra.mxu0 %v746
    %886 = vmatprep.subr.mxu0 %v878
    %887 = vmatpush1.msra.mxu0 %v875
    %888 = vmatprep.subr.mxu0 0.0
    %889 = vmatpush1.msra.mxu0 0.0
    %890 = vmatprep.subr.mxu0 0.0
    %891 = vmatpush1.msra.mxu0 0.0
    %892 = vmatprep.subr.mxu0 0.0
    %893 = vmatpush1.msra.mxu0 0.0
    %894 = vmatprep.subr.mxu0 0.0
    %895 = vmatpush1.msra.mxu0 0.0
    %896 = vmatprep.subr.mxu0 0.0
    %897 = vmatpush1.msra.mxu0 0.0
    %898 = vmatprep.subr.mxu0 0.0
    %899 = vmatpush1.msra.mxu0 0.0
    %900 = vmatprep.subr.mxu0 0.0
    %901 = vmatpush1.msra.mxu0 0.0
    %902 = vmatprep.subr.mxu0 0.0
    %903 = vmatpush1.msra.mxu0 0.0
    %904 = vmatprep.subr.mxu0 0.0
    %905 = vmatpush1.msra.mxu0 0.0
    %906 = vmatprep.subr.mxu0 0.0
    %907 = vmatpush1.msra.mxu0 0.0
    %908 = vmatprep.subr.mxu0 0.0
    %909 = vmatpush1.msra.mxu0 0.0
    %910 = vmatprep.subr.mxu0 0.0
    %911 = vmatpush1.msra.mxu0 0.0
    %912 = vmatprep.subr.mxu0 0.0
    %913 = vmatpush1.msra.mxu0 0.0
    %914 = vmatprep.subr.mxu0 0.0
    %915 = vmatpush1.msra.mxu0 0.0
    %916 = vmatprep.subr.mxu0 0.0
    %917 = vmatpush1.msra.mxu0 0.0
    %918 = vmatprep.subr.mxu0 0.0
    %919 = vmatpush1.msra.mxu0 0.0
    %920 = vmatprep.subr.mxu0 0.0
    %921 = vmatpush1.msra.mxu0 0.0
    %922 = vmatprep.subr.mxu0 0.0
    %923 = vmatpush1.msra.mxu0 0.0
    %924 = vmatprep.subr.mxu0 0.0
    %925 = vmatpush1.msra.mxu0 0.0
    %926 = vmatprep.subr.mxu0 0.0
    %927 = vmatpush1.msra.mxu0 0.0
    %928 = vmatprep.subr.mxu0 0.0
    %929 = vmatpush1.msra.mxu0 0.0
    %930 = vmatprep.subr.mxu0 0.0
    %931 = vmatpush1.msra.mxu0 0.0
    %932 = vmatprep.subr.mxu0 0.0
    %933 = vmatpush1.msra.mxu0 0.0
    %934 = vmatprep.subr.mxu0 0.0
    %935 = vmatpush1.msra.mxu0 0.0
    %936 = vmatprep.subr.mxu0 0.0
    %937 = vmatpush1.msra.mxu0 0.0
    %938 = vmatprep.subr.mxu0 0.0
    %939 = vmatpush1.msra.mxu0 0.0
    %940 = vmatprep.subr.mxu0 0.0
    %941 = vmatpush1.msra.mxu0 0.0
    %942 = vmatprep.subr.mxu0 0.0
    %943 = vmatpush1.msra.mxu0 0.0
    %944 = vmatprep.mubr.f32.mxu0 0.0
    %945 = vmatmul.mubr.f32.gmra.mrb[0].mxu0 %v860
    %v946 = vpop.f32.mrb[0].mxu0
    %v947 = vadd.f32 0.0, %v946
    %v948 = vpop.f32.mrb[0].mxu0
    %v949 = vadd.f32 0.0, %v948
    %950 = vmatprep.mubr.f32.mxu0 0.0
    %951 = vmatmul.mubr.f32.gmra.mrb[0].mxu0 %v862
    %v952 = vpop.f32.mrb[0].mxu0
    %v953 = vadd.f32 0.0, %v952
    %v954 = vpop.f32.mrb[0].mxu0
    %v955 = vadd.f32 0.0, %v954
    %956 = vmatprep.mubr.f32.mxu0 0.0
    %957 = vmatmul.mubr.f32.gmra.mrb[0].mxu0 %v864
    %v958 = vpop.f32.mrb[0].mxu0
    %v959 = vadd.f32 0.0, %v958
    %v960 = vpop.f32.mrb[0].mxu0
    %v961 = vadd.f32 0.0, %v960
    %962 = vmatprep.mubr.f32.mxu0 0.0
    %963 = vmatmul.mubr.f32.gmra.mrb[0].mxu0 %v866
    %v964 = vpop.f32.mrb[0].mxu0
    %v965 = vadd.f32 0.0, %v964
    %v966 = vpop.f32.mrb[0].mxu0
    %v967 = vadd.f32 0.0, %v966
    %968 = vmatprep.mubr.f32.mxu0 0.0
    %969 = vmatmul.mubr.f32.gmra.mrb[0].mxu0 %v868
    %v970 = vpop.f32.mrb[0].mxu0
    %v971 = vadd.f32 0.0, %v970
    %v972 = vpop.f32.mrb[0].mxu0
    %v973 = vadd.f32 0.0, %v972
    %974 = vmatprep.mubr.f32.mxu0 0.0
    %975 = vmatmul.mubr.f32.gmra.mrb[0].mxu0 %v870
    %v976 = vpop.f32.mrb[0].mxu0
    %v977 = vadd.f32 0.0, %v976
    %v978 = vpop.f32.mrb[0].mxu0
    %v979 = vadd.f32 0.0, %v978
    %980 = vmatprep.mubr.f32.mxu0 0.0
    %981 = vmatmul.mubr.f32.gmra.mrb[0].mxu0 %v872
    %v982 = vpop.f32.mrb[0].mxu0
    %v983 = vadd.f32 0.0, %v982
    %v984 = vpop.f32.mrb[0].mxu0
    %v985 = vadd.f32 0.0, %v984
    %986 = vdwg.mxu0
    %v987 = vadd.f32 %v701, %v947
    %v988 = vadd.f32 %v703, %v949
    %v989 = vadd.f32 %v707, %v953
    %v990 = vadd.f32 %v709, %v955
    %v991 = vadd.f32 %v713, %v959
    %v992 = vadd.f32 %v715, %v961
    %v993 = vadd.f32 %v719, %v965
    %v994 = vadd.f32 %v721, %v967
    %v995 = vadd.f32 %v725, %v971
    %v996 = vadd.f32 %v727, %v973
    %v997 = vadd.f32 %v731, %v977
    %v998 = vadd.f32 %v733, %v979
    %v999 = vadd.f32 %v737, %v983
    %v1000 = vadd.f32 %v739, %v985
    %v1001 = vld [vmem:[%s2] sm:$0x3]
    %v1003 = vlaneseq
    %v1004 = vshrl.u32 %v1003, 7
    %v1005 = vsub.s32 0, %v1004
    %v1006 = vrot.slane %v1001, %v1005
    %v1007 = vlaneseq
    %v1008 = vshrl.u32 %v1007, 7
    %v1009 = vsub.s32 1, %v1008
    %v1010 = vrot.slane %v1001, %v1009
    %v1013 = vadd.f32 %v987, %v1006
    %v1014 = vadd.f32 %v988, %v1010
    %v1015 = vadd.f32 %v989, %v1006
    %v1016 = vadd.f32 %v990, %v1010
    %v1017 = vadd.f32 %v991, %v1006
    %v1018 = vadd.f32 %v992, %v1010
    %v1019 = vadd.f32 %v993, %v1006
    %v1020 = vadd.f32 %v994, %v1010
    %v1021 = vadd.f32 %v995, %v1006
    %v1022 = vadd.f32 %v996, %v1010
    %v1023 = vadd.f32 %v997, %v1006
    %v1024 = vadd.f32 %v998, %v1010
    %v1025 = vadd.f32 %v999, %v1006
    %v1026 = vadd.f32 %v1000, %v1010
    %v1027 = vmax.f32 %v1013, 0.0
    %v1028 = vmax.f32 %v1014, 0.0
    %v1029 = vmax.f32 %v1015, 0.0
    %v1030 = vmax.f32 %v1016, 0.0
    %v1031 = vmax.f32 %v1017, 0.0
    %v1032 = vmax.f32 %v1018, 0.0
    %v1033 = vmax.f32 %v1019, 0.0
    %v1034 = vmax.f32 %v1020, 0.0
    %v1035 = vmax.f32 %v1021, 0.0
    %v1036 = vmax.f32 %v1022, 0.0
    %v1037 = vmax.f32 %v1023, 0.0
    %v1038 = vmax.f32 %v1024, 0.0
    %v1039 = vmax.f32 %v1025, 0.0
    %v1040 = vmax.f32 %v1026, 0.0
    %v1055 = vcombine.low %v1027, %v1028
    %v1056 = vcombine.high %v1027, %v1028
    %v1058 = vunpack.c.l.s4 1983009808
    %v1059 = vunpack.c.0.s8 %v1058
    %v1060 = vlaneseq
    %v1061 = vshrl.u32 %v1060, 7
    %v1062 = vsub.s32 %v1059, %v1061
    %v1063 = vrot.slane %v1055, %v1062
    %v1065 = vunpack.c.l.s4 1983009808
    %v1066 = vunpack.c.0.s8 %v1065
    %v1067 = vlaneseq
    %v1068 = vshrl.u32 %v1067, 7
    %v1069 = vsub.s32 %v1066, %v1068
    %v1070 = vrot.slane %v1056, %v1069
    %v1071 = vcombine.high %v1063, %v1063
    %v1072 = vcombine.high %v1070, %v1070
    %v1073 = vcombine.low %v1029, %v1030
    %v1074 = vcombine.high %v1029, %v1030
    %v1076 = vunpack.c.l.s4 1983009808
    %v1077 = vunpack.c.0.s8 %v1076
    %v1078 = vlaneseq
    %v1079 = vshrl.u32 %v1078, 7
    %v1080 = vsub.s32 %v1077, %v1079
    %v1081 = vrot.slane %v1073, %v1080
    %v1083 = vunpack.c.l.s4 1983009808
    %v1084 = vunpack.c.0.s8 %v1083
    %v1085 = vlaneseq
    %v1086 = vshrl.u32 %v1085, 7
    %v1087 = vsub.s32 %v1084, %v1086
    %v1088 = vrot.slane %v1074, %v1087
    %v1089 = vcombine.high %v1081, %v1081
    %v1090 = vcombine.high %v1088, %v1088
    %v1091 = vcombine.low %v1031, %v1032
    %v1092 = vcombine.high %v1031, %v1032
    %v1094 = vunpack.c.l.s4 1983009808
    %v1095 = vunpack.c.0.s8 %v1094
    %v1096 = vlaneseq
    %v1097 = vshrl.u32 %v1096, 7
    %v1098 = vsub.s32 %v1095, %v1097
    %v1099 = vrot.slane %v1091, %v1098
    %v1101 = vunpack.c.l.s4 1983009808
    %v1102 = vunpack.c.0.s8 %v1101
    %v1103 = vlaneseq
    %v1104 = vshrl.u32 %v1103, 7
    %v1105 = vsub.s32 %v1102, %v1104
    %v1106 = vrot.slane %v1092, %v1105
    %v1107 = vcombine.high %v1099, %v1099
    %v1108 = vcombine.high %v1106, %v1106
    %v1109 = vcombine.low %v1033, %v1034
    %v1110 = vcombine.high %v1033, %v1034
    %v1112 = vunpack.c.l.s4 1983009808
    %v1113 = vunpack.c.0.s8 %v1112
    %v1114 = vlaneseq
    %v1115 = vshrl.u32 %v1114, 7
    %v1116 = vsub.s32 %v1113, %v1115
    %v1117 = vrot.slane %v1109, %v1116
    %v1119 = vunpack.c.l.s4 1983009808
    %v1120 = vunpack.c.0.s8 %v1119
    %v1121 = vlaneseq
    %v1122 = vshrl.u32 %v1121, 7
    %v1123 = vsub.s32 %v1120, %v1122
    %v1124 = vrot.slane %v1110, %v1123
    %v1125 = vcombine.high %v1117, %v1117
    %v1126 = vcombine.high %v1124, %v1124
    %v1127 = vcombine.low %v1035, %v1036
    %v1128 = vcombine.high %v1035, %v1036
    %v1130 = vunpack.c.l.s4 1983009808
    %v1131 = vunpack.c.0.s8 %v1130
    %v1132 = vlaneseq
    %v1133 = vshrl.u32 %v1132, 7
    %v1134 = vsub.s32 %v1131, %v1133
    %v1135 = vrot.slane %v1127, %v1134
    %v1137 = vunpack.c.l.s4 1983009808
    %v1138 = vunpack.c.0.s8 %v1137
    %v1139 = vlaneseq
    %v1140 = vshrl.u32 %v1139, 7
    %v1141 = vsub.s32 %v1138, %v1140
    %v1142 = vrot.slane %v1128, %v1141
    %v1143 = vcombine.high %v1135, %v1135
    %v1144 = vcombine.high %v1142, %v1142
    %v1145 = vcombine.low %v1037, %v1038
    %v1146 = vcombine.high %v1037, %v1038
    %v1148 = vunpack.c.l.s4 1983009808
    %v1149 = vunpack.c.0.s8 %v1148
    %v1150 = vlaneseq
    %v1151 = vshrl.u32 %v1150, 7
    %v1152 = vsub.s32 %v1149, %v1151
    %v1153 = vrot.slane %v1145, %v1152
    %v1155 = vunpack.c.l.s4 1983009808
    %v1156 = vunpack.c.0.s8 %v1155
    %v1157 = vlaneseq
    %v1158 = vshrl.u32 %v1157, 7
    %v1159 = vsub.s32 %v1156, %v1158
    %v1160 = vrot.slane %v1146, %v1159
    %v1161 = vcombine.high %v1153, %v1153
    %v1162 = vcombine.high %v1160, %v1160
    %v1163 = vcombine.low %v1039, %v1040
    %v1165 = vunpack.c.l.s4 1983009808
    %v1166 = vunpack.c.0.s8 %v1165
    %v1167 = vlaneseq
    %v1168 = vshrl.u32 %v1167, 7
    %v1169 = vsub.s32 %v1166, %v1168
    %v1170 = vrot.slane %v1163, %v1169
    %v1171 = vcombine.high %v1170, %v1170
    %v1172 = vld [vmem:[%s3] sm:$0xff]
    %v1173 = vld [vmem:[%s3 + $0x8] sm:$0xff]
    %v1174 = vld [vmem:[%s3 + $0x10] sm:$0xff]
    %v1175 = vld [vmem:[%s3 + $0x18] sm:$0xff]
    %v1176 = vld [vmem:[%s3 + $0x20] sm:$0xff]
    %v1177 = vld [vmem:[%s3 + $0x28] sm:$0xff]
    %v1178 = vld [vmem:[%s3 + $0x30] sm:$0xff]
    %v1179 = vld [vmem:[%s3 + $0x38] sm:$0xff]
    %v1180 = vld [vmem:[%s3 + $0x40] sm:$0xff]
    %v1181 = vld [vmem:[%s3 + $0x48] sm:$0xff]
    %v1182 = vld [vmem:[%s3 + $0x50] sm:$0xff]
    %v1183 = vld [vmem:[%s3 + $0x58] sm:$0xff]
    %v1184 = vld [vmem:[%s3 + $0x60] sm:$0xff]
    %v1185 = vld [vmem:[%s3 + $0x68] sm:$0xff]
    %v1186 = vld [vmem:[%s3 + $0x70] sm:$0xff]
    %v1187 = vld [vmem:[%s3 + $0x78] sm:$0xff]
    %v1188 = vld [vmem:[%s3 + $0x80] sm:$0xff]
    %v1189 = vld [vmem:[%s3 + $0x88] sm:$0xff]
    %v1190 = vld [vmem:[%s3 + $0x90] sm:$0xff]
    %v1191 = vld [vmem:[%s3 + $0x98] sm:$0xff]
    %v1192 = vld [vmem:[%s3 + $0xa0] sm:$0xff]
    %v1193 = vld [vmem:[%s3 + $0xa8] sm:$0xff]
    %v1194 = vld [vmem:[%s3 + $0xb0] sm:$0xff]
    %v1195 = vld [vmem:[%s3 + $0xb8] sm:$0xff]
    %v1196 = vld [vmem:[%s3 + $0xc0] sm:$0xff]
    %v1197 = vld [vmem:[%s3 + $0xc8] sm:$0xff]
    %v1198 = vld [vmem:[%s3 + $0xd0] sm:$0xff]
    %v1199 = vld [vmem:[%s3 + $0xd8] sm:$0xff]
    %v1200 = vld [vmem:[%s3 + $0xe0] sm:$0xff]
    %v1201 = vld [vmem:[%s3 + $0xe8] sm:$0xff]
    %v1202 = vld [vmem:[%s3 + $0xf0] sm:$0xff]
    %v1203 = vld [vmem:[%s3 + $0xf8] sm:$0xff]
    %v1204 = vld [vmem:[%s3 + $0x100] sm:$0xff]
    %v1205 = vld [vmem:[%s3 + $0x108] sm:$0xff]
    %v1206 = vld [vmem:[%s3 + $0x110] sm:$0xff]
    %v1207 = vld [vmem:[%s3 + $0x118] sm:$0xff]
    %v1208 = vld [vmem:[%s3 + $0x120] sm:$0xff]
    %v1209 = vld [vmem:[%s3 + $0x128] sm:$0xff]
    %v1210 = vld [vmem:[%s3 + $0x130] sm:$0xff]
    %v1211 = vld [vmem:[%s3 + $0x138] sm:$0xff]
    %v1212 = vld [vmem:[%s3 + $0x140] sm:$0xff]
    %v1213 = vld [vmem:[%s3 + $0x148] sm:$0xff]
    %v1214 = vld [vmem:[%s3 + $0x150] sm:$0xff]
    %v1215 = vld [vmem:[%s3 + $0x158] sm:$0xff]
    %v1216 = vld [vmem:[%s3 + $0x160] sm:$0xff]
    %v1217 = vld [vmem:[%s3 + $0x168] sm:$0xff]
    %v1218 = vld [vmem:[%s3 + $0x170] sm:$0xff]
    %v1219 = vld [vmem:[%s3 + $0x178] sm:$0xff]
    %v1220 = vld [vmem:[%s3 + $0x180] sm:$0xff]
    %v1221 = vld [vmem:[%s3 + $0x188] sm:$0xff]
    %v1222 = vld [vmem:[%s3 + $0x190] sm:$0xff]
    %v1223 = vld [vmem:[%s3 + $0x198] sm:$0xff]
    %v1224 = vld [vmem:[%s3 + $0x1a0] sm:$0xff]
    %v1225 = vld [vmem:[%s3 + $0x1a8] sm:$0xff]
    %v1226 = vld [vmem:[%s3 + $0x1b0] sm:$0xff]
    %v1227 = vld [vmem:[%s3 + $0x1b8] sm:$0xff]
    %v1228 = vld [vmem:[%s3 + $0x1c0] sm:$0xff]
    %v1229 = vld [vmem:[%s3 + $0x1c8] sm:$0xff]
    %v1230 = vld [vmem:[%s3 + $0x1d0] sm:$0xff]
    %v1231 = vld [vmem:[%s3 + $0x1d8] sm:$0xff]
    %v1232 = vld [vmem:[%s3 + $0x1e0] sm:$0xff]
    %v1233 = vld [vmem:[%s3 + $0x1e8] sm:$0xff]
    %v1234 = vld [vmem:[%s3 + $0x1f0] sm:$0xff]
    %v1235 = vld [vmem:[%s3 + $0x1f8] sm:$0xff]
    %v1236 = vld [vmem:[%s3 + $0x200] sm:$0xff]
    %v1237 = vld [vmem:[%s3 + $0x208] sm:$0xff]
    %v1238 = vld [vmem:[%s3 + $0x210] sm:$0xff]
    %v1239 = vld [vmem:[%s3 + $0x218] sm:$0xff]
    %v1240 = vld [vmem:[%s3 + $0x220] sm:$0xff]
    %v1241 = vld [vmem:[%s3 + $0x228] sm:$0xff]
    %v1242 = vld [vmem:[%s3 + $0x230] sm:$0xff]
    %v1243 = vld [vmem:[%s3 + $0x238] sm:$0xff]
    %v1244 = vld [vmem:[%s3 + $0x240] sm:$0xff]
    %v1245 = vld [vmem:[%s3 + $0x248] sm:$0xff]
    %v1246 = vld [vmem:[%s3 + $0x250] sm:$0xff]
    %v1247 = vld [vmem:[%s3 + $0x258] sm:$0xff]
    %v1248 = vld [vmem:[%s3 + $0x260] sm:$0xff]
    %v1249 = vld [vmem:[%s3 + $0x268] sm:$0xff]
    %v1250 = vrot.slane %v1063, 7
    %v1251 = vrot.slane %v1250, 2
    %v1252 = vrot.slane %v1071, 7
    %v1253 = vsel %vm175, %v1251, %v1252
    %v1254 = vrot.slane %v1252, 2
    %v1255 = vrot.slane %v1070, 7
    %v1256 = vsel %vm175, %v1254, %v1255
    %v1257 = vrot.slane %v1255, 2
    %v1258 = vrot.slane %v1072, 7
    %v1259 = vsel %vm175, %v1257, %v1258
    %v1260 = vrot.slane %v1258, 2
    %v1261 = vrot.slane %v1081, 7
    %v1262 = vsel %vm175, %v1260, %v1261
    %v1263 = vrot.slane %v1261, 2
    %v1264 = vrot.slane %v1089, 7
    %v1265 = vsel %vm175, %v1263, %v1264
    %v1266 = vrot.slane %v1264, 2
    %v1267 = vrot.slane %v1088, 7
    %v1268 = vsel %vm175, %v1266, %v1267
    %v1269 = vrot.slane %v1267, 2
    %v1270 = vrot.slane %v1090, 7
    %v1271 = vsel %vm175, %v1269, %v1270
    %v1272 = vrot.slane %v1270, 2
    %v1273 = vrot.slane %v1099, 7
    %v1274 = vsel %vm175, %v1272, %v1273
    %v1275 = vrot.slane %v1273, 2
    %v1276 = vrot.slane %v1107, 7
    %v1277 = vsel %vm175, %v1275, %v1276
    %v1278 = vrot.slane %v1276, 2
    %v1279 = vrot.slane %v1106, 7
    %v1280 = vsel %vm175, %v1278, %v1279
    %v1281 = vrot.slane %v1279, 2
    %v1282 = vrot.slane %v1108, 7
    %v1283 = vsel %vm175, %v1281, %v1282
    %v1284 = vrot.slane %v1282, 2
    %v1285 = vrot.slane %v1117, 7
    %v1286 = vsel %vm175, %v1284, %v1285
    %v1287 = vrot.slane %v1125, 7
    %v1288 = vrot.slane %v1287, 2
    %v1289 = vrot.slane %v1124, 7
    %v1290 = vsel %vm175, %v1288, %v1289
    %v1291 = vrot.slane %v1289, 2
    %v1292 = vrot.slane %v1126, 7
    %v1293 = vsel %vm175, %v1291, %v1292
    %v1294 = vrot.slane %v1292, 2
    %v1295 = vrot.slane %v1135, 7
    %v1296 = vsel %vm175, %v1294, %v1295
    %v1297 = vrot.slane %v1295, 2
    %v1298 = vrot.slane %v1143, 7
    %v1299 = vsel %vm175, %v1297, %v1298
    %v1300 = vrot.slane %v1298, 2
    %v1301 = vrot.slane %v1142, 7
    %v1302 = vsel %vm175, %v1300, %v1301
    %v1303 = vrot.slane %v1301, 2
    %v1304 = vrot.slane %v1144, 7
    %v1305 = vsel %vm175, %v1303, %v1304
    %v1306 = vrot.slane %v1304, 2
    %v1307 = vrot.slane %v1153, 7
    %v1308 = vsel %vm175, %v1306, %v1307
    %v1309 = vrot.slane %v1307, 2
    %v1310 = vrot.slane %v1161, 7
    %v1311 = vsel %vm175, %v1309, %v1310
    %v1312 = vrot.slane %v1310, 2
    %v1313 = vrot.slane %v1160, 7
    %v1314 = vsel %vm175, %v1312, %v1313
    %v1315 = vrot.slane %v1313, 2
    %v1316 = vrot.slane %v1162, 7
    %v1317 = vsel %vm175, %v1315, %v1316
    %v1318 = vrot.slane %v1316, 2
    %v1319 = vrot.slane %v1170, 7
    %v1320 = vsel %vm175, %v1318, %v1319
    %v1321 = vrot.slane %v1319, 2
    %v1322 = vrot.slane %v1171, 7
    %v1323 = vsel %vm175, %v1321, %v1322
    %s1324 = scalar_lea.vmem %s3, 624
    %v1325 = vld [vmem:[%s1324] sm:$0xff]
    %v1326 = vld [vmem:[%s1324 + $0x8] sm:$0xff]
    %v1327 = vld [vmem:[%s1324 + $0x10] sm:$0xff]
    %v1328 = vld [vmem:[%s1324 + $0x18] sm:$0xff]
    %v1329 = vld [vmem:[%s1324 + $0x20] sm:$0xff]
    %v1330 = vld [vmem:[%s1324 + $0x28] sm:$0xff]
    %v1331 = vld [vmem:[%s1324 + $0x30] sm:$0xff]
    %v1332 = vld [vmem:[%s1324 + $0x38] sm:$0xff]
    %v1333 = vld [vmem:[%s1324 + $0x40] sm:$0xff]
    %v1334 = vld [vmem:[%s1324 + $0x48] sm:$0xff]
    %v1335 = vld [vmem:[%s1324 + $0x50] sm:$0xff]
    %v1336 = vld [vmem:[%s1324 + $0x58] sm:$0xff]
    %v1337 = vld [vmem:[%s1324 + $0x60] sm:$0xff]
    %v1338 = vld [vmem:[%s1324 + $0x68] sm:$0xff]
    %v1339 = vld [vmem:[%s1324 + $0x70] sm:$0xff]
    %v1340 = vld [vmem:[%s1324 + $0x78] sm:$0xff]
    %v1341 = vld [vmem:[%s1324 + $0x80] sm:$0xff]
    %v1342 = vld [vmem:[%s1324 + $0x88] sm:$0xff]
    %v1343 = vld [vmem:[%s1324 + $0x90] sm:$0xff]
    %v1344 = vld [vmem:[%s1324 + $0x98] sm:$0xff]
    %v1345 = vld [vmem:[%s1324 + $0xa0] sm:$0xff]
    %v1346 = vld [vmem:[%s1324 + $0xa8] sm:$0xff]
    %v1347 = vld [vmem:[%s1324 + $0xb0] sm:$0xff]
    %v1348 = vld [vmem:[%s1324 + $0xb8] sm:$0xff]
    %v1349 = vld [vmem:[%s1324 + $0xc0] sm:$0xff]
    %v1350 = vld [vmem:[%s1324 + $0xc8] sm:$0xff]
    %v1351 = vld [vmem:[%s1324 + $0xd0] sm:$0xff]
    %v1352 = vld [vmem:[%s1324 + $0xd8] sm:$0xff]
    %v1353 = vld [vmem:[%s1324 + $0xe0] sm:$0xff]
    %v1354 = vld [vmem:[%s1324 + $0xe8] sm:$0xff]
    %v1355 = vld [vmem:[%s1324 + $0xf0] sm:$0xff]
    %v1356 = vld [vmem:[%s1324 + $0xf8] sm:$0xff]
    %v1357 = vld [vmem:[%s1324 + $0x100] sm:$0xff]
    %v1358 = vld [vmem:[%s1324 + $0x108] sm:$0xff]
    %v1359 = vld [vmem:[%s1324 + $0x110] sm:$0xff]
    %v1360 = vld [vmem:[%s1324 + $0x118] sm:$0xff]
    %v1361 = vld [vmem:[%s1324 + $0x120] sm:$0xff]
    %v1362 = vld [vmem:[%s1324 + $0x128] sm:$0xff]
    %v1363 = vld [vmem:[%s1324 + $0x130] sm:$0xff]
    %v1364 = vld [vmem:[%s1324 + $0x138] sm:$0xff]
    %v1365 = vld [vmem:[%s1324 + $0x140] sm:$0xff]
    %v1366 = vld [vmem:[%s1324 + $0x148] sm:$0xff]
    %v1367 = vld [vmem:[%s1324 + $0x150] sm:$0xff]
    %v1368 = vld [vmem:[%s1324 + $0x158] sm:$0xff]
    %v1369 = vld [vmem:[%s1324 + $0x160] sm:$0xff]
    %v1370 = vld [vmem:[%s1324 + $0x168] sm:$0xff]
    %v1371 = vld [vmem:[%s1324 + $0x170] sm:$0xff]
    %v1372 = vld [vmem:[%s1324 + $0x178] sm:$0xff]
    %v1373 = vld [vmem:[%s1324 + $0x180] sm:$0xff]
    %v1374 = vld [vmem:[%s1324 + $0x188] sm:$0xff]
    %v1375 = vld [vmem:[%s1324 + $0x190] sm:$0xff]
    %v1376 = vld [vmem:[%s1324 + $0x198] sm:$0xff]
    %v1377 = vld [vmem:[%s1324 + $0x1a0] sm:$0xff]
    %v1378 = vld [vmem:[%s1324 + $0x1a8] sm:$0xff]
    %v1379 = vld [vmem:[%s1324 + $0x1b0] sm:$0xff]
    %v1380 = vld [vmem:[%s1324 + $0x1b8] sm:$0xff]
    %v1381 = vld [vmem:[%s1324 + $0x1c0] sm:$0xff]
    %v1382 = vld [vmem:[%s1324 + $0x1c8] sm:$0xff]
    %v1383 = vld [vmem:[%s1324 + $0x1d0] sm:$0xff]
    %v1384 = vld [vmem:[%s1324 + $0x1d8] sm:$0xff]
    %v1385 = vld [vmem:[%s1324 + $0x1e0] sm:$0xff]
    %v1386 = vld [vmem:[%s1324 + $0x1e8] sm:$0xff]
    %v1387 = vld [vmem:[%s1324 + $0x1f0] sm:$0xff]
    %v1388 = vld [vmem:[%s1324 + $0x1f8] sm:$0xff]
    %v1389 = vld [vmem:[%s1324 + $0x200] sm:$0xff]
    %v1390 = vld [vmem:[%s1324 + $0x208] sm:$0xff]
    %v1391 = vld [vmem:[%s1324 + $0x210] sm:$0xff]
    %v1392 = vld [vmem:[%s1324 + $0x218] sm:$0xff]
    %v1393 = vld [vmem:[%s1324 + $0x220] sm:$0xff]
    %v1394 = vld [vmem:[%s1324 + $0x228] sm:$0xff]
    %v1395 = vld [vmem:[%s1324 + $0x230] sm:$0xff]
    %v1396 = vld [vmem:[%s1324 + $0x238] sm:$0xff]
    %v1397 = vld [vmem:[%s1324 + $0x240] sm:$0xff]
    %v1398 = vld [vmem:[%s1324 + $0x248] sm:$0xff]
    %v1399 = vld [vmem:[%s1324 + $0x250] sm:$0xff]
    %v1400 = vld [vmem:[%s1324 + $0x258] sm:$0xff]
    %v1401 = vld [vmem:[%s1324 + $0x260] sm:$0xff]
    %v1402 = vld [vmem:[%s1324 + $0x268] sm:$0xff]
    %v1403 = vcombine.low %v1253, %v1256
    %v1404 = vcombine.low %v1259, %v1262
    %v1406 = vunpack.c.l.s4 1983009808
    %v1407 = vunpack.c.0.s8 %v1406
    %v1408 = vlaneseq
    %v1409 = vshrl.u32 %v1408, 7
    %v1410 = vsub.s32 %v1407, %v1409
    %v1411 = vrot.slane %v1403, %v1410
    %v1413 = vunpack.c.l.s4 1983009808
    %v1414 = vunpack.c.0.s8 %v1413
    %v1415 = vlaneseq
    %v1416 = vshrl.u32 %v1415, 7
    %v1417 = vsub.s32 %v1414, %v1416
    %v1418 = vrot.slane %v1404, %v1417
    %v1419 = vcombine.low %v1411, %v1418
    %v1420 = vcombine.high %v1411, %v1418
    %v1421 = vcombine.low %v1265, %v1268
    %v1422 = vcombine.low %v1271, %v1274
    %v1424 = vunpack.c.l.s4 1983009808
    %v1425 = vunpack.c.0.s8 %v1424
    %v1426 = vlaneseq
    %v1427 = vshrl.u32 %v1426, 7
    %v1428 = vsub.s32 %v1425, %v1427
    %v1429 = vrot.slane %v1421, %v1428
    %v1431 = vunpack.c.l.s4 1983009808
    %v1432 = vunpack.c.0.s8 %v1431
    %v1433 = vlaneseq
    %v1434 = vshrl.u32 %v1433, 7
    %v1435 = vsub.s32 %v1432, %v1434
    %v1436 = vrot.slane %v1422, %v1435
    %v1437 = vcombine.low %v1429, %v1436
    %v1438 = vcombine.high %v1429, %v1436
    %v1439 = vcombine.low %v1277, %v1280
    %v1440 = vcombine.low %v1283, %v1286
    %v1442 = vunpack.c.l.s4 1983009808
    %v1443 = vunpack.c.0.s8 %v1442
    %v1444 = vlaneseq
    %v1445 = vshrl.u32 %v1444, 7
    %v1446 = vsub.s32 %v1443, %v1445
    %v1447 = vrot.slane %v1439, %v1446
    %v1449 = vunpack.c.l.s4 1983009808
    %v1450 = vunpack.c.0.s8 %v1449
    %v1451 = vlaneseq
    %v1452 = vshrl.u32 %v1451, 7
    %v1453 = vsub.s32 %v1450, %v1452
    %v1454 = vrot.slane %v1440, %v1453
    %v1455 = vcombine.low %v1447, %v1454
    %v1456 = vcombine.high %v1447, %v1454
    %v1457 = vcombine.low %v1290, %v1293
    %v1458 = vcombine.low %v1296, %v1299
    %v1460 = vunpack.c.l.s4 1983009808
    %v1461 = vunpack.c.0.s8 %v1460
    %v1462 = vlaneseq
    %v1463 = vshrl.u32 %v1462, 7
    %v1464 = vsub.s32 %v1461, %v1463
    %v1465 = vrot.slane %v1457, %v1464
    %v1467 = vunpack.c.l.s4 1983009808
    %v1468 = vunpack.c.0.s8 %v1467
    %v1469 = vlaneseq
    %v1470 = vshrl.u32 %v1469, 7
    %v1471 = vsub.s32 %v1468, %v1470
    %v1472 = vrot.slane %v1458, %v1471
    %v1473 = vcombine.low %v1465, %v1472
    %v1474 = vcombine.high %v1465, %v1472
    %v1475 = vcombine.low %v1302, %v1305
    %v1476 = vcombine.low %v1308, %v1311
    %v1478 = vunpack.c.l.s4 1983009808
    %v1479 = vunpack.c.0.s8 %v1478
    %v1480 = vlaneseq
    %v1481 = vshrl.u32 %v1480, 7
    %v1482 = vsub.s32 %v1479, %v1481
    %v1483 = vrot.slane %v1475, %v1482
    %v1485 = vunpack.c.l.s4 1983009808
    %v1486 = vunpack.c.0.s8 %v1485
    %v1487 = vlaneseq
    %v1488 = vshrl.u32 %v1487, 7
    %v1489 = vsub.s32 %v1486, %v1488
    %v1490 = vrot.slane %v1476, %v1489
    %v1491 = vcombine.low %v1483, %v1490
    %v1492 = vcombine.high %v1483, %v1490
    %v1493 = vcombine.low %v1314, %v1317
    %v1494 = vcombine.low %v1320, %v1323
    %v1496 = vunpack.c.l.s4 1983009808
    %v1497 = vunpack.c.0.s8 %v1496
    %v1498 = vlaneseq
    %v1499 = vshrl.u32 %v1498, 7
    %v1500 = vsub.s32 %v1497, %v1499
    %v1501 = vrot.slane %v1493, %v1500
    %v1503 = vunpack.c.l.s4 1983009808
    %v1504 = vunpack.c.0.s8 %v1503
    %v1505 = vlaneseq
    %v1506 = vshrl.u32 %v1505, 7
    %v1507 = vsub.s32 %v1504, %v1506
    %v1508 = vrot.slane %v1494, %v1507
    %v1509 = vcombine.low %v1501, %v1508
    %v1510 = vcombine.high %v1501, %v1508
    %vm1517 = vcmask 654336
    %v1518 = vsel %vm1517, %v1420, 0
    %v1520 = vsel %vm1517, %v1438, 0
    %v1522 = vsel %vm1517, %v1456, 0
    %v1524 = vsel %vm1517, %v1474, 0
    %v1526 = vsel %vm1517, %v1492, 0
    %v1528 = vsel %vm1517, %v1510, 0
    %1530 = vmatprep.subr.mxu0 %v1326
    %1531 = vmatpush1.msra.mxu0 %v1325
    %1532 = vmatprep.subr.mxu0 %v1329
    %1533 = vmatpush1.msra.mxu0 %v1328
    %1534 = vmatprep.subr.mxu0 %v1332
    %1535 = vmatpush1.msra.mxu0 %v1331
    %1536 = vmatprep.subr.mxu0 %v1335
    %1537 = vmatpush1.msra.mxu0 %v1334
    %1538 = vmatprep.subr.mxu0 %v1338
    %1539 = vmatpush1.msra.mxu0 %v1337
    %1540 = vmatprep.subr.mxu0 %v1341
    %1541 = vmatpush1.msra.mxu0 %v1340
    %1542 = vmatprep.subr.mxu0 %v1344
    %1543 = vmatpush1.msra.mxu0 %v1343
    %1544 = vmatprep.subr.mxu0 %v1347
    %1545 = vmatpush1.msra.mxu0 %v1346
    %1546 = vmatprep.subr.mxu0 %v1350
    %1547 = vmatpush1.msra.mxu0 %v1349
    %1548 = vmatprep.subr.mxu0 %v1353
    %1549 = vmatpush1.msra.mxu0 %v1352
    %1550 = vmatprep.subr.mxu0 %v1356
    %1551 = vmatpush1.msra.mxu0 %v1355
    %1552 = vmatprep.subr.mxu0 %v1359
    %1553 = vmatpush1.msra.mxu0 %v1358
    %1554 = vmatprep.subr.mxu0 %v1362
    %1555 = vmatpush1.msra.mxu0 %v1361
    %1556 = vmatprep.subr.mxu0 %v1365
    %1557 = vmatpush1.msra.mxu0 %v1364
    %1558 = vmatprep.subr.mxu0 %v1368
    %1559 = vmatpush1.msra.mxu0 %v1367
    %1560 = vmatprep.subr.mxu0 %v1371
    %1561 = vmatpush1.msra.mxu0 %v1370
    %1562 = vmatprep.subr.mxu0 %v1374
    %1563 = vmatpush1.msra.mxu0 %v1373
    %1564 = vmatprep.subr.mxu0 %v1377
    %1565 = vmatpush1.msra.mxu0 %v1376
    %1566 = vmatprep.subr.mxu0 %v1380
    %1567 = vmatpush1.msra.mxu0 %v1379
    %1568 = vmatprep.subr.mxu0 %v1383
    %1569 = vmatpush1.msra.mxu0 %v1382
    %1570 = vmatprep.subr.mxu0 %v1386
    %1571 = vmatpush1.msra.mxu0 %v1385
    %1572 = vmatprep.subr.mxu0 %v1389
    %1573 = vmatpush1.msra.mxu0 %v1388
    %1574 = vmatprep.subr.mxu0 %v1392
    %1575 = vmatpush1.msra.mxu0 %v1391
    %1576 = vmatprep.subr.mxu0 %v1395
    %1577 = vmatpush1.msra.mxu0 %v1394
    %1578 = vmatprep.subr.mxu0 %v1398
    %1579 = vmatpush1.msra.mxu0 %v1397
    %1580 = vmatprep.subr.mxu0 %v1401
    %1581 = vmatpush1.msra.mxu0 %v1400
    %1582 = vmatprep.subr.mxu0 0.0
    %1583 = vmatpush1.msra.mxu0 0.0
    %1584 = vmatprep.subr.mxu0 0.0
    %1585 = vmatpush1.msra.mxu0 0.0
    %1586 = vmatprep.subr.mxu0 0.0
    %1587 = vmatpush1.msra.mxu0 0.0
    %1588 = vmatprep.subr.mxu0 0.0
    %1589 = vmatpush1.msra.mxu0 0.0
    %1590 = vmatprep.subr.mxu0 0.0
    %1591 = vmatpush1.msra.mxu0 0.0
    %1592 = vmatprep.subr.mxu0 0.0
    %1593 = vmatpush1.msra.mxu0 0.0
    %1594 = vmatprep.mubr.f32.mxu0 %v1518
    %1595 = vmatmul.mubr.f32.gmra.mrb[0].mxu0 %v1419
    %v1596 = vpop.f32.mrb[0].mxu0
    %v1597 = vadd.f32 0.0, %v1596
    %v1598 = vpop.f32.mrb[0].mxu0
    %v1599 = vadd.f32 0.0, %v1598
    %1600 = vmatprep.mubr.f32.mxu0 %v1520
    %1601 = vmatmul.mubr.f32.gmra.mrb[0].mxu0 %v1437
    %v1602 = vpop.f32.mrb[0].mxu0
    %v1603 = vadd.f32 0.0, %v1602
    %v1604 = vpop.f32.mrb[0].mxu0
    %v1605 = vadd.f32 0.0, %v1604
    %1606 = vmatprep.mubr.f32.mxu0 %v1522
    %1607 = vmatmul.mubr.f32.gmra.mrb[0].mxu0 %v1455
    %v1608 = vpop.f32.mrb[0].mxu0
    %v1609 = vadd.f32 0.0, %v1608
    %v1610 = vpop.f32.mrb[0].mxu0
    %v1611 = vadd.f32 0.0, %v1610
    %1612 = vmatprep.mubr.f32.mxu0 %v1524
    %1613 = vmatmul.mubr.f32.gmra.mrb[0].mxu0 %v1473
    %v1614 = vpop.f32.mrb[0].mxu0
    %v1615 = vadd.f32 0.0, %v1614
    %v1616 = vpop.f32.mrb[0].mxu0
    %v1617 = vadd.f32 0.0, %v1616
    %1618 = vmatprep.mubr.f32.mxu0 %v1526
    %1619 = vmatmul.mubr.f32.gmra.mrb[0].mxu0 %v1491
    %v1620 = vpop.f32.mrb[0].mxu0
    %v1621 = vadd.f32 0.0, %v1620
    %v1622 = vpop.f32.mrb[0].mxu0
    %v1623 = vadd.f32 0.0, %v1622
    %1624 = vmatprep.mubr.f32.mxu0 %v1528
    %1625 = vmatmul.mubr.f32.gmra.mrb[0].mxu0 %v1509
    %v1626 = vpop.f32.mrb[0].mxu0
    %v1627 = vadd.f32 0.0, %v1626
    %v1628 = vpop.f32.mrb[0].mxu0
    %v1629 = vadd.f32 0.0, %v1628
    %1630 = vdwg.mxu0
    %1631 = vmatprep.subr.mxu0 0.0
    %1632 = vmatpush1.msra.mxu0 %v1327
    %1633 = vmatprep.subr.mxu0 0.0
    %1634 = vmatpush1.msra.mxu0 %v1330
    %1635 = vmatprep.subr.mxu0 0.0
    %1636 = vmatpush1.msra.mxu0 %v1333
    %1637 = vmatprep.subr.mxu0 0.0
    %1638 = vmatpush1.msra.mxu0 %v1336
    %1639 = vmatprep.subr.mxu0 0.0
    %1640 = vmatpush1.msra.mxu0 %v1339
    %1641 = vmatprep.subr.mxu0 0.0
    %1642 = vmatpush1.msra.mxu0 %v1342
    %1643 = vmatprep.subr.mxu0 0.0
    %1644 = vmatpush1.msra.mxu0 %v1345
    %1645 = vmatprep.subr.mxu0 0.0
    %1646 = vmatpush1.msra.mxu0 %v1348
    %1647 = vmatprep.subr.mxu0 0.0
    %1648 = vmatpush1.msra.mxu0 %v1351
    %1649 = vmatprep.subr.mxu0 0.0
    %1650 = vmatpush1.msra.mxu0 %v1354
    %1651 = vmatprep.subr.mxu0 0.0
    %1652 = vmatpush1.msra.mxu0 %v1357
    %1653 = vmatprep.subr.mxu0 0.0
    %1654 = vmatpush1.msra.mxu0 %v1360
    %1655 = vmatprep.subr.mxu0 0.0
    %1656 = vmatpush1.msra.mxu0 %v1363
    %1657 = vmatprep.subr.mxu0 0.0
    %1658 = vmatpush1.msra.mxu0 %v1366
    %1659 = vmatprep.subr.mxu0 0.0
    %1660 = vmatpush1.msra.mxu0 %v1369
    %1661 = vmatprep.subr.mxu0 0.0
    %1662 = vmatpush1.msra.mxu0 %v1372
    %1663 = vmatprep.subr.mxu0 0.0
    %1664 = vmatpush1.msra.mxu0 %v1375
    %1665 = vmatprep.subr.mxu0 0.0
    %1666 = vmatpush1.msra.mxu0 %v1378
    %1667 = vmatprep.subr.mxu0 0.0
    %1668 = vmatpush1.msra.mxu0 %v1381
    %1669 = vmatprep.subr.mxu0 0.0
    %1670 = vmatpush1.msra.mxu0 %v1384
    %1671 = vmatprep.subr.mxu0 0.0
    %1672 = vmatpush1.msra.mxu0 %v1387
    %1673 = vmatprep.subr.mxu0 0.0
    %1674 = vmatpush1.msra.mxu0 %v1390
    %1675 = vmatprep.subr.mxu0 0.0
    %1676 = vmatpush1.msra.mxu0 %v1393
    %1677 = vmatprep.subr.mxu0 0.0
    %1678 = vmatpush1.msra.mxu0 %v1396
    %1679 = vmatprep.subr.mxu0 0.0
    %1680 = vmatpush1.msra.mxu0 %v1399
    %1681 = vmatprep.subr.mxu0 0.0
    %1682 = vmatpush1.msra.mxu0 %v1402
    %1683 = vmatprep.subr.mxu0 0.0
    %1684 = vmatpush1.msra.mxu0 0.0
    %1685 = vmatprep.subr.mxu0 0.0
    %1686 = vmatpush1.msra.mxu0 0.0
    %1687 = vmatprep.subr.mxu0 0.0
    %1688 = vmatpush1.msra.mxu0 0.0
    %1689 = vmatprep.subr.mxu0 0.0
    %1690 = vmatpush1.msra.mxu0 0.0
    %1691 = vmatprep.subr.mxu0 0.0
    %1692 = vmatpush1.msra.mxu0 0.0
    %1693 = vmatprep.subr.mxu0 0.0
    %1694 = vmatpush1.msra.mxu0 0.0
    %1695 = vmatprep.mubr.f32.mxu0 %v1518
    %1696 = vmatmul.mubr.f32.gmra.mrb[0].mxu0 %v1419
    %v1697 = vpop.f32.mrb[0].mxu0
    %v1698 = vadd.f32 0.0, %v1697
    %v1699 = vpop.f32.mrb[0].mxu0
    %1700 = vmatprep.mubr.f32.mxu0 %v1520
    %1701 = vmatmul.mubr.f32.gmra.mrb[0].mxu0 %v1437
    %v1702 = vpop.f32.mrb[0].mxu0
    %v1703 = vadd.f32 0.0, %v1702
    %v1704 = vpop.f32.mrb[0].mxu0
    %1705 = vmatprep.mubr.f32.mxu0 %v1522
    %1706 = vmatmul.mubr.f32.gmra.mrb[0].mxu0 %v1455
    %v1707 = vpop.f32.mrb[0].mxu0
    %v1708 = vadd.f32 0.0, %v1707
    %v1709 = vpop.f32.mrb[0].mxu0
    %1710 = vmatprep.mubr.f32.mxu0 %v1524
    %1711 = vmatmul.mubr.f32.gmra.mrb[0].mxu0 %v1473
    %v1712 = vpop.f32.mrb[0].mxu0
    %v1713 = vadd.f32 0.0, %v1712
    %v1714 = vpop.f32.mrb[0].mxu0
    %1715 = vmatprep.mubr.f32.mxu0 %v1526
    %1716 = vmatmul.mubr.f32.gmra.mrb[0].mxu0 %v1491
    %v1717 = vpop.f32.mrb[0].mxu0
    %v1718 = vadd.f32 0.0, %v1717
    %v1719 = vpop.f32.mrb[0].mxu0
    %1720 = vmatprep.mubr.f32.mxu0 %v1528
    %1721 = vmatmul.mubr.f32.gmra.mrb[0].mxu0 %v1509
    %v1722 = vpop.f32.mrb[0].mxu0
    %v1723 = vadd.f32 0.0, %v1722
    %v1724 = vpop.f32.mrb[0].mxu0
    %1725 = vdwg.mxu0
    %v1726 = vcombine.low %v1063, %v1071
    %v1727 = vcombine.low %v1070, %v1072
    %v1729 = vunpack.c.l.s4 1983009808
    %v1730 = vunpack.c.0.s8 %v1729
    %v1731 = vlaneseq
    %v1732 = vshrl.u32 %v1731, 7
    %v1733 = vsub.s32 %v1730, %v1732
    %v1734 = vrot.slane %v1726, %v1733
    %v1736 = vunpack.c.l.s4 1983009808
    %v1737 = vunpack.c.0.s8 %v1736
    %v1738 = vlaneseq
    %v1739 = vshrl.u32 %v1738, 7
    %v1740 = vsub.s32 %v1737, %v1739
    %v1741 = vrot.slane %v1727, %v1740
    %v1742 = vcombine.low %v1734, %v1741
    %v1743 = vcombine.high %v1734, %v1741
    %v1744 = vcombine.low %v1081, %v1089
    %v1745 = vcombine.low %v1088, %v1090
    %v1747 = vunpack.c.l.s4 1983009808
    %v1748 = vunpack.c.0.s8 %v1747
    %v1749 = vlaneseq
    %v1750 = vshrl.u32 %v1749, 7
    %v1751 = vsub.s32 %v1748, %v1750
    %v1752 = vrot.slane %v1744, %v1751
    %v1754 = vunpack.c.l.s4 1983009808
    %v1755 = vunpack.c.0.s8 %v1754
    %v1756 = vlaneseq
    %v1757 = vshrl.u32 %v1756, 7
    %v1758 = vsub.s32 %v1755, %v1757
    %v1759 = vrot.slane %v1745, %v1758
    %v1760 = vcombine.low %v1752, %v1759
    %v1761 = vcombine.high %v1752, %v1759
    %v1762 = vcombine.low %v1099, %v1107
    %v1763 = vcombine.low %v1106, %v1108
    %v1765 = vunpack.c.l.s4 1983009808
    %v1766 = vunpack.c.0.s8 %v1765
    %v1767 = vlaneseq
    %v1768 = vshrl.u32 %v1767, 7
    %v1769 = vsub.s32 %v1766, %v1768
    %v1770 = vrot.slane %v1762, %v1769
    %v1772 = vunpack.c.l.s4 1983009808
    %v1773 = vunpack.c.0.s8 %v1772
    %v1774 = vlaneseq
    %v1775 = vshrl.u32 %v1774, 7
    %v1776 = vsub.s32 %v1773, %v1775
    %v1777 = vrot.slane %v1763, %v1776
    %v1778 = vcombine.low %v1770, %v1777
    %v1779 = vcombine.high %v1770, %v1777
    %v1780 = vcombine.low %v1125, %v1124
    %v1781 = vcombine.low %v1126, %v1135
    %v1783 = vunpack.c.l.s4 1983009808
    %v1784 = vunpack.c.0.s8 %v1783
    %v1785 = vlaneseq
    %v1786 = vshrl.u32 %v1785, 7
    %v1787 = vsub.s32 %v1784, %v1786
    %v1788 = vrot.slane %v1780, %v1787
    %v1790 = vunpack.c.l.s4 1983009808
    %v1791 = vunpack.c.0.s8 %v1790
    %v1792 = vlaneseq
    %v1793 = vshrl.u32 %v1792, 7
    %v1794 = vsub.s32 %v1791, %v1793
    %v1795 = vrot.slane %v1781, %v1794
    %v1796 = vcombine.low %v1788, %v1795
    %v1797 = vcombine.high %v1788, %v1795
    %v1798 = vcombine.low %v1143, %v1142
    %v1799 = vcombine.low %v1144, %v1153
    %v1801 = vunpack.c.l.s4 1983009808
    %v1802 = vunpack.c.0.s8 %v1801
    %v1803 = vlaneseq
    %v1804 = vshrl.u32 %v1803, 7
    %v1805 = vsub.s32 %v1802, %v1804
    %v1806 = vrot.slane %v1798, %v1805
    %v1808 = vunpack.c.l.s4 1983009808
    %v1809 = vunpack.c.0.s8 %v1808
    %v1810 = vlaneseq
    %v1811 = vshrl.u32 %v1810, 7
    %v1812 = vsub.s32 %v1809, %v1811
    %v1813 = vrot.slane %v1799, %v1812
    %v1814 = vcombine.low %v1806, %v1813
    %v1815 = vcombine.high %v1806, %v1813
    %v1816 = vcombine.low %v1161, %v1160
    %v1817 = vcombine.low %v1162, %v1170
    %v1819 = vunpack.c.l.s4 1983009808
    %v1820 = vunpack.c.0.s8 %v1819
    %v1821 = vlaneseq
    %v1822 = vshrl.u32 %v1821, 7
    %v1823 = vsub.s32 %v1820, %v1822
    %v1824 = vrot.slane %v1816, %v1823
    %v1826 = vunpack.c.l.s4 1983009808
    %v1827 = vunpack.c.0.s8 %v1826
    %v1828 = vlaneseq
    %v1829 = vshrl.u32 %v1828, 7
    %v1830 = vsub.s32 %v1827, %v1829
    %v1831 = vrot.slane %v1817, %v1830
    %v1832 = vcombine.low %v1824, %v1831
    %v1833 = vcombine.high %v1824, %v1831
    %v1840 = vsel %vm1517, %v1743, 0
    %v1842 = vsel %vm1517, %v1761, 0
    %v1844 = vsel %vm1517, %v1779, 0
    %v1846 = vsel %vm1517, %v1797, 0
    %v1848 = vsel %vm1517, %v1815, 0
    %v1850 = vsel %vm1517, %v1833, 0
    %1852 = vmatprep.subr.mxu0 %v1173
    %1853 = vmatpush1.msra.mxu0 %v1172
    %1854 = vmatprep.subr.mxu0 %v1176
    %1855 = vmatpush1.msra.mxu0 %v1175
    %1856 = vmatprep.subr.mxu0 %v1179
    %1857 = vmatpush1.msra.mxu0 %v1178
    %1858 = vmatprep.subr.mxu0 %v1182
    %1859 = vmatpush1.msra.mxu0 %v1181
    %1860 = vmatprep.subr.mxu0 %v1185
    %1861 = vmatpush1.msra.mxu0 %v1184
    %1862 = vmatprep.subr.mxu0 %v1188
    %1863 = vmatpush1.msra.mxu0 %v1187
    %1864 = vmatprep.subr.mxu0 %v1191
    %1865 = vmatpush1.msra.mxu0 %v1190
    %1866 = vmatprep.subr.mxu0 %v1194
    %1867 = vmatpush1.msra.mxu0 %v1193
    %1868 = vmatprep.subr.mxu0 %v1197
    %1869 = vmatpush1.msra.mxu0 %v1196
    %1870 = vmatprep.subr.mxu0 %v1200
    %1871 = vmatpush1.msra.mxu0 %v1199
    %1872 = vmatprep.subr.mxu0 %v1203
    %1873 = vmatpush1.msra.mxu0 %v1202
    %1874 = vmatprep.subr.mxu0 %v1206
    %1875 = vmatpush1.msra.mxu0 %v1205
    %1876 = vmatprep.subr.mxu0 %v1209
    %1877 = vmatpush1.msra.mxu0 %v1208
    %1878 = vmatprep.subr.mxu0 %v1212
    %1879 = vmatpush1.msra.mxu0 %v1211
    %1880 = vmatprep.subr.mxu0 %v1215
    %1881 = vmatpush1.msra.mxu0 %v1214
    %1882 = vmatprep.subr.mxu0 %v1218
    %1883 = vmatpush1.msra.mxu0 %v1217
    %1884 = vmatprep.subr.mxu0 %v1221
    %1885 = vmatpush1.msra.mxu0 %v1220
    %1886 = vmatprep.subr.mxu0 %v1224
    %1887 = vmatpush1.msra.mxu0 %v1223
    %1888 = vmatprep.subr.mxu0 %v1227
    %1889 = vmatpush1.msra.mxu0 %v1226
    %1890 = vmatprep.subr.mxu0 %v1230
    %1891 = vmatpush1.msra.mxu0 %v1229
    %1892 = vmatprep.subr.mxu0 %v1233
    %1893 = vmatpush1.msra.mxu0 %v1232
    %1894 = vmatprep.subr.mxu0 %v1236
    %1895 = vmatpush1.msra.mxu0 %v1235
    %1896 = vmatprep.subr.mxu0 %v1239
    %1897 = vmatpush1.msra.mxu0 %v1238
    %1898 = vmatprep.subr.mxu0 %v1242
    %1899 = vmatpush1.msra.mxu0 %v1241
    %1900 = vmatprep.subr.mxu0 %v1245
    %1901 = vmatpush1.msra.mxu0 %v1244
    %1902 = vmatprep.subr.mxu0 %v1248
    %1903 = vmatpush1.msra.mxu0 %v1247
    %1904 = vmatprep.subr.mxu0 0.0
    %1905 = vmatpush1.msra.mxu0 0.0
    %1906 = vmatprep.subr.mxu0 0.0
    %1907 = vmatpush1.msra.mxu0 0.0
    %1908 = vmatprep.subr.mxu0 0.0
    %1909 = vmatpush1.msra.mxu0 0.0
    %1910 = vmatprep.subr.mxu0 0.0
    %1911 = vmatpush1.msra.mxu0 0.0
    %1912 = vmatprep.subr.mxu0 0.0
    %1913 = vmatpush1.msra.mxu0 0.0
    %1914 = vmatprep.subr.mxu0 0.0
    %1915 = vmatpush1.msra.mxu0 0.0
    %1916 = vmatprep.mubr.f32.mxu0 %v1840
    %1917 = vmatmul.mubr.f32.gmra.mrb[0].mxu0 %v1742
    %v1918 = vpop.f32.mrb[0].mxu0
    %v1919 = vadd.f32 %v1597, %v1918
    %v1920 = vpop.f32.mrb[0].mxu0
    %v1921 = vadd.f32 %v1599, %v1920
    %1922 = vmatprep.mubr.f32.mxu0 %v1842
    %1923 = vmatmul.mubr.f32.gmra.mrb[0].mxu0 %v1760
    %v1924 = vpop.f32.mrb[0].mxu0
    %v1925 = vadd.f32 %v1603, %v1924
    %v1926 = vpop.f32.mrb[0].mxu0
    %v1927 = vadd.f32 %v1605, %v1926
    %1928 = vmatprep.mubr.f32.mxu0 %v1844
    %1929 = vmatmul.mubr.f32.gmra.mrb[0].mxu0 %v1778
    %v1930 = vpop.f32.mrb[0].mxu0
    %v1931 = vadd.f32 %v1609, %v1930
    %v1932 = vpop.f32.mrb[0].mxu0
    %v1933 = vadd.f32 %v1611, %v1932
    %1934 = vmatprep.mubr.f32.mxu0 %v1846
    %1935 = vmatmul.mubr.f32.gmra.mrb[0].mxu0 %v1796
    %v1936 = vpop.f32.mrb[0].mxu0
    %v1937 = vadd.f32 %v1615, %v1936
    %v1938 = vpop.f32.mrb[0].mxu0
    %v1939 = vadd.f32 %v1617, %v1938
    %1940 = vmatprep.mubr.f32.mxu0 %v1848
    %1941 = vmatmul.mubr.f32.gmra.mrb[0].mxu0 %v1814
    %v1942 = vpop.f32.mrb[0].mxu0
    %v1943 = vadd.f32 %v1621, %v1942
    %v1944 = vpop.f32.mrb[0].mxu0
    %v1945 = vadd.f32 %v1623, %v1944
    %1946 = vmatprep.mubr.f32.mxu0 %v1850
    %1947 = vmatmul.mubr.f32.gmra.mrb[0].mxu0 %v1832
    %v1948 = vpop.f32.mrb[0].mxu0
    %v1949 = vadd.f32 %v1627, %v1948
    %v1950 = vpop.f32.mrb[0].mxu0
    %v1951 = vadd.f32 %v1629, %v1950
    %1952 = vdwg.mxu0
    %1953 = vmatprep.subr.mxu0 0.0
    %1954 = vmatpush1.msra.mxu0 %v1174
    %1955 = vmatprep.subr.mxu0 0.0
    %1956 = vmatpush1.msra.mxu0 %v1177
    %1957 = vmatprep.subr.mxu0 0.0
    %1958 = vmatpush1.msra.mxu0 %v1180
    %1959 = vmatprep.subr.mxu0 0.0
    %1960 = vmatpush1.msra.mxu0 %v1183
    %1961 = vmatprep.subr.mxu0 0.0
    %1962 = vmatpush1.msra.mxu0 %v1186
    %1963 = vmatprep.subr.mxu0 0.0
    %1964 = vmatpush1.msra.mxu0 %v1189
    %1965 = vmatprep.subr.mxu0 0.0
    %1966 = vmatpush1.msra.mxu0 %v1192
    %1967 = vmatprep.subr.mxu0 0.0
    %1968 = vmatpush1.msra.mxu0 %v1195
    %1969 = vmatprep.subr.mxu0 0.0
    %1970 = vmatpush1.msra.mxu0 %v1198
    %1971 = vmatprep.subr.mxu0 0.0
    %1972 = vmatpush1.msra.mxu0 %v1201
    %1973 = vmatprep.subr.mxu0 0.0
    %1974 = vmatpush1.msra.mxu0 %v1204
    %1975 = vmatprep.subr.mxu0 0.0
    %1976 = vmatpush1.msra.mxu0 %v1207
    %1977 = vmatprep.subr.mxu0 0.0
    %1978 = vmatpush1.msra.mxu0 %v1210
    %1979 = vmatprep.subr.mxu0 0.0
    %1980 = vmatpush1.msra.mxu0 %v1213
    %1981 = vmatprep.subr.mxu0 0.0
    %1982 = vmatpush1.msra.mxu0 %v1216
    %1983 = vmatprep.subr.mxu0 0.0
    %1984 = vmatpush1.msra.mxu0 %v1219
    %1985 = vmatprep.subr.mxu0 0.0
    %1986 = vmatpush1.msra.mxu0 %v1222
    %1987 = vmatprep.subr.mxu0 0.0
    %1988 = vmatpush1.msra.mxu0 %v1225
    %1989 = vmatprep.subr.mxu0 0.0
    %1990 = vmatpush1.msra.mxu0 %v1228
    %1991 = vmatprep.subr.mxu0 0.0
    %1992 = vmatpush1.msra.mxu0 %v1231
    %1993 = vmatprep.subr.mxu0 0.0
    %1994 = vmatpush1.msra.mxu0 %v1234
    %1995 = vmatprep.subr.mxu0 0.0
    %1996 = vmatpush1.msra.mxu0 %v1237
    %1997 = vmatprep.subr.mxu0 0.0
    %1998 = vmatpush1.msra.mxu0 %v1240
    %1999 = vmatprep.subr.mxu0 0.0
    %2000 = vmatpush1.msra.mxu0 %v1243
    %2001 = vmatprep.subr.mxu0 0.0
    %2002 = vmatpush1.msra.mxu0 %v1246
    %2003 = vmatprep.subr.mxu0 0.0
    %2004 = vmatpush1.msra.mxu0 %v1249
    %2005 = vmatprep.subr.mxu0 0.0
    %2006 = vmatpush1.msra.mxu0 0.0
    %2007 = vmatprep.subr.mxu0 0.0
    %2008 = vmatpush1.msra.mxu0 0.0
    %2009 = vmatprep.subr.mxu0 0.0
    %2010 = vmatpush1.msra.mxu0 0.0
    %2011 = vmatprep.subr.mxu0 0.0
    %2012 = vmatpush1.msra.mxu0 0.0
    %2013 = vmatprep.subr.mxu0 0.0
    %2014 = vmatpush1.msra.mxu0 0.0
    %2015 = vmatprep.subr.mxu0 0.0
    %2016 = vmatpush1.msra.mxu0 0.0
    %2017 = vmatprep.mubr.f32.mxu0 %v1840
    %2018 = vmatmul.mubr.f32.gmra.mrb[0].mxu0 %v1742
    %v2019 = vpop.f32.mrb[0].mxu0
    %v2020 = vadd.f32 %v1698, %v2019
    %v2021 = vpop.f32.mrb[0].mxu0
    %2022 = vmatprep.mubr.f32.mxu0 %v1842
    %2023 = vmatmul.mubr.f32.gmra.mrb[0].mxu0 %v1760
    %v2024 = vpop.f32.mrb[0].mxu0
    %v2025 = vadd.f32 %v1703, %v2024
    %v2026 = vpop.f32.mrb[0].mxu0
    %2027 = vmatprep.mubr.f32.mxu0 %v1844
    %2028 = vmatmul.mubr.f32.gmra.mrb[0].mxu0 %v1778
    %v2029 = vpop.f32.mrb[0].mxu0
    %v2030 = vadd.f32 %v1708, %v2029
    %v2031 = vpop.f32.mrb[0].mxu0
    %2032 = vmatprep.mubr.f32.mxu0 %v1846
    %2033 = vmatmul.mubr.f32.gmra.mrb[0].mxu0 %v1796
    %v2034 = vpop.f32.mrb[0].mxu0
    %v2035 = vadd.f32 %v1713, %v2034
    %v2036 = vpop.f32.mrb[0].mxu0
    %2037 = vmatprep.mubr.f32.mxu0 %v1848
    %2038 = vmatmul.mubr.f32.gmra.mrb[0].mxu0 %v1814
    %v2039 = vpop.f32.mrb[0].mxu0
    %v2040 = vadd.f32 %v1718, %v2039
    %v2041 = vpop.f32.mrb[0].mxu0
    %2042 = vmatprep.mubr.f32.mxu0 %v1850
    %2043 = vmatmul.mubr.f32.gmra.mrb[0].mxu0 %v1832
    %v2044 = vpop.f32.mrb[0].mxu0
    %v2045 = vadd.f32 %v1723, %v2044
    %v2046 = vpop.f32.mrb[0].mxu0
    %2047 = vdwg.mxu0
    %s2048 = scalar_lea.vmem %s3, 1248
    %v2049 = vld [vmem:[%s2048] sm:$0xff]
    %v2050 = vld [vmem:[%s2048 + $0x8] sm:$0xff]
    %v2051 = vld [vmem:[%s2048 + $0x10] sm:$0xff]
    %v2052 = vld [vmem:[%s2048 + $0x18] sm:$0xff]
    %v2053 = vld [vmem:[%s2048 + $0x20] sm:$0xff]
    %v2054 = vld [vmem:[%s2048 + $0x28] sm:$0xff]
    %v2055 = vld [vmem:[%s2048 + $0x30] sm:$0xff]
    %v2056 = vld [vmem:[%s2048 + $0x38] sm:$0xff]
    %v2057 = vld [vmem:[%s2048 + $0x40] sm:$0xff]
    %v2058 = vld [vmem:[%s2048 + $0x48] sm:$0xff]
    %v2059 = vld [vmem:[%s2048 + $0x50] sm:$0xff]
    %v2060 = vld [vmem:[%s2048 + $0x58] sm:$0xff]
    %v2061 = vld [vmem:[%s2048 + $0x60] sm:$0xff]
    %v2062 = vld [vmem:[%s2048 + $0x68] sm:$0xff]
    %v2063 = vld [vmem:[%s2048 + $0x70] sm:$0xff]
    %v2064 = vld [vmem:[%s2048 + $0x78] sm:$0xff]
    %v2065 = vld [vmem:[%s2048 + $0x80] sm:$0xff]
    %v2066 = vld [vmem:[%s2048 + $0x88] sm:$0xff]
    %v2067 = vld [vmem:[%s2048 + $0x90] sm:$0xff]
    %v2068 = vld [vmem:[%s2048 + $0x98] sm:$0xff]
    %v2069 = vld [vmem:[%s2048 + $0xa0] sm:$0xff]
    %v2070 = vld [vmem:[%s2048 + $0xa8] sm:$0xff]
    %v2071 = vld [vmem:[%s2048 + $0xb0] sm:$0xff]
    %v2072 = vld [vmem:[%s2048 + $0xb8] sm:$0xff]
    %v2073 = vld [vmem:[%s2048 + $0xc0] sm:$0xff]
    %v2074 = vld [vmem:[%s2048 + $0xc8] sm:$0xff]
    %v2075 = vld [vmem:[%s2048 + $0xd0] sm:$0xff]
    %v2076 = vld [vmem:[%s2048 + $0xd8] sm:$0xff]
    %v2077 = vld [vmem:[%s2048 + $0xe0] sm:$0xff]
    %v2078 = vld [vmem:[%s2048 + $0xe8] sm:$0xff]
    %v2079 = vld [vmem:[%s2048 + $0xf0] sm:$0xff]
    %v2080 = vld [vmem:[%s2048 + $0xf8] sm:$0xff]
    %v2081 = vld [vmem:[%s2048 + $0x100] sm:$0xff]
    %v2082 = vld [vmem:[%s2048 + $0x108] sm:$0xff]
    %v2083 = vld [vmem:[%s2048 + $0x110] sm:$0xff]
    %v2084 = vld [vmem:[%s2048 + $0x118] sm:$0xff]
    %v2085 = vld [vmem:[%s2048 + $0x120] sm:$0xff]
    %v2086 = vld [vmem:[%s2048 + $0x128] sm:$0xff]
    %v2087 = vld [vmem:[%s2048 + $0x130] sm:$0xff]
    %v2088 = vld [vmem:[%s2048 + $0x138] sm:$0xff]
    %v2089 = vld [vmem:[%s2048 + $0x140] sm:$0xff]
    %v2090 = vld [vmem:[%s2048 + $0x148] sm:$0xff]
    %v2091 = vld [vmem:[%s2048 + $0x150] sm:$0xff]
    %v2092 = vld [vmem:[%s2048 + $0x158] sm:$0xff]
    %v2093 = vld [vmem:[%s2048 + $0x160] sm:$0xff]
    %v2094 = vld [vmem:[%s2048 + $0x168] sm:$0xff]
    %v2095 = vld [vmem:[%s2048 + $0x170] sm:$0xff]
    %v2096 = vld [vmem:[%s2048 + $0x178] sm:$0xff]
    %v2097 = vld [vmem:[%s2048 + $0x180] sm:$0xff]
    %v2098 = vld [vmem:[%s2048 + $0x188] sm:$0xff]
    %v2099 = vld [vmem:[%s2048 + $0x190] sm:$0xff]
    %v2100 = vld [vmem:[%s2048 + $0x198] sm:$0xff]
    %v2101 = vld [vmem:[%s2048 + $0x1a0] sm:$0xff]
    %v2102 = vld [vmem:[%s2048 + $0x1a8] sm:$0xff]
    %v2103 = vld [vmem:[%s2048 + $0x1b0] sm:$0xff]
    %v2104 = vld [vmem:[%s2048 + $0x1b8] sm:$0xff]
    %v2105 = vld [vmem:[%s2048 + $0x1c0] sm:$0xff]
    %v2106 = vld [vmem:[%s2048 + $0x1c8] sm:$0xff]
    %v2107 = vld [vmem:[%s2048 + $0x1d0] sm:$0xff]
    %v2108 = vld [vmem:[%s2048 + $0x1d8] sm:$0xff]
    %v2109 = vld [vmem:[%s2048 + $0x1e0] sm:$0xff]
    %v2110 = vld [vmem:[%s2048 + $0x1e8] sm:$0xff]
    %v2111 = vld [vmem:[%s2048 + $0x1f0] sm:$0xff]
    %v2112 = vld [vmem:[%s2048 + $0x1f8] sm:$0xff]
    %v2113 = vld [vmem:[%s2048 + $0x200] sm:$0xff]
    %v2114 = vld [vmem:[%s2048 + $0x208] sm:$0xff]
    %v2115 = vld [vmem:[%s2048 + $0x210] sm:$0xff]
    %v2116 = vld [vmem:[%s2048 + $0x218] sm:$0xff]
    %v2117 = vld [vmem:[%s2048 + $0x220] sm:$0xff]
    %v2118 = vld [vmem:[%s2048 + $0x228] sm:$0xff]
    %v2119 = vld [vmem:[%s2048 + $0x230] sm:$0xff]
    %v2120 = vld [vmem:[%s2048 + $0x238] sm:$0xff]
    %v2121 = vld [vmem:[%s2048 + $0x240] sm:$0xff]
    %v2122 = vld [vmem:[%s2048 + $0x248] sm:$0xff]
    %v2123 = vld [vmem:[%s2048 + $0x250] sm:$0xff]
    %v2124 = vld [vmem:[%s2048 + $0x258] sm:$0xff]
    %v2125 = vld [vmem:[%s2048 + $0x260] sm:$0xff]
    %v2126 = vld [vmem:[%s2048 + $0x268] sm:$0xff]
    %v2127 = vcombine.low %v1071, %v1070
    %v2128 = vcombine.low %v1072, %v1081
    %v2130 = vunpack.c.l.s4 1983009808
    %v2131 = vunpack.c.0.s8 %v2130
    %v2132 = vlaneseq
    %v2133 = vshrl.u32 %v2132, 7
    %v2134 = vsub.s32 %v2131, %v2133
    %v2135 = vrot.slane %v2127, %v2134
    %v2137 = vunpack.c.l.s4 1983009808
    %v2138 = vunpack.c.0.s8 %v2137
    %v2139 = vlaneseq
    %v2140 = vshrl.u32 %v2139, 7
    %v2141 = vsub.s32 %v2138, %v2140
    %v2142 = vrot.slane %v2128, %v2141
    %v2143 = vcombine.low %v2135, %v2142
    %v2144 = vcombine.high %v2135, %v2142
    %v2145 = vcombine.low %v1089, %v1088
    %v2146 = vcombine.low %v1090, %v1099
    %v2148 = vunpack.c.l.s4 1983009808
    %v2149 = vunpack.c.0.s8 %v2148
    %v2150 = vlaneseq
    %v2151 = vshrl.u32 %v2150, 7
    %v2152 = vsub.s32 %v2149, %v2151
    %v2153 = vrot.slane %v2145, %v2152
    %v2155 = vunpack.c.l.s4 1983009808
    %v2156 = vunpack.c.0.s8 %v2155
    %v2157 = vlaneseq
    %v2158 = vshrl.u32 %v2157, 7
    %v2159 = vsub.s32 %v2156, %v2158
    %v2160 = vrot.slane %v2146, %v2159
    %v2161 = vcombine.low %v2153, %v2160
    %v2162 = vcombine.high %v2153, %v2160
    %v2163 = vcombine.low %v1107, %v1106
    %v2164 = vcombine.low %v1108, %v1117
    %v2166 = vunpack.c.l.s4 1983009808
    %v2167 = vunpack.c.0.s8 %v2166
    %v2168 = vlaneseq
    %v2169 = vshrl.u32 %v2168, 7
    %v2170 = vsub.s32 %v2167, %v2169
    %v2171 = vrot.slane %v2163, %v2170
    %v2173 = vunpack.c.l.s4 1983009808
    %v2174 = vunpack.c.0.s8 %v2173
    %v2175 = vlaneseq
    %v2176 = vshrl.u32 %v2175, 7
    %v2177 = vsub.s32 %v2174, %v2176
    %v2178 = vrot.slane %v2164, %v2177
    %v2179 = vcombine.low %v2171, %v2178
    %v2180 = vcombine.high %v2171, %v2178
    %v2181 = vcombine.low %v1124, %v1126
    %v2182 = vcombine.low %v1135, %v1143
    %v2184 = vunpack.c.l.s4 1983009808
    %v2185 = vunpack.c.0.s8 %v2184
    %v2186 = vlaneseq
    %v2187 = vshrl.u32 %v2186, 7
    %v2188 = vsub.s32 %v2185, %v2187
    %v2189 = vrot.slane %v2181, %v2188
    %v2191 = vunpack.c.l.s4 1983009808
    %v2192 = vunpack.c.0.s8 %v2191
    %v2193 = vlaneseq
    %v2194 = vshrl.u32 %v2193, 7
    %v2195 = vsub.s32 %v2192, %v2194
    %v2196 = vrot.slane %v2182, %v2195
    %v2197 = vcombine.low %v2189, %v2196
    %v2198 = vcombine.high %v2189, %v2196
    %v2199 = vcombine.low %v1142, %v1144
    %v2200 = vcombine.low %v1153, %v1161
    %v2202 = vunpack.c.l.s4 1983009808
    %v2203 = vunpack.c.0.s8 %v2202
    %v2204 = vlaneseq
    %v2205 = vshrl.u32 %v2204, 7
    %v2206 = vsub.s32 %v2203, %v2205
    %v2207 = vrot.slane %v2199, %v2206
    %v2209 = vunpack.c.l.s4 1983009808
    %v2210 = vunpack.c.0.s8 %v2209
    %v2211 = vlaneseq
    %v2212 = vshrl.u32 %v2211, 7
    %v2213 = vsub.s32 %v2210, %v2212
    %v2214 = vrot.slane %v2200, %v2213
    %v2215 = vcombine.low %v2207, %v2214
    %v2216 = vcombine.high %v2207, %v2214
    %v2217 = vcombine.low %v1160, %v1162
    %v2218 = vcombine.low %v1170, %v1171
    %v2220 = vunpack.c.l.s4 1983009808
    %v2221 = vunpack.c.0.s8 %v2220
    %v2222 = vlaneseq
    %v2223 = vshrl.u32 %v2222, 7
    %v2224 = vsub.s32 %v2221, %v2223
    %v2225 = vrot.slane %v2217, %v2224
    %v2227 = vunpack.c.l.s4 1983009808
    %v2228 = vunpack.c.0.s8 %v2227
    %v2229 = vlaneseq
    %v2230 = vshrl.u32 %v2229, 7
    %v2231 = vsub.s32 %v2228, %v2230
    %v2232 = vrot.slane %v2218, %v2231
    %v2233 = vcombine.low %v2225, %v2232
    %v2234 = vcombine.high %v2225, %v2232
    %v2241 = vsel %vm1517, %v2144, 0
    %v2243 = vsel %vm1517, %v2162, 0
    %v2245 = vsel %vm1517, %v2180, 0
    %v2247 = vsel %vm1517, %v2198, 0
    %v2249 = vsel %vm1517, %v2216, 0
    %v2251 = vsel %vm1517, %v2234, 0
    %2253 = vmatprep.subr.mxu0 %v2050
    %2254 = vmatpush1.msra.mxu0 %v2049
    %2255 = vmatprep.subr.mxu0 %v2053
    %2256 = vmatpush1.msra.mxu0 %v2052
    %2257 = vmatprep.subr.mxu0 %v2056
    %2258 = vmatpush1.msra.mxu0 %v2055
    %2259 = vmatprep.subr.mxu0 %v2059
    %2260 = vmatpush1.msra.mxu0 %v2058
    %2261 = vmatprep.subr.mxu0 %v2062
    %2262 = vmatpush1.msra.mxu0 %v2061
    %2263 = vmatprep.subr.mxu0 %v2065
    %2264 = vmatpush1.msra.mxu0 %v2064
    %2265 = vmatprep.subr.mxu0 %v2068
    %2266 = vmatpush1.msra.mxu0 %v2067
    %2267 = vmatprep.subr.mxu0 %v2071
    %2268 = vmatpush1.msra.mxu0 %v2070
    %2269 = vmatprep.subr.mxu0 %v2074
    %2270 = vmatpush1.msra.mxu0 %v2073
    %2271 = vmatprep.subr.mxu0 %v2077
    %2272 = vmatpush1.msra.mxu0 %v2076
    %2273 = vmatprep.subr.mxu0 %v2080
    %2274 = vmatpush1.msra.mxu0 %v2079
    %2275 = vmatprep.subr.mxu0 %v2083
    %2276 = vmatpush1.msra.mxu0 %v2082
    %2277 = vmatprep.subr.mxu0 %v2086
    %2278 = vmatpush1.msra.mxu0 %v2085
    %2279 = vmatprep.subr.mxu0 %v2089
    %2280 = vmatpush1.msra.mxu0 %v2088
    %2281 = vmatprep.subr.mxu0 %v2092
    %2282 = vmatpush1.msra.mxu0 %v2091
    %2283 = vmatprep.subr.mxu0 %v2095
    %2284 = vmatpush1.msra.mxu0 %v2094
    %2285 = vmatprep.subr.mxu0 %v2098
    %2286 = vmatpush1.msra.mxu0 %v2097
    %2287 = vmatprep.subr.mxu0 %v2101
    %2288 = vmatpush1.msra.mxu0 %v2100
    %2289 = vmatprep.subr.mxu0 %v2104
    %2290 = vmatpush1.msra.mxu0 %v2103
    %2291 = vmatprep.subr.mxu0 %v2107
    %2292 = vmatpush1.msra.mxu0 %v2106
    %2293 = vmatprep.subr.mxu0 %v2110
    %2294 = vmatpush1.msra.mxu0 %v2109
    %2295 = vmatprep.subr.mxu0 %v2113
    %2296 = vmatpush1.msra.mxu0 %v2112
    %2297 = vmatprep.subr.mxu0 %v2116
    %2298 = vmatpush1.msra.mxu0 %v2115
    %2299 = vmatprep.subr.mxu0 %v2119
    %2300 = vmatpush1.msra.mxu0 %v2118
    %2301 = vmatprep.subr.mxu0 %v2122
    %2302 = vmatpush1.msra.mxu0 %v2121
    %2303 = vmatprep.subr.mxu0 %v2125
    %2304 = vmatpush1.msra.mxu0 %v2124
    %2305 = vmatprep.subr.mxu0 0.0
    %2306 = vmatpush1.msra.mxu0 0.0
    %2307 = vmatprep.subr.mxu0 0.0
    %2308 = vmatpush1.msra.mxu0 0.0
    %2309 = vmatprep.subr.mxu0 0.0
    %2310 = vmatpush1.msra.mxu0 0.0
    %2311 = vmatprep.subr.mxu0 0.0
    %2312 = vmatpush1.msra.mxu0 0.0
    %2313 = vmatprep.subr.mxu0 0.0
    %2314 = vmatpush1.msra.mxu0 0.0
    %2315 = vmatprep.subr.mxu0 0.0
    %2316 = vmatpush1.msra.mxu0 0.0
    %2317 = vmatprep.mubr.f32.mxu0 %v2241
    %2318 = vmatmul.mubr.f32.gmra.mrb[0].mxu0 %v2143
    %v2319 = vpop.f32.mrb[0].mxu0
    %v2320 = vadd.f32 0.0, %v2319
    %v2321 = vpop.f32.mrb[0].mxu0
    %v2322 = vadd.f32 0.0, %v2321
    %2323 = vmatprep.mubr.f32.mxu0 %v2243
    %2324 = vmatmul.mubr.f32.gmra.mrb[0].mxu0 %v2161
    %v2325 = vpop.f32.mrb[0].mxu0
    %v2326 = vadd.f32 0.0, %v2325
    %v2327 = vpop.f32.mrb[0].mxu0
    %v2328 = vadd.f32 0.0, %v2327
    %2329 = vmatprep.mubr.f32.mxu0 %v2245
    %2330 = vmatmul.mubr.f32.gmra.mrb[0].mxu0 %v2179
    %v2331 = vpop.f32.mrb[0].mxu0
    %v2332 = vadd.f32 0.0, %v2331
    %v2333 = vpop.f32.mrb[0].mxu0
    %v2334 = vadd.f32 0.0, %v2333
    %2335 = vmatprep.mubr.f32.mxu0 %v2247
    %2336 = vmatmul.mubr.f32.gmra.mrb[0].mxu0 %v2197
    %v2337 = vpop.f32.mrb[0].mxu0
    %v2338 = vadd.f32 0.0, %v2337
    %v2339 = vpop.f32.mrb[0].mxu0
    %v2340 = vadd.f32 0.0, %v2339
    %2341 = vmatprep.mubr.f32.mxu0 %v2249
    %2342 = vmatmul.mubr.f32.gmra.mrb[0].mxu0 %v2215
    %v2343 = vpop.f32.mrb[0].mxu0
    %v2344 = vadd.f32 0.0, %v2343
    %v2345 = vpop.f32.mrb[0].mxu0
    %v2346 = vadd.f32 0.0, %v2345
    %2347 = vmatprep.mubr.f32.mxu0 %v2251
    %2348 = vmatmul.mubr.f32.gmra.mrb[0].mxu0 %v2233
    %v2349 = vpop.f32.mrb[0].mxu0
    %v2350 = vadd.f32 0.0, %v2349
    %v2351 = vpop.f32.mrb[0].mxu0
    %v2352 = vadd.f32 0.0, %v2351
    %2353 = vdwg.mxu0
    %2354 = vmatprep.subr.mxu0 0.0
    %2355 = vmatpush1.msra.mxu0 %v2051
    %2356 = vmatprep.subr.mxu0 0.0
    %2357 = vmatpush1.msra.mxu0 %v2054
    %2358 = vmatprep.subr.mxu0 0.0
    %2359 = vmatpush1.msra.mxu0 %v2057
    %2360 = vmatprep.subr.mxu0 0.0
    %2361 = vmatpush1.msra.mxu0 %v2060
    %2362 = vmatprep.subr.mxu0 0.0
    %2363 = vmatpush1.msra.mxu0 %v2063
    %2364 = vmatprep.subr.mxu0 0.0
    %2365 = vmatpush1.msra.mxu0 %v2066
    %2366 = vmatprep.subr.mxu0 0.0
    %2367 = vmatpush1.msra.mxu0 %v2069
    %2368 = vmatprep.subr.mxu0 0.0
    %2369 = vmatpush1.msra.mxu0 %v2072
    %2370 = vmatprep.subr.mxu0 0.0
    %2371 = vmatpush1.msra.mxu0 %v2075
    %2372 = vmatprep.subr.mxu0 0.0
    %2373 = vmatpush1.msra.mxu0 %v2078
    %2374 = vmatprep.subr.mxu0 0.0
    %2375 = vmatpush1.msra.mxu0 %v2081
    %2376 = vmatprep.subr.mxu0 0.0
    %2377 = vmatpush1.msra.mxu0 %v2084
    %2378 = vmatprep.subr.mxu0 0.0
    %2379 = vmatpush1.msra.mxu0 %v2087
    %2380 = vmatprep.subr.mxu0 0.0
    %2381 = vmatpush1.msra.mxu0 %v2090
    %2382 = vmatprep.subr.mxu0 0.0
    %2383 = vmatpush1.msra.mxu0 %v2093
    %2384 = vmatprep.subr.mxu0 0.0
    %2385 = vmatpush1.msra.mxu0 %v2096
    %2386 = vmatprep.subr.mxu0 0.0
    %2387 = vmatpush1.msra.mxu0 %v2099
    %2388 = vmatprep.subr.mxu0 0.0
    %2389 = vmatpush1.msra.mxu0 %v2102
    %2390 = vmatprep.subr.mxu0 0.0
    %2391 = vmatpush1.msra.mxu0 %v2105
    %2392 = vmatprep.subr.mxu0 0.0
    %2393 = vmatpush1.msra.mxu0 %v2108
    %2394 = vmatprep.subr.mxu0 0.0
    %2395 = vmatpush1.msra.mxu0 %v2111
    %2396 = vmatprep.subr.mxu0 0.0
    %2397 = vmatpush1.msra.mxu0 %v2114
    %2398 = vmatprep.subr.mxu0 0.0
    %2399 = vmatpush1.msra.mxu0 %v2117
    %2400 = vmatprep.subr.mxu0 0.0
    %2401 = vmatpush1.msra.mxu0 %v2120
    %2402 = vmatprep.subr.mxu0 0.0
    %2403 = vmatpush1.msra.mxu0 %v2123
    %2404 = vmatprep.subr.mxu0 0.0
    %2405 = vmatpush1.msra.mxu0 %v2126
    %2406 = vmatprep.subr.mxu0 0.0
    %2407 = vmatpush1.msra.mxu0 0.0
    %2408 = vmatprep.subr.mxu0 0.0
    %2409 = vmatpush1.msra.mxu0 0.0
    %2410 = vmatprep.subr.mxu0 0.0
    %2411 = vmatpush1.msra.mxu0 0.0
    %2412 = vmatprep.subr.mxu0 0.0
    %2413 = vmatpush1.msra.mxu0 0.0
    %2414 = vmatprep.subr.mxu0 0.0
    %2415 = vmatpush1.msra.mxu0 0.0
    %2416 = vmatprep.subr.mxu0 0.0
    %2417 = vmatpush1.msra.mxu0 0.0
    %2418 = vmatprep.mubr.f32.mxu0 %v2241
    %2419 = vmatmul.mubr.f32.gmra.mrb[0].mxu0 %v2143
    %v2420 = vpop.f32.mrb[0].mxu0
    %v2421 = vadd.f32 0.0, %v2420
    %v2422 = vpop.f32.mrb[0].mxu0
    %2423 = vmatprep.mubr.f32.mxu0 %v2243
    %2424 = vmatmul.mubr.f32.gmra.mrb[0].mxu0 %v2161
    %v2425 = vpop.f32.mrb[0].mxu0
    %v2426 = vadd.f32 0.0, %v2425
    %v2427 = vpop.f32.mrb[0].mxu0
    %2428 = vmatprep.mubr.f32.mxu0 %v2245
    %2429 = vmatmul.mubr.f32.gmra.mrb[0].mxu0 %v2179
    %v2430 = vpop.f32.mrb[0].mxu0
    %v2431 = vadd.f32 0.0, %v2430
    %v2432 = vpop.f32.mrb[0].mxu0
    %2433 = vmatprep.mubr.f32.mxu0 %v2247
    %2434 = vmatmul.mubr.f32.gmra.mrb[0].mxu0 %v2197
    %v2435 = vpop.f32.mrb[0].mxu0
    %v2436 = vadd.f32 0.0, %v2435
    %v2437 = vpop.f32.mrb[0].mxu0
    %2438 = vmatprep.mubr.f32.mxu0 %v2249
    %2439 = vmatmul.mubr.f32.gmra.mrb[0].mxu0 %v2215
    %v2440 = vpop.f32.mrb[0].mxu0
    %v2441 = vadd.f32 0.0, %v2440
    %v2442 = vpop.f32.mrb[0].mxu0
    %2443 = vmatprep.mubr.f32.mxu0 %v2251
    %2444 = vmatmul.mubr.f32.gmra.mrb[0].mxu0 %v2233
    %v2445 = vpop.f32.mrb[0].mxu0
    %v2446 = vadd.f32 0.0, %v2445
    %v2447 = vpop.f32.mrb[0].mxu0
    %2448 = vdwg.mxu0
    %v2449 = vadd.f32 %v1919, %v2320
    %v2450 = vadd.f32 %v1921, %v2322
    %v2451 = vadd.f32 %v2020, %v2421
    %v2452 = vadd.f32 %v1925, %v2326
    %v2453 = vadd.f32 %v1927, %v2328
    %v2454 = vadd.f32 %v2025, %v2426
    %v2455 = vadd.f32 %v1931, %v2332
    %v2456 = vadd.f32 %v1933, %v2334
    %v2457 = vadd.f32 %v2030, %v2431
    %v2458 = vadd.f32 %v1937, %v2338
    %v2459 = vadd.f32 %v1939, %v2340
    %v2460 = vadd.f32 %v2035, %v2436
    %v2461 = vadd.f32 %v1943, %v2344
    %v2462 = vadd.f32 %v1945, %v2346
    %v2463 = vadd.f32 %v2040, %v2441
    %v2464 = vadd.f32 %v1949, %v2350
    %v2465 = vadd.f32 %v1951, %v2352
    %v2466 = vadd.f32 %v2045, %v2446
    %v2467 = vld [vmem:[%s4] sm:$0x7]
    %v2469 = vlaneseq
    %v2470 = vshrl.u32 %v2469, 7
    %v2471 = vsub.s32 0, %v2470
    %v2472 = vrot.slane %v2467, %v2471
    %v2473 = vlaneseq
    %v2474 = vshrl.u32 %v2473, 7
    %v2475 = vsub.s32 1, %v2474
    %v2476 = vrot.slane %v2467, %v2475
    %v2477 = vlaneseq
    %v2478 = vshrl.u32 %v2477, 7
    %v2479 = vsub.s32 2, %v2478
    %v2480 = vrot.slane %v2467, %v2479
    %v2484 = vadd.f32 %v2449, %v2472
    %v2485 = vadd.f32 %v2450, %v2476
    %v2486 = vadd.f32 %v2451, %v2480
    %v2487 = vadd.f32 %v2452, %v2472
    %v2488 = vadd.f32 %v2453, %v2476
    %v2489 = vadd.f32 %v2454, %v2480
    %v2490 = vadd.f32 %v2455, %v2472
    %v2491 = vadd.f32 %v2456, %v2476
    %v2492 = vadd.f32 %v2457, %v2480
    %v2493 = vadd.f32 %v2458, %v2472
    %v2494 = vadd.f32 %v2459, %v2476
    %v2495 = vadd.f32 %v2460, %v2480
    %v2496 = vadd.f32 %v2461, %v2472
    %v2497 = vadd.f32 %v2462, %v2476
    %v2498 = vadd.f32 %v2463, %v2480
    %v2499 = vadd.f32 %v2464, %v2472
    %v2500 = vadd.f32 %v2465, %v2476
    %v2501 = vadd.f32 %v2466, %v2480
    %v2502 = vmax.f32 %v2484, 0.0
    %v2503 = vmax.f32 %v2485, 0.0
    %v2504 = vmax.f32 %v2486, 0.0
    %v2505 = vmax.f32 %v2487, 0.0
    %v2506 = vmax.f32 %v2488, 0.0
    %v2507 = vmax.f32 %v2489, 0.0
    %v2508 = vmax.f32 %v2490, 0.0
    %v2509 = vmax.f32 %v2491, 0.0
    %v2510 = vmax.f32 %v2492, 0.0
    %v2511 = vmax.f32 %v2493, 0.0
    %v2512 = vmax.f32 %v2494, 0.0
    %v2513 = vmax.f32 %v2495, 0.0
    %v2514 = vmax.f32 %v2496, 0.0
    %v2515 = vmax.f32 %v2497, 0.0
    %v2516 = vmax.f32 %v2498, 0.0
    %v2517 = vmax.f32 %v2499, 0.0
    %v2518 = vmax.f32 %v2500, 0.0
    %v2519 = vmax.f32 %v2501, 0.0
    %vm2538 = vcmask 1046528
    %v2539 = vrot.slane %v2502, 1
    %v2540 = vrot.slane %v2505, 1
    %v2541 = vsel %vm2538, %v2539, %v2540
    %v2542 = vrot.slane %v2503, 1
    %v2543 = vrot.slane %v2506, 1
    %v2544 = vsel %vm2538, %v2542, %v2543
    %v2545 = vrot.slane %v2504, 1
    %v2546 = vrot.slane %v2507, 1
    %v2547 = vsel %vm2538, %v2545, %v2546
    %v2548 = vrot.slane %v2508, 1
    %v2549 = vsel %vm2538, %v2540, %v2548
    %v2550 = vrot.slane %v2509, 1
    %v2551 = vsel %vm2538, %v2543, %v2550
    %v2552 = vrot.slane %v2510, 1
    %v2553 = vsel %vm2538, %v2546, %v2552
    %v2554 = vrot.slane %v2511, 1
    %v2555 = vrot.slane %v2514, 1
    %v2556 = vsel %vm2538, %v2554, %v2555
    %v2557 = vrot.slane %v2512, 1
    %v2558 = vrot.slane %v2515, 1
    %v2559 = vsel %vm2538, %v2557, %v2558
    %v2560 = vrot.slane %v2513, 1
    %v2561 = vrot.slane %v2516, 1
    %v2562 = vsel %vm2538, %v2560, %v2561
    %v2563 = vrot.slane %v2517, 1
    %v2564 = vsel %vm2538, %v2555, %v2563
    %v2565 = vrot.slane %v2518, 1
    %v2566 = vsel %vm2538, %v2558, %v2565
    %v2567 = vrot.slane %v2519, 1
    %v2568 = vsel %vm2538, %v2561, %v2567
    %v2587 = vmax.f32 %v2502, %v2541
    %v2588 = vmax.f32 %v2503, %v2544
    %v2589 = vmax.f32 %v2504, %v2547
    %v2590 = vmax.f32 %v2505, %v2549
    %v2591 = vmax.f32 %v2506, %v2551
    %v2592 = vmax.f32 %v2507, %v2553
    %v2593 = vmax.f32 %v2508, %v2548
    %v2594 = vmax.f32 %v2509, %v2550
    %v2595 = vmax.f32 %v2510, %v2552
    %v2596 = vmax.f32 %v2511, %v2556
    %v2597 = vmax.f32 %v2512, %v2559
    %v2598 = vmax.f32 %v2513, %v2562
    %v2599 = vmax.f32 %v2514, %v2564
    %v2600 = vmax.f32 %v2515, %v2566
    %v2601 = vmax.f32 %v2516, %v2568
    %v2602 = vmax.f32 %v2517, %v2563
    %v2603 = vmax.f32 %v2518, %v2565
    %v2604 = vmax.f32 %v2519, %v2567
    %2623 = vrot.lane.b32.xlu0 %v2587, 112
    %v2624 = vpop.permute.xlu0 %2623
    %2625 = vrot.lane.b32.xlu0 %v2588, 112
    %v2626 = vpop.permute.xlu0 %2625
    %2627 = vrot.lane.b32.xlu0 %v2589, 112
    %v2628 = vpop.permute.xlu0 %2627
    %2629 = vrot.lane.b32.xlu0 %v2590, 112
    %v2630 = vpop.permute.xlu0 %2629
    %2631 = vrot.lane.b32.xlu0 %v2591, 112
    %v2632 = vpop.permute.xlu0 %2631
    %2633 = vrot.lane.b32.xlu0 %v2592, 112
    %v2634 = vpop.permute.xlu0 %2633
    %2635 = vrot.lane.b32.xlu0 %v2593, 112
    %v2636 = vpop.permute.xlu0 %2635
    %2637 = vrot.lane.b32.xlu0 %v2594, 112
    %v2638 = vpop.permute.xlu0 %2637
    %2639 = vrot.lane.b32.xlu0 %v2595, 112
    %v2640 = vpop.permute.xlu0 %2639
    %2641 = vrot.lane.b32.xlu0 %v2596, 112
    %v2642 = vpop.permute.xlu0 %2641
    %2643 = vrot.lane.b32.xlu0 %v2597, 112
    %v2644 = vpop.permute.xlu0 %2643
    %2645 = vrot.lane.b32.xlu0 %v2598, 112
    %v2646 = vpop.permute.xlu0 %2645
    %2647 = vrot.lane.b32.xlu0 %v2599, 112
    %v2648 = vpop.permute.xlu0 %2647
    %2649 = vrot.lane.b32.xlu0 %v2600, 112
    %v2650 = vpop.permute.xlu0 %2649
    %2651 = vrot.lane.b32.xlu0 %v2601, 112
    %v2652 = vpop.permute.xlu0 %2651
    %2653 = vrot.lane.b32.xlu0 %v2602, 112
    %v2654 = vpop.permute.xlu0 %2653
    %2655 = vrot.lane.b32.xlu0 %v2603, 112
    %v2656 = vpop.permute.xlu0 %2655
    %2657 = vrot.lane.b32.xlu0 %v2604, 112
    %v2658 = vpop.permute.xlu0 %2657
    %vm2659 = vcmask 916480
    %v2660 = vsel %vm2659, %v2624, %v2626
    %v2661 = vsel %vm2659, %v2626, %v2628
    %v2662 = vsel %vm2659, %v2630, %v2632
    %v2663 = vsel %vm2659, %v2632, %v2634
    %v2664 = vsel %vm2659, %v2636, %v2638
    %v2665 = vsel %vm2659, %v2638, %v2640
    %v2666 = vsel %vm2659, %v2642, %v2644
    %v2667 = vsel %vm2659, %v2644, %v2646
    %v2668 = vsel %vm2659, %v2648, %v2650
    %v2669 = vsel %vm2659, %v2650, %v2652
    %v2670 = vsel %vm2659, %v2654, %v2656
    %v2671 = vsel %vm2659, %v2656, %v2658
    %v2690 = vmax.f32 %v2587, %v2660
    %v2691 = vmax.f32 %v2588, %v2661
    %v2692 = vmax.f32 %v2589, %v2628
    %v2693 = vmax.f32 %v2590, %v2662
    %v2694 = vmax.f32 %v2591, %v2663
    %v2695 = vmax.f32 %v2592, %v2634
    %v2696 = vmax.f32 %v2593, %v2664
    %v2697 = vmax.f32 %v2594, %v2665
    %v2698 = vmax.f32 %v2595, %v2640
    %v2699 = vmax.f32 %v2596, %v2666
    %v2700 = vmax.f32 %v2597, %v2667
    %v2701 = vmax.f32 %v2598, %v2646
    %v2702 = vmax.f32 %v2599, %v2668
    %v2703 = vmax.f32 %v2600, %v2669
    %v2704 = vmax.f32 %v2601, %v2652
    %v2705 = vmax.f32 %v2602, %v2670
    %v2706 = vmax.f32 %v2603, %v2671
    %v2707 = vmax.f32 %v2604, %v2658
    %v2708 = vld [vmem:[%s5] sm:$0xff]
    %v2709 = vld [vmem:[%s5 + $0x8] sm:$0xff]
    %v2710 = vld [vmem:[%s5 + $0x10] sm:$0xff]
    %v2711 = vld [vmem:[%s5 + $0x18] sm:$0xff]
    %v2712 = vld [vmem:[%s5 + $0x20] sm:$0xff]
    %v2713 = vld [vmem:[%s5 + $0x28] sm:$0xff]
    %v2714 = vld [vmem:[%s5 + $0x30] sm:$0xff]
    %v2715 = vld [vmem:[%s5 + $0x38] sm:$0xff]
    %v2716 = vld [vmem:[%s5 + $0x40] sm:$0xff]
    %v2717 = vld [vmem:[%s5 + $0x48] sm:$0xff]
    %v2718 = vld [vmem:[%s5 + $0x50] sm:$0xff]
    %v2719 = vld [vmem:[%s5 + $0x58] sm:$0xff]
    %v2720 = vld [vmem:[%s5 + $0x60] sm:$0xff]
    %v2721 = vld [vmem:[%s5 + $0x68] sm:$0xff]
    %v2722 = vld [vmem:[%s5 + $0x70] sm:$0xff]
    %v2723 = vld [vmem:[%s5 + $0x78] sm:$0xff]
    %v2724 = vld [vmem:[%s5 + $0x80] sm:$0xff]
    %v2725 = vld [vmem:[%s5 + $0x88] sm:$0xff]
    %v2726 = vld [vmem:[%s5 + $0x90] sm:$0xff]
    %v2727 = vld [vmem:[%s5 + $0x98] sm:$0xff]
    %v2728 = vld [vmem:[%s5 + $0xa0] sm:$0xff]
    %v2729 = vld [vmem:[%s5 + $0xa8] sm:$0xff]
    %v2730 = vld [vmem:[%s5 + $0xb0] sm:$0xff]
    %v2731 = vld [vmem:[%s5 + $0xb8] sm:$0xff]
    %v2732 = vld [vmem:[%s5 + $0xc0] sm:$0xff]
    %v2733 = vld [vmem:[%s5 + $0xc8] sm:$0xff]
    %v2734 = vld [vmem:[%s5 + $0xd0] sm:$0xff]
    %v2735 = vld [vmem:[%s5 + $0xd8] sm:$0xff]
    %v2736 = vld [vmem:[%s5 + $0xe0] sm:$0xff]
    %v2737 = vld [vmem:[%s5 + $0xe8] sm:$0xff]
    %v2738 = vld [vmem:[%s5 + $0xf0] sm:$0xff]
    %v2739 = vld [vmem:[%s5 + $0xf8] sm:$0xff]
    %v2740 = vld [vmem:[%s5 + $0x100] sm:$0xff]
    %v2741 = vld [vmem:[%s5 + $0x108] sm:$0xff]
    %v2742 = vld [vmem:[%s5 + $0x110] sm:$0xff]
    %v2743 = vld [vmem:[%s5 + $0x118] sm:$0xff]
    %v2744 = vld [vmem:[%s5 + $0x120] sm:$0xff]
    %v2745 = vld [vmem:[%s5 + $0x128] sm:$0xff]
    %v2746 = vld [vmem:[%s5 + $0x130] sm:$0xff]
    %v2747 = vld [vmem:[%s5 + $0x138] sm:$0xff]
    %v2748 = vld [vmem:[%s5 + $0x140] sm:$0xff]
    %v2749 = vld [vmem:[%s5 + $0x148] sm:$0xff]
    %v2750 = vld [vmem:[%s5 + $0x150] sm:$0xff]
    %v2751 = vld [vmem:[%s5 + $0x158] sm:$0xff]
    %v2752 = vld [vmem:[%s5 + $0x160] sm:$0xff]
    %v2753 = vld [vmem:[%s5 + $0x168] sm:$0xff]
    %s2754 = scalar_lea.vmem %s5, 368
    %v2755 = vld [vmem:[%s2754] sm:$0xff]
    %v2756 = vld [vmem:[%s2754 + $0x8] sm:$0xff]
    %v2757 = vld [vmem:[%s2754 + $0x10] sm:$0xff]
    %v2758 = vld [vmem:[%s2754 + $0x18] sm:$0xff]
    %v2759 = vld [vmem:[%s2754 + $0x20] sm:$0xff]
    %v2760 = vld [vmem:[%s2754 + $0x28] sm:$0xff]
    %v2761 = vld [vmem:[%s2754 + $0x30] sm:$0xff]
    %v2762 = vld [vmem:[%s2754 + $0x38] sm:$0xff]
    %v2763 = vld [vmem:[%s2754 + $0x40] sm:$0xff]
    %v2764 = vld [vmem:[%s2754 + $0x48] sm:$0xff]
    %v2765 = vld [vmem:[%s2754 + $0x50] sm:$0xff]
    %v2766 = vld [vmem:[%s2754 + $0x58] sm:$0xff]
    %v2767 = vld [vmem:[%s2754 + $0x60] sm:$0xff]
    %v2768 = vld [vmem:[%s2754 + $0x68] sm:$0xff]
    %v2769 = vld [vmem:[%s2754 + $0x70] sm:$0xff]
    %v2770 = vld [vmem:[%s2754 + $0x78] sm:$0xff]
    %v2771 = vld [vmem:[%s2754 + $0x80] sm:$0xff]
    %v2772 = vld [vmem:[%s2754 + $0x88] sm:$0xff]
    %v2773 = vld [vmem:[%s2754 + $0x90] sm:$0xff]
    %v2774 = vld [vmem:[%s2754 + $0x98] sm:$0xff]
    %v2775 = vld [vmem:[%s2754 + $0xa0] sm:$0xff]
    %v2776 = vld [vmem:[%s2754 + $0xa8] sm:$0xff]
    %v2777 = vld [vmem:[%s2754 + $0xb0] sm:$0xff]
    %v2778 = vld [vmem:[%s2754 + $0xb8] sm:$0xff]
    %v2779 = vld [vmem:[%s2754 + $0xc0] sm:$0xff]
    %v2780 = vld [vmem:[%s2754 + $0xc8] sm:$0xff]
    %v2781 = vld [vmem:[%s2754 + $0xd0] sm:$0xff]
    %v2782 = vld [vmem:[%s2754 + $0xd8] sm:$0xff]
    %v2783 = vld [vmem:[%s2754 + $0xe0] sm:$0xff]
    %v2784 = vld [vmem:[%s2754 + $0xe8] sm:$0xff]
    %v2785 = vld [vmem:[%s2754 + $0xf0] sm:$0xff]
    %v2786 = vld [vmem:[%s2754 + $0xf8] sm:$0xff]
    %v2787 = vld [vmem:[%s2754 + $0x100] sm:$0xff]
    %v2788 = vld [vmem:[%s2754 + $0x108] sm:$0xff]
    %v2789 = vld [vmem:[%s2754 + $0x110] sm:$0xff]
    %v2790 = vld [vmem:[%s2754 + $0x118] sm:$0xff]
    %v2791 = vld [vmem:[%s2754 + $0x120] sm:$0xff]
    %v2792 = vld [vmem:[%s2754 + $0x128] sm:$0xff]
    %v2793 = vld [vmem:[%s2754 + $0x130] sm:$0xff]
    %v2794 = vld [vmem:[%s2754 + $0x138] sm:$0xff]
    %v2795 = vld [vmem:[%s2754 + $0x140] sm:$0xff]
    %v2796 = vld [vmem:[%s2754 + $0x148] sm:$0xff]
    %v2797 = vld [vmem:[%s2754 + $0x150] sm:$0xff]
    %v2798 = vld [vmem:[%s2754 + $0x158] sm:$0xff]
    %v2799 = vld [vmem:[%s2754 + $0x160] sm:$0xff]
    %v2800 = vld [vmem:[%s2754 + $0x168] sm:$0xff]
    %v2807 = vrot.slane %v2690, 2
    %v2808 = vrot.slane %v2699, 1
    %vm2809 = vcmask 1041409
    %v2810 = vsel %vm2809, %v2808, %v2807
    %v2811 = vrot.slane %v2691, 2
    %v2812 = vrot.slane %v2700, 1
    %v2813 = vsel %vm2809, %v2812, %v2811
    %v2814 = vrot.slane %v2692, 2
    %v2815 = vrot.slane %v2701, 1
    %v2816 = vsel %vm2809, %v2815, %v2814
    %v2819 = vsel %vm2659, %v2816, 0
    %2821 = vmatprep.subr.mxu0 0.0
    %2822 = vmatpush1.msra.mxu0 %v2755
    %2823 = vmatprep.subr.mxu0 0.0
    %2824 = vmatpush1.msra.mxu0 %v2756
    %2825 = vmatprep.subr.mxu0 0.0
    %2826 = vmatpush1.msra.mxu0 %v2757
    %2827 = vmatprep.subr.mxu0 0.0
    %2828 = vmatpush1.msra.mxu0 %v2758
    %2829 = vmatprep.subr.mxu0 0.0
    %2830 = vmatpush1.msra.mxu0 %v2759
    %2831 = vmatprep.subr.mxu0 0.0
    %2832 = vmatpush1.msra.mxu0 %v2760
    %2833 = vmatprep.subr.mxu0 0.0
    %2834 = vmatpush1.msra.mxu0 %v2761
    %2835 = vmatprep.subr.mxu0 0.0
    %2836 = vmatpush1.msra.mxu0 %v2762
    %2837 = vmatprep.subr.mxu0 0.0
    %2838 = vmatpush1.msra.mxu0 %v2763
    %2839 = vmatprep.subr.mxu0 0.0
    %2840 = vmatpush1.msra.mxu0 %v2764
    %2841 = vmatprep.subr.mxu0 0.0
    %2842 = vmatpush1.msra.mxu0 %v2765
    %2843 = vmatprep.subr.mxu0 0.0
    %2844 = vmatpush1.msra.mxu0 %v2766
    %2845 = vmatprep.subr.mxu0 0.0
    %2846 = vmatpush1.msra.mxu0 %v2767
    %2847 = vmatprep.subr.mxu0 0.0
    %2848 = vmatpush1.msra.mxu0 %v2768
    %2849 = vmatprep.subr.mxu0 0.0
    %2850 = vmatpush1.msra.mxu0 %v2769
    %2851 = vmatprep.subr.mxu0 0.0
    %2852 = vmatpush1.msra.mxu0 %v2770
    %2853 = vmatprep.subr.mxu0 0.0
    %2854 = vmatpush1.msra.mxu0 %v2771
    %2855 = vmatprep.subr.mxu0 0.0
    %2856 = vmatpush1.msra.mxu0 %v2772
    %2857 = vmatprep.subr.mxu0 0.0
    %2858 = vmatpush1.msra.mxu0 %v2773
    %2859 = vmatprep.subr.mxu0 0.0
    %2860 = vmatpush1.msra.mxu0 %v2774
    %2861 = vmatprep.subr.mxu0 0.0
    %2862 = vmatpush1.msra.mxu0 %v2775
    %2863 = vmatprep.subr.mxu0 0.0
    %2864 = vmatpush1.msra.mxu0 %v2776
    %2865 = vmatprep.subr.mxu0 0.0
    %2866 = vmatpush1.msra.mxu0 %v2777
    %2867 = vmatprep.subr.mxu0 0.0
    %2868 = vmatpush1.msra.mxu0 %v2778
    %2869 = vmatprep.subr.mxu0 0.0
    %2870 = vmatpush1.msra.mxu0 %v2779
    %2871 = vmatprep.subr.mxu0 0.0
    %2872 = vmatpush1.msra.mxu0 %v2780
    %2873 = vmatprep.subr.mxu0 0.0
    %2874 = vmatpush1.msra.mxu0 %v2781
    %2875 = vmatprep.subr.mxu0 0.0
    %2876 = vmatpush1.msra.mxu0 %v2782
    %2877 = vmatprep.subr.mxu0 0.0
    %2878 = vmatpush1.msra.mxu0 %v2783
    %2879 = vmatprep.subr.mxu0 0.0
    %2880 = vmatpush1.msra.mxu0 %v2784
    %2881 = vmatprep.subr.mxu0 0.0
    %2882 = vmatpush1.msra.mxu0 %v2785
    %2883 = vmatprep.subr.mxu0 0.0
    %2884 = vmatpush1.msra.mxu0 %v2786
    %2885 = vmatprep.mubr.f32.mxu0 %v2813
    %2886 = vmatmul.mubr.f32.gmra.mrb[0].mxu0 %v2810
    %v2887 = vpop.f32.mrb[0].mxu0
    %v2888 = vadd.f32 0.0, %v2887
    %v2889 = vpop.f32.mrb[0].mxu0
    %2890 = vdwg.mxu0
    %2891 = vmatprep.subr.mxu0 0.0
    %2892 = vmatpush1.msra.mxu0 %v2787
    %2893 = vmatprep.subr.mxu0 0.0
    %2894 = vmatpush1.msra.mxu0 %v2788
    %2895 = vmatprep.subr.mxu0 0.0
    %2896 = vmatpush1.msra.mxu0 %v2789
    %2897 = vmatprep.subr.mxu0 0.0
    %2898 = vmatpush1.msra.mxu0 %v2790
    %2899 = vmatprep.subr.mxu0 0.0
    %2900 = vmatpush1.msra.mxu0 %v2791
    %2901 = vmatprep.subr.mxu0 0.0
    %2902 = vmatpush1.msra.mxu0 %v2792
    %2903 = vmatprep.subr.mxu0 0.0
    %2904 = vmatpush1.msra.mxu0 %v2793
    %2905 = vmatprep.subr.mxu0 0.0
    %2906 = vmatpush1.msra.mxu0 %v2794
    %2907 = vmatprep.subr.mxu0 0.0
    %2908 = vmatpush1.msra.mxu0 %v2795
    %2909 = vmatprep.subr.mxu0 0.0
    %2910 = vmatpush1.msra.mxu0 %v2796
    %2911 = vmatprep.subr.mxu0 0.0
    %2912 = vmatpush1.msra.mxu0 %v2797
    %2913 = vmatprep.subr.mxu0 0.0
    %2914 = vmatpush1.msra.mxu0 %v2798
    %2915 = vmatprep.subr.mxu0 0.0
    %2916 = vmatpush1.msra.mxu0 %v2799
    %2917 = vmatprep.subr.mxu0 0.0
    %2918 = vmatpush1.msra.mxu0 %v2800
    %2919 = vmatprep.subr.mxu0 0.0
    %2920 = vmatpush1.msra.mxu0 0.0
    %2921 = vmatprep.subr.mxu0 0.0
    %2922 = vmatpush1.msra.mxu0 0.0
    %2923 = vmatprep.subr.mxu0 0.0
    %2924 = vmatpush1.msra.mxu0 0.0
    %2925 = vmatprep.subr.mxu0 0.0
    %2926 = vmatpush1.msra.mxu0 0.0
    %2927 = vmatprep.subr.mxu0 0.0
    %2928 = vmatpush1.msra.mxu0 0.0
    %2929 = vmatprep.subr.mxu0 0.0
    %2930 = vmatpush1.msra.mxu0 0.0
    %2931 = vmatprep.subr.mxu0 0.0
    %2932 = vmatpush1.msra.mxu0 0.0
    %2933 = vmatprep.subr.mxu0 0.0
    %2934 = vmatpush1.msra.mxu0 0.0
    %2935 = vmatprep.subr.mxu0 0.0
    %2936 = vmatpush1.msra.mxu0 0.0
    %2937 = vmatprep.subr.mxu0 0.0
    %2938 = vmatpush1.msra.mxu0 0.0
    %2939 = vmatprep.subr.mxu0 0.0
    %2940 = vmatpush1.msra.mxu0 0.0
    %2941 = vmatprep.subr.mxu0 0.0
    %2942 = vmatpush1.msra.mxu0 0.0
    %2943 = vmatprep.subr.mxu0 0.0
    %2944 = vmatpush1.msra.mxu0 0.0
    %2945 = vmatprep.subr.mxu0 0.0
    %2946 = vmatpush1.msra.mxu0 0.0
    %2947 = vmatprep.subr.mxu0 0.0
    %2948 = vmatpush1.msra.mxu0 0.0
    %2949 = vmatprep.subr.mxu0 0.0
    %2950 = vmatpush1.msra.mxu0 0.0
    %2951 = vmatprep.subr.mxu0 0.0
    %2952 = vmatpush1.msra.mxu0 0.0
    %2953 = vmatprep.subr.mxu0 0.0
    %2954 = vmatpush1.msra.mxu0 0.0
    %2955 = vmatprep.mubr.f32.mxu0 0.0
    %2956 = vmatmul.mubr.f32.gmra.mrb[0].mxu0 %v2819
    %v2957 = vpop.f32.mrb[0].mxu0
    %v2958 = vadd.f32 %v2888, %v2957
    %v2959 = vpop.f32.mrb[0].mxu0
    %2960 = vdwg.mxu0
    %v2961 = vrot.slane %v2699, 7
    %v2962 = vsel %vm2809, %v2961, %v2690
    %v2963 = vrot.slane %v2700, 7
    %v2964 = vsel %vm2809, %v2963, %v2691
    %v2965 = vrot.slane %v2701, 7
    %v2966 = vsel %vm2809, %v2965, %v2692
    %v2969 = vsel %vm2659, %v2966, 0
    %2971 = vmatprep.subr.mxu0 0.0
    %2972 = vmatpush1.msra.mxu0 %v2708
    %2973 = vmatprep.subr.mxu0 0.0
    %2974 = vmatpush1.msra.mxu0 %v2709
    %2975 = vmatprep.subr.mxu0 0.0
    %2976 = vmatpush1.msra.mxu0 %v2710
    %2977 = vmatprep.subr.mxu0 0.0
    %2978 = vmatpush1.msra.mxu0 %v2711
    %2979 = vmatprep.subr.mxu0 0.0
    %2980 = vmatpush1.msra.mxu0 %v2712
    %2981 = vmatprep.subr.mxu0 0.0
    %2982 = vmatpush1.msra.mxu0 %v2713
    %2983 = vmatprep.subr.mxu0 0.0
    %2984 = vmatpush1.msra.mxu0 %v2714
    %2985 = vmatprep.subr.mxu0 0.0
    %2986 = vmatpush1.msra.mxu0 %v2715
    %2987 = vmatprep.subr.mxu0 0.0
    %2988 = vmatpush1.msra.mxu0 %v2716
    %2989 = vmatprep.subr.mxu0 0.0
    %2990 = vmatpush1.msra.mxu0 %v2717
    %2991 = vmatprep.subr.mxu0 0.0
    %2992 = vmatpush1.msra.mxu0 %v2718
    %2993 = vmatprep.subr.mxu0 0.0
    %2994 = vmatpush1.msra.mxu0 %v2719
    %2995 = vmatprep.subr.mxu0 0.0
    %2996 = vmatpush1.msra.mxu0 %v2720
    %2997 = vmatprep.subr.mxu0 0.0
    %2998 = vmatpush1.msra.mxu0 %v2721
    %2999 = vmatprep.subr.mxu0 0.0
    %3000 = vmatpush1.msra.mxu0 %v2722
    %3001 = vmatprep.subr.mxu0 0.0
    %3002 = vmatpush1.msra.mxu0 %v2723
    %3003 = vmatprep.subr.mxu0 0.0
    %3004 = vmatpush1.msra.mxu0 %v2724
    %3005 = vmatprep.subr.mxu0 0.0
    %3006 = vmatpush1.msra.mxu0 %v2725
    %3007 = vmatprep.subr.mxu0 0.0
    %3008 = vmatpush1.msra.mxu0 %v2726
    %3009 = vmatprep.subr.mxu0 0.0
    %3010 = vmatpush1.msra.mxu0 %v2727
    %3011 = vmatprep.subr.mxu0 0.0
    %3012 = vmatpush1.msra.mxu0 %v2728
    %3013 = vmatprep.subr.mxu0 0.0
    %3014 = vmatpush1.msra.mxu0 %v2729
    %3015 = vmatprep.subr.mxu0 0.0
    %3016 = vmatpush1.msra.mxu0 %v2730
    %3017 = vmatprep.subr.mxu0 0.0
    %3018 = vmatpush1.msra.mxu0 %v2731
    %3019 = vmatprep.subr.mxu0 0.0
    %3020 = vmatpush1.msra.mxu0 %v2732
    %3021 = vmatprep.subr.mxu0 0.0
    %3022 = vmatpush1.msra.mxu0 %v2733
    %3023 = vmatprep.subr.mxu0 0.0
    %3024 = vmatpush1.msra.mxu0 %v2734
    %3025 = vmatprep.subr.mxu0 0.0
    %3026 = vmatpush1.msra.mxu0 %v2735
    %3027 = vmatprep.subr.mxu0 0.0
    %3028 = vmatpush1.msra.mxu0 %v2736
    %3029 = vmatprep.subr.mxu0 0.0
    %3030 = vmatpush1.msra.mxu0 %v2737
    %3031 = vmatprep.subr.mxu0 0.0
    %3032 = vmatpush1.msra.mxu0 %v2738
    %3033 = vmatprep.subr.mxu0 0.0
    %3034 = vmatpush1.msra.mxu0 %v2739
    %3035 = vmatprep.mubr.f32.mxu0 %v2964
    %3036 = vmatmul.mubr.f32.gmra.mrb[0].mxu0 %v2962
    %v3037 = vpop.f32.mrb[0].mxu0
    %v3038 = vadd.f32 %v2958, %v3037
    %v3039 = vpop.f32.mrb[0].mxu0
    %3040 = vdwg.mxu0
    %3041 = vmatprep.subr.mxu0 0.0
    %3042 = vmatpush1.msra.mxu0 %v2740
    %3043 = vmatprep.subr.mxu0 0.0
    %3044 = vmatpush1.msra.mxu0 %v2741
    %3045 = vmatprep.subr.mxu0 0.0
    %3046 = vmatpush1.msra.mxu0 %v2742
    %3047 = vmatprep.subr.mxu0 0.0
    %3048 = vmatpush1.msra.mxu0 %v2743
    %3049 = vmatprep.subr.mxu0 0.0
    %3050 = vmatpush1.msra.mxu0 %v2744
    %3051 = vmatprep.subr.mxu0 0.0
    %3052 = vmatpush1.msra.mxu0 %v2745
    %3053 = vmatprep.subr.mxu0 0.0
    %3054 = vmatpush1.msra.mxu0 %v2746
    %3055 = vmatprep.subr.mxu0 0.0
    %3056 = vmatpush1.msra.mxu0 %v2747
    %3057 = vmatprep.subr.mxu0 0.0
    %3058 = vmatpush1.msra.mxu0 %v2748
    %3059 = vmatprep.subr.mxu0 0.0
    %3060 = vmatpush1.msra.mxu0 %v2749
    %3061 = vmatprep.subr.mxu0 0.0
    %3062 = vmatpush1.msra.mxu0 %v2750
    %3063 = vmatprep.subr.mxu0 0.0
    %3064 = vmatpush1.msra.mxu0 %v2751
    %3065 = vmatprep.subr.mxu0 0.0
    %3066 = vmatpush1.msra.mxu0 %v2752
    %3067 = vmatprep.subr.mxu0 0.0
    %3068 = vmatpush1.msra.mxu0 %v2753
    %3069 = vmatprep.subr.mxu0 0.0
    %3070 = vmatpush1.msra.mxu0 0.0
    %3071 = vmatprep.subr.mxu0 0.0
    %3072 = vmatpush1.msra.mxu0 0.0
    %3073 = vmatprep.subr.mxu0 0.0
    %3074 = vmatpush1.msra.mxu0 0.0
    %3075 = vmatprep.subr.mxu0 0.0
    %3076 = vmatpush1.msra.mxu0 0.0
    %3077 = vmatprep.subr.mxu0 0.0
    %3078 = vmatpush1.msra.mxu0 0.0
    %3079 = vmatprep.subr.mxu0 0.0
    %3080 = vmatpush1.msra.mxu0 0.0
    %3081 = vmatprep.subr.mxu0 0.0
    %3082 = vmatpush1.msra.mxu0 0.0
    %3083 = vmatprep.subr.mxu0 0.0
    %3084 = vmatpush1.msra.mxu0 0.0
    %3085 = vmatprep.subr.mxu0 0.0
    %3086 = vmatpush1.msra.mxu0 0.0
    %3087 = vmatprep.subr.mxu0 0.0
    %3088 = vmatpush1.msra.mxu0 0.0
    %3089 = vmatprep.subr.mxu0 0.0
    %3090 = vmatpush1.msra.mxu0 0.0
    %3091 = vmatprep.subr.mxu0 0.0
    %3092 = vmatpush1.msra.mxu0 0.0
    %3093 = vmatprep.subr.mxu0 0.0
    %3094 = vmatpush1.msra.mxu0 0.0
    %3095 = vmatprep.subr.mxu0 0.0
    %3096 = vmatpush1.msra.mxu0 0.0
    %3097 = vmatprep.subr.mxu0 0.0
    %3098 = vmatpush1.msra.mxu0 0.0
    %3099 = vmatprep.subr.mxu0 0.0
    %3100 = vmatpush1.msra.mxu0 0.0
    %3101 = vmatprep.subr.mxu0 0.0
    %3102 = vmatpush1.msra.mxu0 0.0
    %3103 = vmatprep.subr.mxu0 0.0
    %3104 = vmatpush1.msra.mxu0 0.0
    %3105 = vmatprep.mubr.f32.mxu0 0.0
    %3106 = vmatmul.mubr.f32.gmra.mrb[0].mxu0 %v2969
    %v3107 = vpop.f32.mrb[0].mxu0
    %v3108 = vadd.f32 %v3038, %v3107
    %v3109 = vpop.f32.mrb[0].mxu0
    %3110 = vdwg.mxu0
    %s3111 = scalar_lea.vmem %s5, 736
    %v3112 = vld [vmem:[%s3111] sm:$0xff]
    %v3113 = vld [vmem:[%s3111 + $0x8] sm:$0xff]
    %v3114 = vld [vmem:[%s3111 + $0x10] sm:$0xff]
    %v3115 = vld [vmem:[%s3111 + $0x18] sm:$0xff]
    %v3116 = vld [vmem:[%s3111 + $0x20] sm:$0xff]
    %v3117 = vld [vmem:[%s3111 + $0x28] sm:$0xff]
    %v3118 = vld [vmem:[%s3111 + $0x30] sm:$0xff]
    %v3119 = vld [vmem:[%s3111 + $0x38] sm:$0xff]
    %v3120 = vld [vmem:[%s3111 + $0x40] sm:$0xff]
    %v3121 = vld [vmem:[%s3111 + $0x48] sm:$0xff]
    %v3122 = vld [vmem:[%s3111 + $0x50] sm:$0xff]
    %v3123 = vld [vmem:[%s3111 + $0x58] sm:$0xff]
    %v3124 = vld [vmem:[%s3111 + $0x60] sm:$0xff]
    %v3125 = vld [vmem:[%s3111 + $0x68] sm:$0xff]
    %v3126 = vld [vmem:[%s3111 + $0x70] sm:$0xff]
    %v3127 = vld [vmem:[%s3111 + $0x78] sm:$0xff]
    %v3128 = vld [vmem:[%s3111 + $0x80] sm:$0xff]
    %v3129 = vld [vmem:[%s3111 + $0x88] sm:$0xff]
    %v3130 = vld [vmem:[%s3111 + $0x90] sm:$0xff]
    %v3131 = vld [vmem:[%s3111 + $0x98] sm:$0xff]
    %v3132 = vld [vmem:[%s3111 + $0xa0] sm:$0xff]
    %v3133 = vld [vmem:[%s3111 + $0xa8] sm:$0xff]
    %v3134 = vld [vmem:[%s3111 + $0xb0] sm:$0xff]
    %v3135 = vld [vmem:[%s3111 + $0xb8] sm:$0xff]
    %v3136 = vld [vmem:[%s3111 + $0xc0] sm:$0xff]
    %v3137 = vld [vmem:[%s3111 + $0xc8] sm:$0xff]
    %v3138 = vld [vmem:[%s3111 + $0xd0] sm:$0xff]
    %v3139 = vld [vmem:[%s3111 + $0xd8] sm:$0xff]
    %v3140 = vld [vmem:[%s3111 + $0xe0] sm:$0xff]
    %v3141 = vld [vmem:[%s3111 + $0xe8] sm:$0xff]
    %v3142 = vld [vmem:[%s3111 + $0xf0] sm:$0xff]
    %v3143 = vld [vmem:[%s3111 + $0xf8] sm:$0xff]
    %v3144 = vld [vmem:[%s3111 + $0x100] sm:$0xff]
    %v3145 = vld [vmem:[%s3111 + $0x108] sm:$0xff]
    %v3146 = vld [vmem:[%s3111 + $0x110] sm:$0xff]
    %v3147 = vld [vmem:[%s3111 + $0x118] sm:$0xff]
    %v3148 = vld [vmem:[%s3111 + $0x120] sm:$0xff]
    %v3149 = vld [vmem:[%s3111 + $0x128] sm:$0xff]
    %v3150 = vld [vmem:[%s3111 + $0x130] sm:$0xff]
    %v3151 = vld [vmem:[%s3111 + $0x138] sm:$0xff]
    %v3152 = vld [vmem:[%s3111 + $0x140] sm:$0xff]
    %v3153 = vld [vmem:[%s3111 + $0x148] sm:$0xff]
    %v3154 = vld [vmem:[%s3111 + $0x150] sm:$0xff]
    %v3155 = vld [vmem:[%s3111 + $0x158] sm:$0xff]
    %v3156 = vld [vmem:[%s3111 + $0x160] sm:$0xff]
    %v3157 = vld [vmem:[%s3111 + $0x168] sm:$0xff]
    %v3158 = vrot.slane %v2690, 4
    %v3159 = vrot.slane %v2699, 3
    %v3160 = vsel %vm2809, %v3159, %v3158
    %v3161 = vrot.slane %v2691, 4
    %v3162 = vrot.slane %v2700, 3
    %v3163 = vsel %vm2809, %v3162, %v3161
    %v3164 = vrot.slane %v2692, 4
    %v3165 = vrot.slane %v2701, 3
    %v3166 = vsel %vm2809, %v3165, %v3164
    %v3169 = vsel %vm2659, %v3166, 0
    %3171 = vmatprep.subr.mxu0 0.0
    %3172 = vmatpush1.msra.mxu0 %v3112
    %3173 = vmatprep.subr.mxu0 0.0
    %3174 = vmatpush1.msra.mxu0 %v3113
    %3175 = vmatprep.subr.mxu0 0.0
    %3176 = vmatpush1.msra.mxu0 %v3114
    %3177 = vmatprep.subr.mxu0 0.0
    %3178 = vmatpush1.msra.mxu0 %v3115
    %3179 = vmatprep.subr.mxu0 0.0
    %3180 = vmatpush1.msra.mxu0 %v3116
    %3181 = vmatprep.subr.mxu0 0.0
    %3182 = vmatpush1.msra.mxu0 %v3117
    %3183 = vmatprep.subr.mxu0 0.0
    %3184 = vmatpush1.msra.mxu0 %v3118
    %3185 = vmatprep.subr.mxu0 0.0
    %3186 = vmatpush1.msra.mxu0 %v3119
    %3187 = vmatprep.subr.mxu0 0.0
    %3188 = vmatpush1.msra.mxu0 %v3120
    %3189 = vmatprep.subr.mxu0 0.0
    %3190 = vmatpush1.msra.mxu0 %v3121
    %3191 = vmatprep.subr.mxu0 0.0
    %3192 = vmatpush1.msra.mxu0 %v3122
    %3193 = vmatprep.subr.mxu0 0.0
    %3194 = vmatpush1.msra.mxu0 %v3123
    %3195 = vmatprep.subr.mxu0 0.0
    %3196 = vmatpush1.msra.mxu0 %v3124
    %3197 = vmatprep.subr.mxu0 0.0
    %3198 = vmatpush1.msra.mxu0 %v3125
    %3199 = vmatprep.subr.mxu0 0.0
    %3200 = vmatpush1.msra.mxu0 %v3126
    %3201 = vmatprep.subr.mxu0 0.0
    %3202 = vmatpush1.msra.mxu0 %v3127
    %3203 = vmatprep.subr.mxu0 0.0
    %3204 = vmatpush1.msra.mxu0 %v3128
    %3205 = vmatprep.subr.mxu0 0.0
    %3206 = vmatpush1.msra.mxu0 %v3129
    %3207 = vmatprep.subr.mxu0 0.0
    %3208 = vmatpush1.msra.mxu0 %v3130
    %3209 = vmatprep.subr.mxu0 0.0
    %3210 = vmatpush1.msra.mxu0 %v3131
    %3211 = vmatprep.subr.mxu0 0.0
    %3212 = vmatpush1.msra.mxu0 %v3132
    %3213 = vmatprep.subr.mxu0 0.0
    %3214 = vmatpush1.msra.mxu0 %v3133
    %3215 = vmatprep.subr.mxu0 0.0
    %3216 = vmatpush1.msra.mxu0 %v3134
    %3217 = vmatprep.subr.mxu0 0.0
    %3218 = vmatpush1.msra.mxu0 %v3135
    %3219 = vmatprep.subr.mxu0 0.0
    %3220 = vmatpush1.msra.mxu0 %v3136
    %3221 = vmatprep.subr.mxu0 0.0
    %3222 = vmatpush1.msra.mxu0 %v3137
    %3223 = vmatprep.subr.mxu0 0.0
    %3224 = vmatpush1.msra.mxu0 %v3138
    %3225 = vmatprep.subr.mxu0 0.0
    %3226 = vmatpush1.msra.mxu0 %v3139
    %3227 = vmatprep.subr.mxu0 0.0
    %3228 = vmatpush1.msra.mxu0 %v3140
    %3229 = vmatprep.subr.mxu0 0.0
    %3230 = vmatpush1.msra.mxu0 %v3141
    %3231 = vmatprep.subr.mxu0 0.0
    %3232 = vmatpush1.msra.mxu0 %v3142
    %3233 = vmatprep.subr.mxu0 0.0
    %3234 = vmatpush1.msra.mxu0 %v3143
    %3235 = vmatprep.mubr.f32.mxu0 %v3163
    %3236 = vmatmul.mubr.f32.gmra.mrb[0].mxu0 %v3160
    %v3237 = vpop.f32.mrb[0].mxu0
    %v3238 = vadd.f32 0.0, %v3237
    %v3239 = vpop.f32.mrb[0].mxu0
    %3240 = vdwg.mxu0
    %3241 = vmatprep.subr.mxu0 0.0
    %3242 = vmatpush1.msra.mxu0 %v3144
    %3243 = vmatprep.subr.mxu0 0.0
    %3244 = vmatpush1.msra.mxu0 %v3145
    %3245 = vmatprep.subr.mxu0 0.0
    %3246 = vmatpush1.msra.mxu0 %v3146
    %3247 = vmatprep.subr.mxu0 0.0
    %3248 = vmatpush1.msra.mxu0 %v3147
    %3249 = vmatprep.subr.mxu0 0.0
    %3250 = vmatpush1.msra.mxu0 %v3148
    %3251 = vmatprep.subr.mxu0 0.0
    %3252 = vmatpush1.msra.mxu0 %v3149
    %3253 = vmatprep.subr.mxu0 0.0
    %3254 = vmatpush1.msra.mxu0 %v3150
    %3255 = vmatprep.subr.mxu0 0.0
    %3256 = vmatpush1.msra.mxu0 %v3151
    %3257 = vmatprep.subr.mxu0 0.0
    %3258 = vmatpush1.msra.mxu0 %v3152
    %3259 = vmatprep.subr.mxu0 0.0
    %3260 = vmatpush1.msra.mxu0 %v3153
    %3261 = vmatprep.subr.mxu0 0.0
    %3262 = vmatpush1.msra.mxu0 %v3154
    %3263 = vmatprep.subr.mxu0 0.0
    %3264 = vmatpush1.msra.mxu0 %v3155
    %3265 = vmatprep.subr.mxu0 0.0
    %3266 = vmatpush1.msra.mxu0 %v3156
    %3267 = vmatprep.subr.mxu0 0.0
    %3268 = vmatpush1.msra.mxu0 %v3157
    %3269 = vmatprep.subr.mxu0 0.0
    %3270 = vmatpush1.msra.mxu0 0.0
    %3271 = vmatprep.subr.mxu0 0.0
    %3272 = vmatpush1.msra.mxu0 0.0
    %3273 = vmatprep.subr.mxu0 0.0
    %3274 = vmatpush1.msra.mxu0 0.0
    %3275 = vmatprep.subr.mxu0 0.0
    %3276 = vmatpush1.msra.mxu0 0.0
    %3277 = vmatprep.subr.mxu0 0.0
    %3278 = vmatpush1.msra.mxu0 0.0
    %3279 = vmatprep.subr.mxu0 0.0
    %3280 = vmatpush1.msra.mxu0 0.0
    %3281 = vmatprep.subr.mxu0 0.0
    %3282 = vmatpush1.msra.mxu0 0.0
    %3283 = vmatprep.subr.mxu0 0.0
    %3284 = vmatpush1.msra.mxu0 0.0
    %3285 = vmatprep.subr.mxu0 0.0
    %3286 = vmatpush1.msra.mxu0 0.0
    %3287 = vmatprep.subr.mxu0 0.0
    %3288 = vmatpush1.msra.mxu0 0.0
    %3289 = vmatprep.subr.mxu0 0.0
    %3290 = vmatpush1.msra.mxu0 0.0
    %3291 = vmatprep.subr.mxu0 0.0
    %3292 = vmatpush1.msra.mxu0 0.0
    %3293 = vmatprep.subr.mxu0 0.0
    %3294 = vmatpush1.msra.mxu0 0.0
    %3295 = vmatprep.subr.mxu0 0.0
    %3296 = vmatpush1.msra.mxu0 0.0
    %3297 = vmatprep.subr.mxu0 0.0
    %3298 = vmatpush1.msra.mxu0 0.0
    %3299 = vmatprep.subr.mxu0 0.0
    %3300 = vmatpush1.msra.mxu0 0.0
    %3301 = vmatprep.subr.mxu0 0.0
    %3302 = vmatpush1.msra.mxu0 0.0
    %3303 = vmatprep.subr.mxu0 0.0
    %3304 = vmatpush1.msra.mxu0 0.0
    %3305 = vmatprep.mubr.f32.mxu0 0.0
    %3306 = vmatmul.mubr.f32.gmra.mrb[0].mxu0 %v3169
    %v3307 = vpop.f32.mrb[0].mxu0
    %v3308 = vadd.f32 %v3238, %v3307
    %v3309 = vpop.f32.mrb[0].mxu0
    %3310 = vdwg.mxu0
    %v3311 = vadd.f32 %v3108, %v3308
    %s3312 = scalar_lea.vmem %s5, 1104
    %v3313 = vld [vmem:[%s3312] sm:$0xff]
    %v3314 = vld [vmem:[%s3312 + $0x8] sm:$0xff]
    %v3315 = vld [vmem:[%s3312 + $0x10] sm:$0xff]
    %v3316 = vld [vmem:[%s3312 + $0x18] sm:$0xff]
    %v3317 = vld [vmem:[%s3312 + $0x20] sm:$0xff]
    %v3318 = vld [vmem:[%s3312 + $0x28] sm:$0xff]
    %v3319 = vld [vmem:[%s3312 + $0x30] sm:$0xff]
    %v3320 = vld [vmem:[%s3312 + $0x38] sm:$0xff]
    %v3321 = vld [vmem:[%s3312 + $0x40] sm:$0xff]
    %v3322 = vld [vmem:[%s3312 + $0x48] sm:$0xff]
    %v3323 = vld [vmem:[%s3312 + $0x50] sm:$0xff]
    %v3324 = vld [vmem:[%s3312 + $0x58] sm:$0xff]
    %v3325 = vld [vmem:[%s3312 + $0x60] sm:$0xff]
    %v3326 = vld [vmem:[%s3312 + $0x68] sm:$0xff]
    %v3327 = vld [vmem:[%s3312 + $0x70] sm:$0xff]
    %v3328 = vld [vmem:[%s3312 + $0x78] sm:$0xff]
    %v3329 = vld [vmem:[%s3312 + $0x80] sm:$0xff]
    %v3330 = vld [vmem:[%s3312 + $0x88] sm:$0xff]
    %v3331 = vld [vmem:[%s3312 + $0x90] sm:$0xff]
    %v3332 = vld [vmem:[%s3312 + $0x98] sm:$0xff]
    %v3333 = vld [vmem:[%s3312 + $0xa0] sm:$0xff]
    %v3334 = vld [vmem:[%s3312 + $0xa8] sm:$0xff]
    %v3335 = vld [vmem:[%s3312 + $0xb0] sm:$0xff]
    %v3336 = vld [vmem:[%s3312 + $0xb8] sm:$0xff]
    %v3337 = vld [vmem:[%s3312 + $0xc0] sm:$0xff]
    %v3338 = vld [vmem:[%s3312 + $0xc8] sm:$0xff]
    %v3339 = vld [vmem:[%s3312 + $0xd0] sm:$0xff]
    %v3340 = vld [vmem:[%s3312 + $0xd8] sm:$0xff]
    %v3341 = vld [vmem:[%s3312 + $0xe0] sm:$0xff]
    %v3342 = vld [vmem:[%s3312 + $0xe8] sm:$0xff]
    %v3343 = vld [vmem:[%s3312 + $0xf0] sm:$0xff]
    %v3344 = vld [vmem:[%s3312 + $0xf8] sm:$0xff]
    %v3345 = vld [vmem:[%s3312 + $0x100] sm:$0xff]
    %v3346 = vld [vmem:[%s3312 + $0x108] sm:$0xff]
    %v3347 = vld [vmem:[%s3312 + $0x110] sm:$0xff]
    %v3348 = vld [vmem:[%s3312 + $0x118] sm:$0xff]
    %v3349 = vld [vmem:[%s3312 + $0x120] sm:$0xff]
    %v3350 = vld [vmem:[%s3312 + $0x128] sm:$0xff]
    %v3351 = vld [vmem:[%s3312 + $0x130] sm:$0xff]
    %v3352 = vld [vmem:[%s3312 + $0x138] sm:$0xff]
    %v3353 = vld [vmem:[%s3312 + $0x140] sm:$0xff]
    %v3354 = vld [vmem:[%s3312 + $0x148] sm:$0xff]
    %v3355 = vld [vmem:[%s3312 + $0x150] sm:$0xff]
    %v3356 = vld [vmem:[%s3312 + $0x158] sm:$0xff]
    %v3357 = vld [vmem:[%s3312 + $0x160] sm:$0xff]
    %v3358 = vld [vmem:[%s3312 + $0x168] sm:$0xff]
    %v3359 = vrot.slane %v2690, 6
    %v3360 = vrot.slane %v2699, 5
    %v3361 = vsel %vm2809, %v3360, %v3359
    %v3362 = vrot.slane %v2691, 6
    %v3363 = vrot.slane %v2700, 5
    %v3364 = vsel %vm2809, %v3363, %v3362
    %v3365 = vrot.slane %v2692, 6
    %v3366 = vrot.slane %v2701, 5
    %v3367 = vsel %vm2809, %v3366, %v3365
    %v3370 = vsel %vm2659, %v3367, 0
    %3372 = vmatprep.subr.mxu0 0.0
    %3373 = vmatpush1.msra.mxu0 %v3313
    %3374 = vmatprep.subr.mxu0 0.0
    %3375 = vmatpush1.msra.mxu0 %v3314
    %3376 = vmatprep.subr.mxu0 0.0
    %3377 = vmatpush1.msra.mxu0 %v3315
    %3378 = vmatprep.subr.mxu0 0.0
    %3379 = vmatpush1.msra.mxu0 %v3316
    %3380 = vmatprep.subr.mxu0 0.0
    %3381 = vmatpush1.msra.mxu0 %v3317
    %3382 = vmatprep.subr.mxu0 0.0
    %3383 = vmatpush1.msra.mxu0 %v3318
    %3384 = vmatprep.subr.mxu0 0.0
    %3385 = vmatpush1.msra.mxu0 %v3319
    %3386 = vmatprep.subr.mxu0 0.0
    %3387 = vmatpush1.msra.mxu0 %v3320
    %3388 = vmatprep.subr.mxu0 0.0
    %3389 = vmatpush1.msra.mxu0 %v3321
    %3390 = vmatprep.subr.mxu0 0.0
    %3391 = vmatpush1.msra.mxu0 %v3322
    %3392 = vmatprep.subr.mxu0 0.0
    %3393 = vmatpush1.msra.mxu0 %v3323
    %3394 = vmatprep.subr.mxu0 0.0
    %3395 = vmatpush1.msra.mxu0 %v3324
    %3396 = vmatprep.subr.mxu0 0.0
    %3397 = vmatpush1.msra.mxu0 %v3325
    %3398 = vmatprep.subr.mxu0 0.0
    %3399 = vmatpush1.msra.mxu0 %v3326
    %3400 = vmatprep.subr.mxu0 0.0
    %3401 = vmatpush1.msra.mxu0 %v3327
    %3402 = vmatprep.subr.mxu0 0.0
    %3403 = vmatpush1.msra.mxu0 %v3328
    %3404 = vmatprep.subr.mxu0 0.0
    %3405 = vmatpush1.msra.mxu0 %v3329
    %3406 = vmatprep.subr.mxu0 0.0
    %3407 = vmatpush1.msra.mxu0 %v3330
    %3408 = vmatprep.subr.mxu0 0.0
    %3409 = vmatpush1.msra.mxu0 %v3331
    %3410 = vmatprep.subr.mxu0 0.0
    %3411 = vmatpush1.msra.mxu0 %v3332
    %3412 = vmatprep.subr.mxu0 0.0
    %3413 = vmatpush1.msra.mxu0 %v3333
    %3414 = vmatprep.subr.mxu0 0.0
    %3415 = vmatpush1.msra.mxu0 %v3334
    %3416 = vmatprep.subr.mxu0 0.0
    %3417 = vmatpush1.msra.mxu0 %v3335
    %3418 = vmatprep.subr.mxu0 0.0
    %3419 = vmatpush1.msra.mxu0 %v3336
    %3420 = vmatprep.subr.mxu0 0.0
    %3421 = vmatpush1.msra.mxu0 %v3337
    %3422 = vmatprep.subr.mxu0 0.0
    %3423 = vmatpush1.msra.mxu0 %v3338
    %3424 = vmatprep.subr.mxu0 0.0
    %3425 = vmatpush1.msra.mxu0 %v3339
    %3426 = vmatprep.subr.mxu0 0.0
    %3427 = vmatpush1.msra.mxu0 %v3340
    %3428 = vmatprep.subr.mxu0 0.0
    %3429 = vmatpush1.msra.mxu0 %v3341
    %3430 = vmatprep.subr.mxu0 0.0
    %3431 = vmatpush1.msra.mxu0 %v3342
    %3432 = vmatprep.subr.mxu0 0.0
    %3433 = vmatpush1.msra.mxu0 %v3343
    %3434 = vmatprep.subr.mxu0 0.0
    %3435 = vmatpush1.msra.mxu0 %v3344
    %3436 = vmatprep.mubr.f32.mxu0 %v3364
    %3437 = vmatmul.mubr.f32.gmra.mrb[0].mxu0 %v3361
    %v3438 = vpop.f32.mrb[0].mxu0
    %v3439 = vadd.f32 0.0, %v3438
    %v3440 = vpop.f32.mrb[0].mxu0
    %3441 = vdwg.mxu0
    %3442 = vmatprep.subr.mxu0 0.0
    %3443 = vmatpush1.msra.mxu0 %v3345
    %3444 = vmatprep.subr.mxu0 0.0
    %3445 = vmatpush1.msra.mxu0 %v3346
    %3446 = vmatprep.subr.mxu0 0.0
    %3447 = vmatpush1.msra.mxu0 %v3347
    %3448 = vmatprep.subr.mxu0 0.0
    %3449 = vmatpush1.msra.mxu0 %v3348
    %3450 = vmatprep.subr.mxu0 0.0
    %3451 = vmatpush1.msra.mxu0 %v3349
    %3452 = vmatprep.subr.mxu0 0.0
    %3453 = vmatpush1.msra.mxu0 %v3350
    %3454 = vmatprep.subr.mxu0 0.0
    %3455 = vmatpush1.msra.mxu0 %v3351
    %3456 = vmatprep.subr.mxu0 0.0
    %3457 = vmatpush1.msra.mxu0 %v3352
    %3458 = vmatprep.subr.mxu0 0.0
    %3459 = vmatpush1.msra.mxu0 %v3353
    %3460 = vmatprep.subr.mxu0 0.0
    %3461 = vmatpush1.msra.mxu0 %v3354
    %3462 = vmatprep.subr.mxu0 0.0
    %3463 = vmatpush1.msra.mxu0 %v3355
    %3464 = vmatprep.subr.mxu0 0.0
    %3465 = vmatpush1.msra.mxu0 %v3356
    %3466 = vmatprep.subr.mxu0 0.0
    %3467 = vmatpush1.msra.mxu0 %v3357
    %3468 = vmatprep.subr.mxu0 0.0
    %3469 = vmatpush1.msra.mxu0 %v3358
    %3470 = vmatprep.subr.mxu0 0.0
    %3471 = vmatpush1.msra.mxu0 0.0
    %3472 = vmatprep.subr.mxu0 0.0
    %3473 = vmatpush1.msra.mxu0 0.0
    %3474 = vmatprep.subr.mxu0 0.0
    %3475 = vmatpush1.msra.mxu0 0.0
    %3476 = vmatprep.subr.mxu0 0.0
    %3477 = vmatpush1.msra.mxu0 0.0
    %3478 = vmatprep.subr.mxu0 0.0
    %3479 = vmatpush1.msra.mxu0 0.0
    %3480 = vmatprep.subr.mxu0 0.0
    %3481 = vmatpush1.msra.mxu0 0.0
    %3482 = vmatprep.subr.mxu0 0.0
    %3483 = vmatpush1.msra.mxu0 0.0
    %3484 = vmatprep.subr.mxu0 0.0
    %3485 = vmatpush1.msra.mxu0 0.0
    %3486 = vmatprep.subr.mxu0 0.0
    %3487 = vmatpush1.msra.mxu0 0.0
    %3488 = vmatprep.subr.mxu0 0.0
    %3489 = vmatpush1.msra.mxu0 0.0
    %3490 = vmatprep.subr.mxu0 0.0
    %3491 = vmatpush1.msra.mxu0 0.0
    %3492 = vmatprep.subr.mxu0 0.0
    %3493 = vmatpush1.msra.mxu0 0.0
    %3494 = vmatprep.subr.mxu0 0.0
    %3495 = vmatpush1.msra.mxu0 0.0
    %3496 = vmatprep.subr.mxu0 0.0
    %3497 = vmatpush1.msra.mxu0 0.0
    %3498 = vmatprep.subr.mxu0 0.0
    %3499 = vmatpush1.msra.mxu0 0.0
    %3500 = vmatprep.subr.mxu0 0.0
    %3501 = vmatpush1.msra.mxu0 0.0
    %3502 = vmatprep.subr.mxu0 0.0
    %3503 = vmatpush1.msra.mxu0 0.0
    %3504 = vmatprep.subr.mxu0 0.0
    %3505 = vmatpush1.msra.mxu0 0.0
    %3506 = vmatprep.mubr.f32.mxu0 0.0
    %3507 = vmatmul.mubr.f32.gmra.mrb[0].mxu0 %v3370
    %v3508 = vpop.f32.mrb[0].mxu0
    %v3509 = vadd.f32 %v3439, %v3508
    %v3510 = vpop.f32.mrb[0].mxu0
    %3511 = vdwg.mxu0
    %v3512 = vadd.f32 %v3311, %v3509
    %s3513 = scalar_lea.vmem %s5, 1472
    %v3514 = vld [vmem:[%s3513] sm:$0xff]
    %v3515 = vld [vmem:[%s3513 + $0x8] sm:$0xff]
    %v3516 = vld [vmem:[%s3513 + $0x10] sm:$0xff]
    %v3517 = vld [vmem:[%s3513 + $0x18] sm:$0xff]
    %v3518 = vld [vmem:[%s3513 + $0x20] sm:$0xff]
    %v3519 = vld [vmem:[%s3513 + $0x28] sm:$0xff]
    %v3520 = vld [vmem:[%s3513 + $0x30] sm:$0xff]
    %v3521 = vld [vmem:[%s3513 + $0x38] sm:$0xff]
    %v3522 = vld [vmem:[%s3513 + $0x40] sm:$0xff]
    %v3523 = vld [vmem:[%s3513 + $0x48] sm:$0xff]
    %v3524 = vld [vmem:[%s3513 + $0x50] sm:$0xff]
    %v3525 = vld [vmem:[%s3513 + $0x58] sm:$0xff]
    %v3526 = vld [vmem:[%s3513 + $0x60] sm:$0xff]
    %v3527 = vld [vmem:[%s3513 + $0x68] sm:$0xff]
    %v3528 = vld [vmem:[%s3513 + $0x70] sm:$0xff]
    %v3529 = vld [vmem:[%s3513 + $0x78] sm:$0xff]
    %v3530 = vld [vmem:[%s3513 + $0x80] sm:$0xff]
    %v3531 = vld [vmem:[%s3513 + $0x88] sm:$0xff]
    %v3532 = vld [vmem:[%s3513 + $0x90] sm:$0xff]
    %v3533 = vld [vmem:[%s3513 + $0x98] sm:$0xff]
    %v3534 = vld [vmem:[%s3513 + $0xa0] sm:$0xff]
    %v3535 = vld [vmem:[%s3513 + $0xa8] sm:$0xff]
    %v3536 = vld [vmem:[%s3513 + $0xb0] sm:$0xff]
    %v3537 = vld [vmem:[%s3513 + $0xb8] sm:$0xff]
    %v3538 = vld [vmem:[%s3513 + $0xc0] sm:$0xff]
    %v3539 = vld [vmem:[%s3513 + $0xc8] sm:$0xff]
    %v3540 = vld [vmem:[%s3513 + $0xd0] sm:$0xff]
    %v3541 = vld [vmem:[%s3513 + $0xd8] sm:$0xff]
    %v3542 = vld [vmem:[%s3513 + $0xe0] sm:$0xff]
    %v3543 = vld [vmem:[%s3513 + $0xe8] sm:$0xff]
    %v3544 = vld [vmem:[%s3513 + $0xf0] sm:$0xff]
    %v3545 = vld [vmem:[%s3513 + $0xf8] sm:$0xff]
    %v3546 = vld [vmem:[%s3513 + $0x100] sm:$0xff]
    %v3547 = vld [vmem:[%s3513 + $0x108] sm:$0xff]
    %v3548 = vld [vmem:[%s3513 + $0x110] sm:$0xff]
    %v3549 = vld [vmem:[%s3513 + $0x118] sm:$0xff]
    %v3550 = vld [vmem:[%s3513 + $0x120] sm:$0xff]
    %v3551 = vld [vmem:[%s3513 + $0x128] sm:$0xff]
    %v3552 = vld [vmem:[%s3513 + $0x130] sm:$0xff]
    %v3553 = vld [vmem:[%s3513 + $0x138] sm:$0xff]
    %v3554 = vld [vmem:[%s3513 + $0x140] sm:$0xff]
    %v3555 = vld [vmem:[%s3513 + $0x148] sm:$0xff]
    %v3556 = vld [vmem:[%s3513 + $0x150] sm:$0xff]
    %v3557 = vld [vmem:[%s3513 + $0x158] sm:$0xff]
    %v3558 = vld [vmem:[%s3513 + $0x160] sm:$0xff]
    %v3559 = vld [vmem:[%s3513 + $0x168] sm:$0xff]
    %v3566 = vrot.slane %v2702, 7
    %v3567 = vsel %vm2809, %v3566, %v2693
    %v3568 = vrot.slane %v2703, 7
    %v3569 = vsel %vm2809, %v3568, %v2694
    %v3570 = vrot.slane %v2704, 7
    %v3571 = vsel %vm2809, %v3570, %v2695
    %v3574 = vsel %vm2659, %v3571, 0
    %3576 = vmatprep.subr.mxu0 0.0
    %3577 = vmatpush1.msra.mxu0 %v3514
    %3578 = vmatprep.subr.mxu0 0.0
    %3579 = vmatpush1.msra.mxu0 %v3515
    %3580 = vmatprep.subr.mxu0 0.0
    %3581 = vmatpush1.msra.mxu0 %v3516
    %3582 = vmatprep.subr.mxu0 0.0
    %3583 = vmatpush1.msra.mxu0 %v3517
    %3584 = vmatprep.subr.mxu0 0.0
    %3585 = vmatpush1.msra.mxu0 %v3518
    %3586 = vmatprep.subr.mxu0 0.0
    %3587 = vmatpush1.msra.mxu0 %v3519
    %3588 = vmatprep.subr.mxu0 0.0
    %3589 = vmatpush1.msra.mxu0 %v3520
    %3590 = vmatprep.subr.mxu0 0.0
    %3591 = vmatpush1.msra.mxu0 %v3521
    %3592 = vmatprep.subr.mxu0 0.0
    %3593 = vmatpush1.msra.mxu0 %v3522
    %3594 = vmatprep.subr.mxu0 0.0
    %3595 = vmatpush1.msra.mxu0 %v3523
    %3596 = vmatprep.subr.mxu0 0.0
    %3597 = vmatpush1.msra.mxu0 %v3524
    %3598 = vmatprep.subr.mxu0 0.0
    %3599 = vmatpush1.msra.mxu0 %v3525
    %3600 = vmatprep.subr.mxu0 0.0
    %3601 = vmatpush1.msra.mxu0 %v3526
    %3602 = vmatprep.subr.mxu0 0.0
    %3603 = vmatpush1.msra.mxu0 %v3527
    %3604 = vmatprep.subr.mxu0 0.0
    %3605 = vmatpush1.msra.mxu0 %v3528
    %3606 = vmatprep.subr.mxu0 0.0
    %3607 = vmatpush1.msra.mxu0 %v3529
    %3608 = vmatprep.subr.mxu0 0.0
    %3609 = vmatpush1.msra.mxu0 %v3530
    %3610 = vmatprep.subr.mxu0 0.0
    %3611 = vmatpush1.msra.mxu0 %v3531
    %3612 = vmatprep.subr.mxu0 0.0
    %3613 = vmatpush1.msra.mxu0 %v3532
    %3614 = vmatprep.subr.mxu0 0.0
    %3615 = vmatpush1.msra.mxu0 %v3533
    %3616 = vmatprep.subr.mxu0 0.0
    %3617 = vmatpush1.msra.mxu0 %v3534
    %3618 = vmatprep.subr.mxu0 0.0
    %3619 = vmatpush1.msra.mxu0 %v3535
    %3620 = vmatprep.subr.mxu0 0.0
    %3621 = vmatpush1.msra.mxu0 %v3536
    %3622 = vmatprep.subr.mxu0 0.0
    %3623 = vmatpush1.msra.mxu0 %v3537
    %3624 = vmatprep.subr.mxu0 0.0
    %3625 = vmatpush1.msra.mxu0 %v3538
    %3626 = vmatprep.subr.mxu0 0.0
    %3627 = vmatpush1.msra.mxu0 %v3539
    %3628 = vmatprep.subr.mxu0 0.0
    %3629 = vmatpush1.msra.mxu0 %v3540
    %3630 = vmatprep.subr.mxu0 0.0
    %3631 = vmatpush1.msra.mxu0 %v3541
    %3632 = vmatprep.subr.mxu0 0.0
    %3633 = vmatpush1.msra.mxu0 %v3542
    %3634 = vmatprep.subr.mxu0 0.0
    %3635 = vmatpush1.msra.mxu0 %v3543
    %3636 = vmatprep.subr.mxu0 0.0
    %3637 = vmatpush1.msra.mxu0 %v3544
    %3638 = vmatprep.subr.mxu0 0.0
    %3639 = vmatpush1.msra.mxu0 %v3545
    %3640 = vmatprep.mubr.f32.mxu0 %v3569
    %3641 = vmatmul.mubr.f32.gmra.mrb[0].mxu0 %v3567
    %v3642 = vpop.f32.mrb[0].mxu0
    %v3643 = vadd.f32 0.0, %v3642
    %v3644 = vpop.f32.mrb[0].mxu0
    %3645 = vdwg.mxu0
    %3646 = vmatprep.subr.mxu0 0.0
    %3647 = vmatpush1.msra.mxu0 %v3546
    %3648 = vmatprep.subr.mxu0 0.0
    %3649 = vmatpush1.msra.mxu0 %v3547
    %3650 = vmatprep.subr.mxu0 0.0
    %3651 = vmatpush1.msra.mxu0 %v3548
    %3652 = vmatprep.subr.mxu0 0.0
    %3653 = vmatpush1.msra.mxu0 %v3549
    %3654 = vmatprep.subr.mxu0 0.0
    %3655 = vmatpush1.msra.mxu0 %v3550
    %3656 = vmatprep.subr.mxu0 0.0
    %3657 = vmatpush1.msra.mxu0 %v3551
    %3658 = vmatprep.subr.mxu0 0.0
    %3659 = vmatpush1.msra.mxu0 %v3552
    %3660 = vmatprep.subr.mxu0 0.0
    %3661 = vmatpush1.msra.mxu0 %v3553
    %3662 = vmatprep.subr.mxu0 0.0
    %3663 = vmatpush1.msra.mxu0 %v3554
    %3664 = vmatprep.subr.mxu0 0.0
    %3665 = vmatpush1.msra.mxu0 %v3555
    %3666 = vmatprep.subr.mxu0 0.0
    %3667 = vmatpush1.msra.mxu0 %v3556
    %3668 = vmatprep.subr.mxu0 0.0
    %3669 = vmatpush1.msra.mxu0 %v3557
    %3670 = vmatprep.subr.mxu0 0.0
    %3671 = vmatpush1.msra.mxu0 %v3558
    %3672 = vmatprep.subr.mxu0 0.0
    %3673 = vmatpush1.msra.mxu0 %v3559
    %3674 = vmatprep.subr.mxu0 0.0
    %3675 = vmatpush1.msra.mxu0 0.0
    %3676 = vmatprep.subr.mxu0 0.0
    %3677 = vmatpush1.msra.mxu0 0.0
    %3678 = vmatprep.subr.mxu0 0.0
    %3679 = vmatpush1.msra.mxu0 0.0
    %3680 = vmatprep.subr.mxu0 0.0
    %3681 = vmatpush1.msra.mxu0 0.0
    %3682 = vmatprep.subr.mxu0 0.0
    %3683 = vmatpush1.msra.mxu0 0.0
    %3684 = vmatprep.subr.mxu0 0.0
    %3685 = vmatpush1.msra.mxu0 0.0
    %3686 = vmatprep.subr.mxu0 0.0
    %3687 = vmatpush1.msra.mxu0 0.0
    %3688 = vmatprep.subr.mxu0 0.0
    %3689 = vmatpush1.msra.mxu0 0.0
    %3690 = vmatprep.subr.mxu0 0.0
    %3691 = vmatpush1.msra.mxu0 0.0
    %3692 = vmatprep.subr.mxu0 0.0
    %3693 = vmatpush1.msra.mxu0 0.0
    %3694 = vmatprep.subr.mxu0 0.0
    %3695 = vmatpush1.msra.mxu0 0.0
    %3696 = vmatprep.subr.mxu0 0.0
    %3697 = vmatpush1.msra.mxu0 0.0
    %3698 = vmatprep.subr.mxu0 0.0
    %3699 = vmatpush1.msra.mxu0 0.0
    %3700 = vmatprep.subr.mxu0 0.0
    %3701 = vmatpush1.msra.mxu0 0.0
    %3702 = vmatprep.subr.mxu0 0.0
    %3703 = vmatpush1.msra.mxu0 0.0
    %3704 = vmatprep.subr.mxu0 0.0
    %3705 = vmatpush1.msra.mxu0 0.0
    %3706 = vmatprep.subr.mxu0 0.0
    %3707 = vmatpush1.msra.mxu0 0.0
    %3708 = vmatprep.subr.mxu0 0.0
    %3709 = vmatpush1.msra.mxu0 0.0
    %3710 = vmatprep.mubr.f32.mxu0 0.0
    %3711 = vmatmul.mubr.f32.gmra.mrb[0].mxu0 %v3574
    %v3712 = vpop.f32.mrb[0].mxu0
    %v3713 = vadd.f32 %v3643, %v3712
    %v3714 = vpop.f32.mrb[0].mxu0
    %3715 = vdwg.mxu0
    %v3716 = vadd.f32 %v3512, %v3713
    %s3717 = scalar_lea.vmem %s5, 1840
    %v3718 = vld [vmem:[%s3717] sm:$0xff]
    %v3719 = vld [vmem:[%s3717 + $0x8] sm:$0xff]
    %v3720 = vld [vmem:[%s3717 + $0x10] sm:$0xff]
    %v3721 = vld [vmem:[%s3717 + $0x18] sm:$0xff]
    %v3722 = vld [vmem:[%s3717 + $0x20] sm:$0xff]
    %v3723 = vld [vmem:[%s3717 + $0x28] sm:$0xff]
    %v3724 = vld [vmem:[%s3717 + $0x30] sm:$0xff]
    %v3725 = vld [vmem:[%s3717 + $0x38] sm:$0xff]
    %v3726 = vld [vmem:[%s3717 + $0x40] sm:$0xff]
    %v3727 = vld [vmem:[%s3717 + $0x48] sm:$0xff]
    %v3728 = vld [vmem:[%s3717 + $0x50] sm:$0xff]
    %v3729 = vld [vmem:[%s3717 + $0x58] sm:$0xff]
    %v3730 = vld [vmem:[%s3717 + $0x60] sm:$0xff]
    %v3731 = vld [vmem:[%s3717 + $0x68] sm:$0xff]
    %v3732 = vld [vmem:[%s3717 + $0x70] sm:$0xff]
    %v3733 = vld [vmem:[%s3717 + $0x78] sm:$0xff]
    %v3734 = vld [vmem:[%s3717 + $0x80] sm:$0xff]
    %v3735 = vld [vmem:[%s3717 + $0x88] sm:$0xff]
    %v3736 = vld [vmem:[%s3717 + $0x90] sm:$0xff]
    %v3737 = vld [vmem:[%s3717 + $0x98] sm:$0xff]
    %v3738 = vld [vmem:[%s3717 + $0xa0] sm:$0xff]
    %v3739 = vld [vmem:[%s3717 + $0xa8] sm:$0xff]
    %v3740 = vld [vmem:[%s3717 + $0xb0] sm:$0xff]
    %v3741 = vld [vmem:[%s3717 + $0xb8] sm:$0xff]
    %v3742 = vld [vmem:[%s3717 + $0xc0] sm:$0xff]
    %v3743 = vld [vmem:[%s3717 + $0xc8] sm:$0xff]
    %v3744 = vld [vmem:[%s3717 + $0xd0] sm:$0xff]
    %v3745 = vld [vmem:[%s3717 + $0xd8] sm:$0xff]
    %v3746 = vld [vmem:[%s3717 + $0xe0] sm:$0xff]
    %v3747 = vld [vmem:[%s3717 + $0xe8] sm:$0xff]
    %v3748 = vld [vmem:[%s3717 + $0xf0] sm:$0xff]
    %v3749 = vld [vmem:[%s3717 + $0xf8] sm:$0xff]
    %v3750 = vld [vmem:[%s3717 + $0x100] sm:$0xff]
    %v3751 = vld [vmem:[%s3717 + $0x108] sm:$0xff]
    %v3752 = vld [vmem:[%s3717 + $0x110] sm:$0xff]
    %v3753 = vld [vmem:[%s3717 + $0x118] sm:$0xff]
    %v3754 = vld [vmem:[%s3717 + $0x120] sm:$0xff]
    %v3755 = vld [vmem:[%s3717 + $0x128] sm:$0xff]
    %v3756 = vld [vmem:[%s3717 + $0x130] sm:$0xff]
    %v3757 = vld [vmem:[%s3717 + $0x138] sm:$0xff]
    %v3758 = vld [vmem:[%s3717 + $0x140] sm:$0xff]
    %v3759 = vld [vmem:[%s3717 + $0x148] sm:$0xff]
    %v3760 = vld [vmem:[%s3717 + $0x150] sm:$0xff]
    %v3761 = vld [vmem:[%s3717 + $0x158] sm:$0xff]
    %v3762 = vld [vmem:[%s3717 + $0x160] sm:$0xff]
    %v3763 = vld [vmem:[%s3717 + $0x168] sm:$0xff]
    %v3764 = vrot.slane %v2693, 2
    %v3765 = vrot.slane %v2702, 1
    %v3766 = vsel %vm2809, %v3765, %v3764
    %v3767 = vrot.slane %v2694, 2
    %v3768 = vrot.slane %v2703, 1
    %v3769 = vsel %vm2809, %v3768, %v3767
    %v3770 = vrot.slane %v2695, 2
    %v3771 = vrot.slane %v2704, 1
    %v3772 = vsel %vm2809, %v3771, %v3770
    %v3775 = vsel %vm2659, %v3772, 0
    %3777 = vmatprep.subr.mxu0 0.0
    %3778 = vmatpush1.msra.mxu0 %v3718
    %3779 = vmatprep.subr.mxu0 0.0
    %3780 = vmatpush1.msra.mxu0 %v3719
    %3781 = vmatprep.subr.mxu0 0.0
    %3782 = vmatpush1.msra.mxu0 %v3720
    %3783 = vmatprep.subr.mxu0 0.0
    %3784 = vmatpush1.msra.mxu0 %v3721
    %3785 = vmatprep.subr.mxu0 0.0
    %3786 = vmatpush1.msra.mxu0 %v3722
    %3787 = vmatprep.subr.mxu0 0.0
    %3788 = vmatpush1.msra.mxu0 %v3723
    %3789 = vmatprep.subr.mxu0 0.0
    %3790 = vmatpush1.msra.mxu0 %v3724
    %3791 = vmatprep.subr.mxu0 0.0
    %3792 = vmatpush1.msra.mxu0 %v3725
    %3793 = vmatprep.subr.mxu0 0.0
    %3794 = vmatpush1.msra.mxu0 %v3726
    %3795 = vmatprep.subr.mxu0 0.0
    %3796 = vmatpush1.msra.mxu0 %v3727
    %3797 = vmatprep.subr.mxu0 0.0
    %3798 = vmatpush1.msra.mxu0 %v3728
    %3799 = vmatprep.subr.mxu0 0.0
    %3800 = vmatpush1.msra.mxu0 %v3729
    %3801 = vmatprep.subr.mxu0 0.0
    %3802 = vmatpush1.msra.mxu0 %v3730
    %3803 = vmatprep.subr.mxu0 0.0
    %3804 = vmatpush1.msra.mxu0 %v3731
    %3805 = vmatprep.subr.mxu0 0.0
    %3806 = vmatpush1.msra.mxu0 %v3732
    %3807 = vmatprep.subr.mxu0 0.0
    %3808 = vmatpush1.msra.mxu0 %v3733
    %3809 = vmatprep.subr.mxu0 0.0
    %3810 = vmatpush1.msra.mxu0 %v3734
    %3811 = vmatprep.subr.mxu0 0.0
    %3812 = vmatpush1.msra.mxu0 %v3735
    %3813 = vmatprep.subr.mxu0 0.0
    %3814 = vmatpush1.msra.mxu0 %v3736
    %3815 = vmatprep.subr.mxu0 0.0
    %3816 = vmatpush1.msra.mxu0 %v3737
    %3817 = vmatprep.subr.mxu0 0.0
    %3818 = vmatpush1.msra.mxu0 %v3738
    %3819 = vmatprep.subr.mxu0 0.0
    %3820 = vmatpush1.msra.mxu0 %v3739
    %3821 = vmatprep.subr.mxu0 0.0
    %3822 = vmatpush1.msra.mxu0 %v3740
    %3823 = vmatprep.subr.mxu0 0.0
    %3824 = vmatpush1.msra.mxu0 %v3741
    %3825 = vmatprep.subr.mxu0 0.0
    %3826 = vmatpush1.msra.mxu0 %v3742
    %3827 = vmatprep.subr.mxu0 0.0
    %3828 = vmatpush1.msra.mxu0 %v3743
    %3829 = vmatprep.subr.mxu0 0.0
    %3830 = vmatpush1.msra.mxu0 %v3744
    %3831 = vmatprep.subr.mxu0 0.0
    %3832 = vmatpush1.msra.mxu0 %v3745
    %3833 = vmatprep.subr.mxu0 0.0
    %3834 = vmatpush1.msra.mxu0 %v3746
    %3835 = vmatprep.subr.mxu0 0.0
    %3836 = vmatpush1.msra.mxu0 %v3747
    %3837 = vmatprep.subr.mxu0 0.0
    %3838 = vmatpush1.msra.mxu0 %v3748
    %3839 = vmatprep.subr.mxu0 0.0
    %3840 = vmatpush1.msra.mxu0 %v3749
    %3841 = vmatprep.mubr.f32.mxu0 %v3769
    %3842 = vmatmul.mubr.f32.gmra.mrb[0].mxu0 %v3766
    %v3843 = vpop.f32.mrb[0].mxu0
    %v3844 = vadd.f32 0.0, %v3843
    %v3845 = vpop.f32.mrb[0].mxu0
    %3846 = vdwg.mxu0
    %3847 = vmatprep.subr.mxu0 0.0
    %3848 = vmatpush1.msra.mxu0 %v3750
    %3849 = vmatprep.subr.mxu0 0.0
    %3850 = vmatpush1.msra.mxu0 %v3751
    %3851 = vmatprep.subr.mxu0 0.0
    %3852 = vmatpush1.msra.mxu0 %v3752
    %3853 = vmatprep.subr.mxu0 0.0
    %3854 = vmatpush1.msra.mxu0 %v3753
    %3855 = vmatprep.subr.mxu0 0.0
    %3856 = vmatpush1.msra.mxu0 %v3754
    %3857 = vmatprep.subr.mxu0 0.0
    %3858 = vmatpush1.msra.mxu0 %v3755
    %3859 = vmatprep.subr.mxu0 0.0
    %3860 = vmatpush1.msra.mxu0 %v3756
    %3861 = vmatprep.subr.mxu0 0.0
    %3862 = vmatpush1.msra.mxu0 %v3757
    %3863 = vmatprep.subr.mxu0 0.0
    %3864 = vmatpush1.msra.mxu0 %v3758
    %3865 = vmatprep.subr.mxu0 0.0
    %3866 = vmatpush1.msra.mxu0 %v3759
    %3867 = vmatprep.subr.mxu0 0.0
    %3868 = vmatpush1.msra.mxu0 %v3760
    %3869 = vmatprep.subr.mxu0 0.0
    %3870 = vmatpush1.msra.mxu0 %v3761
    %3871 = vmatprep.subr.mxu0 0.0
    %3872 = vmatpush1.msra.mxu0 %v3762
    %3873 = vmatprep.subr.mxu0 0.0
    %3874 = vmatpush1.msra.mxu0 %v3763
    %3875 = vmatprep.subr.mxu0 0.0
    %3876 = vmatpush1.msra.mxu0 0.0
    %3877 = vmatprep.subr.mxu0 0.0
    %3878 = vmatpush1.msra.mxu0 0.0
    %3879 = vmatprep.subr.mxu0 0.0
    %3880 = vmatpush1.msra.mxu0 0.0
    %3881 = vmatprep.subr.mxu0 0.0
    %3882 = vmatpush1.msra.mxu0 0.0
    %3883 = vmatprep.subr.mxu0 0.0
    %3884 = vmatpush1.msra.mxu0 0.0
    %3885 = vmatprep.subr.mxu0 0.0
    %3886 = vmatpush1.msra.mxu0 0.0
    %3887 = vmatprep.subr.mxu0 0.0
    %3888 = vmatpush1.msra.mxu0 0.0
    %3889 = vmatprep.subr.mxu0 0.0
    %3890 = vmatpush1.msra.mxu0 0.0
    %3891 = vmatprep.subr.mxu0 0.0
    %3892 = vmatpush1.msra.mxu0 0.0
    %3893 = vmatprep.subr.mxu0 0.0
    %3894 = vmatpush1.msra.mxu0 0.0
    %3895 = vmatprep.subr.mxu0 0.0
    %3896 = vmatpush1.msra.mxu0 0.0
    %3897 = vmatprep.subr.mxu0 0.0
    %3898 = vmatpush1.msra.mxu0 0.0
    %3899 = vmatprep.subr.mxu0 0.0
    %3900 = vmatpush1.msra.mxu0 0.0
    %3901 = vmatprep.subr.mxu0 0.0
    %3902 = vmatpush1.msra.mxu0 0.0
    %3903 = vmatprep.subr.mxu0 0.0
    %3904 = vmatpush1.msra.mxu0 0.0
    %3905 = vmatprep.subr.mxu0 0.0
    %3906 = vmatpush1.msra.mxu0 0.0
    %3907 = vmatprep.subr.mxu0 0.0
    %3908 = vmatpush1.msra.mxu0 0.0
    %3909 = vmatprep.subr.mxu0 0.0
    %3910 = vmatpush1.msra.mxu0 0.0
    %3911 = vmatprep.mubr.f32.mxu0 0.0
    %3912 = vmatmul.mubr.f32.gmra.mrb[0].mxu0 %v3775
    %v3913 = vpop.f32.mrb[0].mxu0
    %v3914 = vadd.f32 %v3844, %v3913
    %v3915 = vpop.f32.mrb[0].mxu0
    %3916 = vdwg.mxu0
    %v3917 = vadd.f32 %v3716, %v3914
    %s3918 = scalar_lea.vmem %s5, 2208
    %v3919 = vld [vmem:[%s3918] sm:$0xff]
    %v3920 = vld [vmem:[%s3918 + $0x8] sm:$0xff]
    %v3921 = vld [vmem:[%s3918 + $0x10] sm:$0xff]
    %v3922 = vld [vmem:[%s3918 + $0x18] sm:$0xff]
    %v3923 = vld [vmem:[%s3918 + $0x20] sm:$0xff]
    %v3924 = vld [vmem:[%s3918 + $0x28] sm:$0xff]
    %v3925 = vld [vmem:[%s3918 + $0x30] sm:$0xff]
    %v3926 = vld [vmem:[%s3918 + $0x38] sm:$0xff]
    %v3927 = vld [vmem:[%s3918 + $0x40] sm:$0xff]
    %v3928 = vld [vmem:[%s3918 + $0x48] sm:$0xff]
    %v3929 = vld [vmem:[%s3918 + $0x50] sm:$0xff]
    %v3930 = vld [vmem:[%s3918 + $0x58] sm:$0xff]
    %v3931 = vld [vmem:[%s3918 + $0x60] sm:$0xff]
    %v3932 = vld [vmem:[%s3918 + $0x68] sm:$0xff]
    %v3933 = vld [vmem:[%s3918 + $0x70] sm:$0xff]
    %v3934 = vld [vmem:[%s3918 + $0x78] sm:$0xff]
    %v3935 = vld [vmem:[%s3918 + $0x80] sm:$0xff]
    %v3936 = vld [vmem:[%s3918 + $0x88] sm:$0xff]
    %v3937 = vld [vmem:[%s3918 + $0x90] sm:$0xff]
    %v3938 = vld [vmem:[%s3918 + $0x98] sm:$0xff]
    %v3939 = vld [vmem:[%s3918 + $0xa0] sm:$0xff]
    %v3940 = vld [vmem:[%s3918 + $0xa8] sm:$0xff]
    %v3941 = vld [vmem:[%s3918 + $0xb0] sm:$0xff]
    %v3942 = vld [vmem:[%s3918 + $0xb8] sm:$0xff]
    %v3943 = vld [vmem:[%s3918 + $0xc0] sm:$0xff]
    %v3944 = vld [vmem:[%s3918 + $0xc8] sm:$0xff]
    %v3945 = vld [vmem:[%s3918 + $0xd0] sm:$0xff]
    %v3946 = vld [vmem:[%s3918 + $0xd8] sm:$0xff]
    %v3947 = vld [vmem:[%s3918 + $0xe0] sm:$0xff]
    %v3948 = vld [vmem:[%s3918 + $0xe8] sm:$0xff]
    %v3949 = vld [vmem:[%s3918 + $0xf0] sm:$0xff]
    %v3950 = vld [vmem:[%s3918 + $0xf8] sm:$0xff]
    %v3951 = vld [vmem:[%s3918 + $0x100] sm:$0xff]
    %v3952 = vld [vmem:[%s3918 + $0x108] sm:$0xff]
    %v3953 = vld [vmem:[%s3918 + $0x110] sm:$0xff]
    %v3954 = vld [vmem:[%s3918 + $0x118] sm:$0xff]
    %v3955 = vld [vmem:[%s3918 + $0x120] sm:$0xff]
    %v3956 = vld [vmem:[%s3918 + $0x128] sm:$0xff]
    %v3957 = vld [vmem:[%s3918 + $0x130] sm:$0xff]
    %v3958 = vld [vmem:[%s3918 + $0x138] sm:$0xff]
    %v3959 = vld [vmem:[%s3918 + $0x140] sm:$0xff]
    %v3960 = vld [vmem:[%s3918 + $0x148] sm:$0xff]
    %v3961 = vld [vmem:[%s3918 + $0x150] sm:$0xff]
    %v3962 = vld [vmem:[%s3918 + $0x158] sm:$0xff]
    %v3963 = vld [vmem:[%s3918 + $0x160] sm:$0xff]
    %v3964 = vld [vmem:[%s3918 + $0x168] sm:$0xff]
    %v3965 = vrot.slane %v2693, 4
    %v3966 = vrot.slane %v2702, 3
    %v3967 = vsel %vm2809, %v3966, %v3965
    %v3968 = vrot.slane %v2694, 4
    %v3969 = vrot.slane %v2703, 3
    %v3970 = vsel %vm2809, %v3969, %v3968
    %v3971 = vrot.slane %v2695, 4
    %v3972 = vrot.slane %v2704, 3
    %v3973 = vsel %vm2809, %v3972, %v3971
    %v3976 = vsel %vm2659, %v3973, 0
    %3978 = vmatprep.subr.mxu0 0.0
    %3979 = vmatpush1.msra.mxu0 %v3919
    %3980 = vmatprep.subr.mxu0 0.0
    %3981 = vmatpush1.msra.mxu0 %v3920
    %3982 = vmatprep.subr.mxu0 0.0
    %3983 = vmatpush1.msra.mxu0 %v3921
    %3984 = vmatprep.subr.mxu0 0.0
    %3985 = vmatpush1.msra.mxu0 %v3922
    %3986 = vmatprep.subr.mxu0 0.0
    %3987 = vmatpush1.msra.mxu0 %v3923
    %3988 = vmatprep.subr.mxu0 0.0
    %3989 = vmatpush1.msra.mxu0 %v3924
    %3990 = vmatprep.subr.mxu0 0.0
    %3991 = vmatpush1.msra.mxu0 %v3925
    %3992 = vmatprep.subr.mxu0 0.0
    %3993 = vmatpush1.msra.mxu0 %v3926
    %3994 = vmatprep.subr.mxu0 0.0
    %3995 = vmatpush1.msra.mxu0 %v3927
    %3996 = vmatprep.subr.mxu0 0.0
    %3997 = vmatpush1.msra.mxu0 %v3928
    %3998 = vmatprep.subr.mxu0 0.0
    %3999 = vmatpush1.msra.mxu0 %v3929
    %4000 = vmatprep.subr.mxu0 0.0
    %4001 = vmatpush1.msra.mxu0 %v3930
    %4002 = vmatprep.subr.mxu0 0.0
    %4003 = vmatpush1.msra.mxu0 %v3931
    %4004 = vmatprep.subr.mxu0 0.0
    %4005 = vmatpush1.msra.mxu0 %v3932
    %4006 = vmatprep.subr.mxu0 0.0
    %4007 = vmatpush1.msra.mxu0 %v3933
    %4008 = vmatprep.subr.mxu0 0.0
    %4009 = vmatpush1.msra.mxu0 %v3934
    %4010 = vmatprep.subr.mxu0 0.0
    %4011 = vmatpush1.msra.mxu0 %v3935
    %4012 = vmatprep.subr.mxu0 0.0
    %4013 = vmatpush1.msra.mxu0 %v3936
    %4014 = vmatprep.subr.mxu0 0.0
    %4015 = vmatpush1.msra.mxu0 %v3937
    %4016 = vmatprep.subr.mxu0 0.0
    %4017 = vmatpush1.msra.mxu0 %v3938
    %4018 = vmatprep.subr.mxu0 0.0
    %4019 = vmatpush1.msra.mxu0 %v3939
    %4020 = vmatprep.subr.mxu0 0.0
    %4021 = vmatpush1.msra.mxu0 %v3940
    %4022 = vmatprep.subr.mxu0 0.0
    %4023 = vmatpush1.msra.mxu0 %v3941
    %4024 = vmatprep.subr.mxu0 0.0
    %4025 = vmatpush1.msra.mxu0 %v3942
    %4026 = vmatprep.subr.mxu0 0.0
    %4027 = vmatpush1.msra.mxu0 %v3943
    %4028 = vmatprep.subr.mxu0 0.0
    %4029 = vmatpush1.msra.mxu0 %v3944
    %4030 = vmatprep.subr.mxu0 0.0
    %4031 = vmatpush1.msra.mxu0 %v3945
    %4032 = vmatprep.subr.mxu0 0.0
    %4033 = vmatpush1.msra.mxu0 %v3946
    %4034 = vmatprep.subr.mxu0 0.0
    %4035 = vmatpush1.msra.mxu0 %v3947
    %4036 = vmatprep.subr.mxu0 0.0
    %4037 = vmatpush1.msra.mxu0 %v3948
    %4038 = vmatprep.subr.mxu0 0.0
    %4039 = vmatpush1.msra.mxu0 %v3949
    %4040 = vmatprep.subr.mxu0 0.0
    %4041 = vmatpush1.msra.mxu0 %v3950
    %4042 = vmatprep.mubr.f32.mxu0 %v3970
    %4043 = vmatmul.mubr.f32.gmra.mrb[0].mxu0 %v3967
    %v4044 = vpop.f32.mrb[0].mxu0
    %v4045 = vadd.f32 0.0, %v4044
    %v4046 = vpop.f32.mrb[0].mxu0
    %4047 = vdwg.mxu0
    %4048 = vmatprep.subr.mxu0 0.0
    %4049 = vmatpush1.msra.mxu0 %v3951
    %4050 = vmatprep.subr.mxu0 0.0
    %4051 = vmatpush1.msra.mxu0 %v3952
    %4052 = vmatprep.subr.mxu0 0.0
    %4053 = vmatpush1.msra.mxu0 %v3953
    %4054 = vmatprep.subr.mxu0 0.0
    %4055 = vmatpush1.msra.mxu0 %v3954
    %4056 = vmatprep.subr.mxu0 0.0
    %4057 = vmatpush1.msra.mxu0 %v3955
    %4058 = vmatprep.subr.mxu0 0.0
    %4059 = vmatpush1.msra.mxu0 %v3956
    %4060 = vmatprep.subr.mxu0 0.0
    %4061 = vmatpush1.msra.mxu0 %v3957
    %4062 = vmatprep.subr.mxu0 0.0
    %4063 = vmatpush1.msra.mxu0 %v3958
    %4064 = vmatprep.subr.mxu0 0.0
    %4065 = vmatpush1.msra.mxu0 %v3959
    %4066 = vmatprep.subr.mxu0 0.0
    %4067 = vmatpush1.msra.mxu0 %v3960
    %4068 = vmatprep.subr.mxu0 0.0
    %4069 = vmatpush1.msra.mxu0 %v3961
    %4070 = vmatprep.subr.mxu0 0.0
    %4071 = vmatpush1.msra.mxu0 %v3962
    %4072 = vmatprep.subr.mxu0 0.0
    %4073 = vmatpush1.msra.mxu0 %v3963
    %4074 = vmatprep.subr.mxu0 0.0
    %4075 = vmatpush1.msra.mxu0 %v3964
    %4076 = vmatprep.subr.mxu0 0.0
    %4077 = vmatpush1.msra.mxu0 0.0
    %4078 = vmatprep.subr.mxu0 0.0
    %4079 = vmatpush1.msra.mxu0 0.0
    %4080 = vmatprep.subr.mxu0 0.0
    %4081 = vmatpush1.msra.mxu0 0.0
    %4082 = vmatprep.subr.mxu0 0.0
    %4083 = vmatpush1.msra.mxu0 0.0
    %4084 = vmatprep.subr.mxu0 0.0
    %4085 = vmatpush1.msra.mxu0 0.0
    %4086 = vmatprep.subr.mxu0 0.0
    %4087 = vmatpush1.msra.mxu0 0.0
    %4088 = vmatprep.subr.mxu0 0.0
    %4089 = vmatpush1.msra.mxu0 0.0
    %4090 = vmatprep.subr.mxu0 0.0
    %4091 = vmatpush1.msra.mxu0 0.0
    %4092 = vmatprep.subr.mxu0 0.0
    %4093 = vmatpush1.msra.mxu0 0.0
    %4094 = vmatprep.subr.mxu0 0.0
    %4095 = vmatpush1.msra.mxu0 0.0
    %4096 = vmatprep.subr.mxu0 0.0
    %4097 = vmatpush1.msra.mxu0 0.0
    %4098 = vmatprep.subr.mxu0 0.0
    %4099 = vmatpush1.msra.mxu0 0.0
    %4100 = vmatprep.subr.mxu0 0.0
    %4101 = vmatpush1.msra.mxu0 0.0
    %4102 = vmatprep.subr.mxu0 0.0
    %4103 = vmatpush1.msra.mxu0 0.0
    %4104 = vmatprep.subr.mxu0 0.0
    %4105 = vmatpush1.msra.mxu0 0.0
    %4106 = vmatprep.subr.mxu0 0.0
    %4107 = vmatpush1.msra.mxu0 0.0
    %4108 = vmatprep.subr.mxu0 0.0
    %4109 = vmatpush1.msra.mxu0 0.0
    %4110 = vmatprep.subr.mxu0 0.0
    %4111 = vmatpush1.msra.mxu0 0.0
    %4112 = vmatprep.mubr.f32.mxu0 0.0
    %4113 = vmatmul.mubr.f32.gmra.mrb[0].mxu0 %v3976
    %v4114 = vpop.f32.mrb[0].mxu0
    %v4115 = vadd.f32 %v4045, %v4114
    %v4116 = vpop.f32.mrb[0].mxu0
    %4117 = vdwg.mxu0
    %v4118 = vadd.f32 %v3917, %v4115
    %s4119 = scalar_lea.vmem %s5, 2576
    %v4120 = vld [vmem:[%s4119] sm:$0xff]
    %v4121 = vld [vmem:[%s4119 + $0x8] sm:$0xff]
    %v4122 = vld [vmem:[%s4119 + $0x10] sm:$0xff]
    %v4123 = vld [vmem:[%s4119 + $0x18] sm:$0xff]
    %v4124 = vld [vmem:[%s4119 + $0x20] sm:$0xff]
    %v4125 = vld [vmem:[%s4119 + $0x28] sm:$0xff]
    %v4126 = vld [vmem:[%s4119 + $0x30] sm:$0xff]
    %v4127 = vld [vmem:[%s4119 + $0x38] sm:$0xff]
    %v4128 = vld [vmem:[%s4119 + $0x40] sm:$0xff]
    %v4129 = vld [vmem:[%s4119 + $0x48] sm:$0xff]
    %v4130 = vld [vmem:[%s4119 + $0x50] sm:$0xff]
    %v4131 = vld [vmem:[%s4119 + $0x58] sm:$0xff]
    %v4132 = vld [vmem:[%s4119 + $0x60] sm:$0xff]
    %v4133 = vld [vmem:[%s4119 + $0x68] sm:$0xff]
    %v4134 = vld [vmem:[%s4119 + $0x70] sm:$0xff]
    %v4135 = vld [vmem:[%s4119 + $0x78] sm:$0xff]
    %v4136 = vld [vmem:[%s4119 + $0x80] sm:$0xff]
    %v4137 = vld [vmem:[%s4119 + $0x88] sm:$0xff]
    %v4138 = vld [vmem:[%s4119 + $0x90] sm:$0xff]
    %v4139 = vld [vmem:[%s4119 + $0x98] sm:$0xff]
    %v4140 = vld [vmem:[%s4119 + $0xa0] sm:$0xff]
    %v4141 = vld [vmem:[%s4119 + $0xa8] sm:$0xff]
    %v4142 = vld [vmem:[%s4119 + $0xb0] sm:$0xff]
    %v4143 = vld [vmem:[%s4119 + $0xb8] sm:$0xff]
    %v4144 = vld [vmem:[%s4119 + $0xc0] sm:$0xff]
    %v4145 = vld [vmem:[%s4119 + $0xc8] sm:$0xff]
    %v4146 = vld [vmem:[%s4119 + $0xd0] sm:$0xff]
    %v4147 = vld [vmem:[%s4119 + $0xd8] sm:$0xff]
    %v4148 = vld [vmem:[%s4119 + $0xe0] sm:$0xff]
    %v4149 = vld [vmem:[%s4119 + $0xe8] sm:$0xff]
    %v4150 = vld [vmem:[%s4119 + $0xf0] sm:$0xff]
    %v4151 = vld [vmem:[%s4119 + $0xf8] sm:$0xff]
    %v4152 = vld [vmem:[%s4119 + $0x100] sm:$0xff]
    %v4153 = vld [vmem:[%s4119 + $0x108] sm:$0xff]
    %v4154 = vld [vmem:[%s4119 + $0x110] sm:$0xff]
    %v4155 = vld [vmem:[%s4119 + $0x118] sm:$0xff]
    %v4156 = vld [vmem:[%s4119 + $0x120] sm:$0xff]
    %v4157 = vld [vmem:[%s4119 + $0x128] sm:$0xff]
    %v4158 = vld [vmem:[%s4119 + $0x130] sm:$0xff]
    %v4159 = vld [vmem:[%s4119 + $0x138] sm:$0xff]
    %v4160 = vld [vmem:[%s4119 + $0x140] sm:$0xff]
    %v4161 = vld [vmem:[%s4119 + $0x148] sm:$0xff]
    %v4162 = vld [vmem:[%s4119 + $0x150] sm:$0xff]
    %v4163 = vld [vmem:[%s4119 + $0x158] sm:$0xff]
    %v4164 = vld [vmem:[%s4119 + $0x160] sm:$0xff]
    %v4165 = vld [vmem:[%s4119 + $0x168] sm:$0xff]
    %v4166 = vrot.slane %v2693, 6
    %v4167 = vrot.slane %v2702, 5
    %v4168 = vsel %vm2809, %v4167, %v4166
    %v4169 = vrot.slane %v2694, 6
    %v4170 = vrot.slane %v2703, 5
    %v4171 = vsel %vm2809, %v4170, %v4169
    %v4172 = vrot.slane %v2695, 6
    %v4173 = vrot.slane %v2704, 5
    %v4174 = vsel %vm2809, %v4173, %v4172
    %v4177 = vsel %vm2659, %v4174, 0
    %4179 = vmatprep.subr.mxu0 0.0
    %4180 = vmatpush1.msra.mxu0 %v4120
    %4181 = vmatprep.subr.mxu0 0.0
    %4182 = vmatpush1.msra.mxu0 %v4121
    %4183 = vmatprep.subr.mxu0 0.0
    %4184 = vmatpush1.msra.mxu0 %v4122
    %4185 = vmatprep.subr.mxu0 0.0
    %4186 = vmatpush1.msra.mxu0 %v4123
    %4187 = vmatprep.subr.mxu0 0.0
    %4188 = vmatpush1.msra.mxu0 %v4124
    %4189 = vmatprep.subr.mxu0 0.0
    %4190 = vmatpush1.msra.mxu0 %v4125
    %4191 = vmatprep.subr.mxu0 0.0
    %4192 = vmatpush1.msra.mxu0 %v4126
    %4193 = vmatprep.subr.mxu0 0.0
    %4194 = vmatpush1.msra.mxu0 %v4127
    %4195 = vmatprep.subr.mxu0 0.0
    %4196 = vmatpush1.msra.mxu0 %v4128
    %4197 = vmatprep.subr.mxu0 0.0
    %4198 = vmatpush1.msra.mxu0 %v4129
    %4199 = vmatprep.subr.mxu0 0.0
    %4200 = vmatpush1.msra.mxu0 %v4130
    %4201 = vmatprep.subr.mxu0 0.0
    %4202 = vmatpush1.msra.mxu0 %v4131
    %4203 = vmatprep.subr.mxu0 0.0
    %4204 = vmatpush1.msra.mxu0 %v4132
    %4205 = vmatprep.subr.mxu0 0.0
    %4206 = vmatpush1.msra.mxu0 %v4133
    %4207 = vmatprep.subr.mxu0 0.0
    %4208 = vmatpush1.msra.mxu0 %v4134
    %4209 = vmatprep.subr.mxu0 0.0
    %4210 = vmatpush1.msra.mxu0 %v4135
    %4211 = vmatprep.subr.mxu0 0.0
    %4212 = vmatpush1.msra.mxu0 %v4136
    %4213 = vmatprep.subr.mxu0 0.0
    %4214 = vmatpush1.msra.mxu0 %v4137
    %4215 = vmatprep.subr.mxu0 0.0
    %4216 = vmatpush1.msra.mxu0 %v4138
    %4217 = vmatprep.subr.mxu0 0.0
    %4218 = vmatpush1.msra.mxu0 %v4139
    %4219 = vmatprep.subr.mxu0 0.0
    %4220 = vmatpush1.msra.mxu0 %v4140
    %4221 = vmatprep.subr.mxu0 0.0
    %4222 = vmatpush1.msra.mxu0 %v4141
    %4223 = vmatprep.subr.mxu0 0.0
    %4224 = vmatpush1.msra.mxu0 %v4142
    %4225 = vmatprep.subr.mxu0 0.0
    %4226 = vmatpush1.msra.mxu0 %v4143
    %4227 = vmatprep.subr.mxu0 0.0
    %4228 = vmatpush1.msra.mxu0 %v4144
    %4229 = vmatprep.subr.mxu0 0.0
    %4230 = vmatpush1.msra.mxu0 %v4145
    %4231 = vmatprep.subr.mxu0 0.0
    %4232 = vmatpush1.msra.mxu0 %v4146
    %4233 = vmatprep.subr.mxu0 0.0
    %4234 = vmatpush1.msra.mxu0 %v4147
    %4235 = vmatprep.subr.mxu0 0.0
    %4236 = vmatpush1.msra.mxu0 %v4148
    %4237 = vmatprep.subr.mxu0 0.0
    %4238 = vmatpush1.msra.mxu0 %v4149
    %4239 = vmatprep.subr.mxu0 0.0
    %4240 = vmatpush1.msra.mxu0 %v4150
    %4241 = vmatprep.subr.mxu0 0.0
    %4242 = vmatpush1.msra.mxu0 %v4151
    %4243 = vmatprep.mubr.f32.mxu0 %v4171
    %4244 = vmatmul.mubr.f32.gmra.mrb[0].mxu0 %v4168
    %v4245 = vpop.f32.mrb[0].mxu0
    %v4246 = vadd.f32 0.0, %v4245
    %v4247 = vpop.f32.mrb[0].mxu0
    %4248 = vdwg.mxu0
    %4249 = vmatprep.subr.mxu0 0.0
    %4250 = vmatpush1.msra.mxu0 %v4152
    %4251 = vmatprep.subr.mxu0 0.0
    %4252 = vmatpush1.msra.mxu0 %v4153
    %4253 = vmatprep.subr.mxu0 0.0
    %4254 = vmatpush1.msra.mxu0 %v4154
    %4255 = vmatprep.subr.mxu0 0.0
    %4256 = vmatpush1.msra.mxu0 %v4155
    %4257 = vmatprep.subr.mxu0 0.0
    %4258 = vmatpush1.msra.mxu0 %v4156
    %4259 = vmatprep.subr.mxu0 0.0
    %4260 = vmatpush1.msra.mxu0 %v4157
    %4261 = vmatprep.subr.mxu0 0.0
    %4262 = vmatpush1.msra.mxu0 %v4158
    %4263 = vmatprep.subr.mxu0 0.0
    %4264 = vmatpush1.msra.mxu0 %v4159
    %4265 = vmatprep.subr.mxu0 0.0
    %4266 = vmatpush1.msra.mxu0 %v4160
    %4267 = vmatprep.subr.mxu0 0.0
    %4268 = vmatpush1.msra.mxu0 %v4161
    %4269 = vmatprep.subr.mxu0 0.0
    %4270 = vmatpush1.msra.mxu0 %v4162
    %4271 = vmatprep.subr.mxu0 0.0
    %4272 = vmatpush1.msra.mxu0 %v4163
    %4273 = vmatprep.subr.mxu0 0.0
    %4274 = vmatpush1.msra.mxu0 %v4164
    %4275 = vmatprep.subr.mxu0 0.0
    %4276 = vmatpush1.msra.mxu0 %v4165
    %4277 = vmatprep.subr.mxu0 0.0
    %4278 = vmatpush1.msra.mxu0 0.0
    %4279 = vmatprep.subr.mxu0 0.0
    %4280 = vmatpush1.msra.mxu0 0.0
    %4281 = vmatprep.subr.mxu0 0.0
    %4282 = vmatpush1.msra.mxu0 0.0
    %4283 = vmatprep.subr.mxu0 0.0
    %4284 = vmatpush1.msra.mxu0 0.0
    %4285 = vmatprep.subr.mxu0 0.0
    %4286 = vmatpush1.msra.mxu0 0.0
    %4287 = vmatprep.subr.mxu0 0.0
    %4288 = vmatpush1.msra.mxu0 0.0
    %4289 = vmatprep.subr.mxu0 0.0
    %4290 = vmatpush1.msra.mxu0 0.0
    %4291 = vmatprep.subr.mxu0 0.0
    %4292 = vmatpush1.msra.mxu0 0.0
    %4293 = vmatprep.subr.mxu0 0.0
    %4294 = vmatpush1.msra.mxu0 0.0
    %4295 = vmatprep.subr.mxu0 0.0
    %4296 = vmatpush1.msra.mxu0 0.0
    %4297 = vmatprep.subr.mxu0 0.0
    %4298 = vmatpush1.msra.mxu0 0.0
    %4299 = vmatprep.subr.mxu0 0.0
    %4300 = vmatpush1.msra.mxu0 0.0
    %4301 = vmatprep.subr.mxu0 0.0
    %4302 = vmatpush1.msra.mxu0 0.0
    %4303 = vmatprep.subr.mxu0 0.0
    %4304 = vmatpush1.msra.mxu0 0.0
    %4305 = vmatprep.subr.mxu0 0.0
    %4306 = vmatpush1.msra.mxu0 0.0
    %4307 = vmatprep.subr.mxu0 0.0
    %4308 = vmatpush1.msra.mxu0 0.0
    %4309 = vmatprep.subr.mxu0 0.0
    %4310 = vmatpush1.msra.mxu0 0.0
    %4311 = vmatprep.subr.mxu0 0.0
    %4312 = vmatpush1.msra.mxu0 0.0
    %4313 = vmatprep.mubr.f32.mxu0 0.0
    %4314 = vmatmul.mubr.f32.gmra.mrb[0].mxu0 %v4177
    %v4315 = vpop.f32.mrb[0].mxu0
    %v4316 = vadd.f32 %v4246, %v4315
    %v4317 = vpop.f32.mrb[0].mxu0
    %4318 = vdwg.mxu0
    %v4319 = vadd.f32 %v4118, %v4316
    %s4320 = scalar_lea.vmem %s5, 2944
    %v4321 = vld [vmem:[%s4320] sm:$0xff]
    %v4322 = vld [vmem:[%s4320 + $0x8] sm:$0xff]
    %v4323 = vld [vmem:[%s4320 + $0x10] sm:$0xff]
    %v4324 = vld [vmem:[%s4320 + $0x18] sm:$0xff]
    %v4325 = vld [vmem:[%s4320 + $0x20] sm:$0xff]
    %v4326 = vld [vmem:[%s4320 + $0x28] sm:$0xff]
    %v4327 = vld [vmem:[%s4320 + $0x30] sm:$0xff]
    %v4328 = vld [vmem:[%s4320 + $0x38] sm:$0xff]
    %v4329 = vld [vmem:[%s4320 + $0x40] sm:$0xff]
    %v4330 = vld [vmem:[%s4320 + $0x48] sm:$0xff]
    %v4331 = vld [vmem:[%s4320 + $0x50] sm:$0xff]
    %v4332 = vld [vmem:[%s4320 + $0x58] sm:$0xff]
    %v4333 = vld [vmem:[%s4320 + $0x60] sm:$0xff]
    %v4334 = vld [vmem:[%s4320 + $0x68] sm:$0xff]
    %v4335 = vld [vmem:[%s4320 + $0x70] sm:$0xff]
    %v4336 = vld [vmem:[%s4320 + $0x78] sm:$0xff]
    %v4337 = vld [vmem:[%s4320 + $0x80] sm:$0xff]
    %v4338 = vld [vmem:[%s4320 + $0x88] sm:$0xff]
    %v4339 = vld [vmem:[%s4320 + $0x90] sm:$0xff]
    %v4340 = vld [vmem:[%s4320 + $0x98] sm:$0xff]
    %v4341 = vld [vmem:[%s4320 + $0xa0] sm:$0xff]
    %v4342 = vld [vmem:[%s4320 + $0xa8] sm:$0xff]
    %v4343 = vld [vmem:[%s4320 + $0xb0] sm:$0xff]
    %v4344 = vld [vmem:[%s4320 + $0xb8] sm:$0xff]
    %v4345 = vld [vmem:[%s4320 + $0xc0] sm:$0xff]
    %v4346 = vld [vmem:[%s4320 + $0xc8] sm:$0xff]
    %v4347 = vld [vmem:[%s4320 + $0xd0] sm:$0xff]
    %v4348 = vld [vmem:[%s4320 + $0xd8] sm:$0xff]
    %v4349 = vld [vmem:[%s4320 + $0xe0] sm:$0xff]
    %v4350 = vld [vmem:[%s4320 + $0xe8] sm:$0xff]
    %v4351 = vld [vmem:[%s4320 + $0xf0] sm:$0xff]
    %v4352 = vld [vmem:[%s4320 + $0xf8] sm:$0xff]
    %v4353 = vld [vmem:[%s4320 + $0x100] sm:$0xff]
    %v4354 = vld [vmem:[%s4320 + $0x108] sm:$0xff]
    %v4355 = vld [vmem:[%s4320 + $0x110] sm:$0xff]
    %v4356 = vld [vmem:[%s4320 + $0x118] sm:$0xff]
    %v4357 = vld [vmem:[%s4320 + $0x120] sm:$0xff]
    %v4358 = vld [vmem:[%s4320 + $0x128] sm:$0xff]
    %v4359 = vld [vmem:[%s4320 + $0x130] sm:$0xff]
    %v4360 = vld [vmem:[%s4320 + $0x138] sm:$0xff]
    %v4361 = vld [vmem:[%s4320 + $0x140] sm:$0xff]
    %v4362 = vld [vmem:[%s4320 + $0x148] sm:$0xff]
    %v4363 = vld [vmem:[%s4320 + $0x150] sm:$0xff]
    %v4364 = vld [vmem:[%s4320 + $0x158] sm:$0xff]
    %v4365 = vld [vmem:[%s4320 + $0x160] sm:$0xff]
    %v4366 = vld [vmem:[%s4320 + $0x168] sm:$0xff]
    %v4373 = vrot.slane %v2705, 7
    %v4374 = vsel %vm2809, %v4373, %v2696
    %v4375 = vrot.slane %v2706, 7
    %v4376 = vsel %vm2809, %v4375, %v2697
    %v4377 = vrot.slane %v2707, 7
    %v4378 = vsel %vm2809, %v4377, %v2698
    %v4381 = vsel %vm2659, %v4378, 0
    %4383 = vmatprep.subr.mxu0 0.0
    %4384 = vmatpush1.msra.mxu0 %v4321
    %4385 = vmatprep.subr.mxu0 0.0
    %4386 = vmatpush1.msra.mxu0 %v4322
    %4387 = vmatprep.subr.mxu0 0.0
    %4388 = vmatpush1.msra.mxu0 %v4323
    %4389 = vmatprep.subr.mxu0 0.0
    %4390 = vmatpush1.msra.mxu0 %v4324
    %4391 = vmatprep.subr.mxu0 0.0
    %4392 = vmatpush1.msra.mxu0 %v4325
    %4393 = vmatprep.subr.mxu0 0.0
    %4394 = vmatpush1.msra.mxu0 %v4326
    %4395 = vmatprep.subr.mxu0 0.0
    %4396 = vmatpush1.msra.mxu0 %v4327
    %4397 = vmatprep.subr.mxu0 0.0
    %4398 = vmatpush1.msra.mxu0 %v4328
    %4399 = vmatprep.subr.mxu0 0.0
    %4400 = vmatpush1.msra.mxu0 %v4329
    %4401 = vmatprep.subr.mxu0 0.0
    %4402 = vmatpush1.msra.mxu0 %v4330
    %4403 = vmatprep.subr.mxu0 0.0
    %4404 = vmatpush1.msra.mxu0 %v4331
    %4405 = vmatprep.subr.mxu0 0.0
    %4406 = vmatpush1.msra.mxu0 %v4332
    %4407 = vmatprep.subr.mxu0 0.0
    %4408 = vmatpush1.msra.mxu0 %v4333
    %4409 = vmatprep.subr.mxu0 0.0
    %4410 = vmatpush1.msra.mxu0 %v4334
    %4411 = vmatprep.subr.mxu0 0.0
    %4412 = vmatpush1.msra.mxu0 %v4335
    %4413 = vmatprep.subr.mxu0 0.0
    %4414 = vmatpush1.msra.mxu0 %v4336
    %4415 = vmatprep.subr.mxu0 0.0
    %4416 = vmatpush1.msra.mxu0 %v4337
    %4417 = vmatprep.subr.mxu0 0.0
    %4418 = vmatpush1.msra.mxu0 %v4338
    %4419 = vmatprep.subr.mxu0 0.0
    %4420 = vmatpush1.msra.mxu0 %v4339
    %4421 = vmatprep.subr.mxu0 0.0
    %4422 = vmatpush1.msra.mxu0 %v4340
    %4423 = vmatprep.subr.mxu0 0.0
    %4424 = vmatpush1.msra.mxu0 %v4341
    %4425 = vmatprep.subr.mxu0 0.0
    %4426 = vmatpush1.msra.mxu0 %v4342
    %4427 = vmatprep.subr.mxu0 0.0
    %4428 = vmatpush1.msra.mxu0 %v4343
    %4429 = vmatprep.subr.mxu0 0.0
    %4430 = vmatpush1.msra.mxu0 %v4344
    %4431 = vmatprep.subr.mxu0 0.0
    %4432 = vmatpush1.msra.mxu0 %v4345
    %4433 = vmatprep.subr.mxu0 0.0
    %4434 = vmatpush1.msra.mxu0 %v4346
    %4435 = vmatprep.subr.mxu0 0.0
    %4436 = vmatpush1.msra.mxu0 %v4347
    %4437 = vmatprep.subr.mxu0 0.0
    %4438 = vmatpush1.msra.mxu0 %v4348
    %4439 = vmatprep.subr.mxu0 0.0
    %4440 = vmatpush1.msra.mxu0 %v4349
    %4441 = vmatprep.subr.mxu0 0.0
    %4442 = vmatpush1.msra.mxu0 %v4350
    %4443 = vmatprep.subr.mxu0 0.0
    %4444 = vmatpush1.msra.mxu0 %v4351
    %4445 = vmatprep.subr.mxu0 0.0
    %4446 = vmatpush1.msra.mxu0 %v4352
    %4447 = vmatprep.mubr.f32.mxu0 %v4376
    %4448 = vmatmul.mubr.f32.gmra.mrb[0].mxu0 %v4374
    %v4449 = vpop.f32.mrb[0].mxu0
    %v4450 = vadd.f32 0.0, %v4449
    %v4451 = vpop.f32.mrb[0].mxu0
    %4452 = vdwg.mxu0
    %4453 = vmatprep.subr.mxu0 0.0
    %4454 = vmatpush1.msra.mxu0 %v4353
    %4455 = vmatprep.subr.mxu0 0.0
    %4456 = vmatpush1.msra.mxu0 %v4354
    %4457 = vmatprep.subr.mxu0 0.0
    %4458 = vmatpush1.msra.mxu0 %v4355
    %4459 = vmatprep.subr.mxu0 0.0
    %4460 = vmatpush1.msra.mxu0 %v4356
    %4461 = vmatprep.subr.mxu0 0.0
    %4462 = vmatpush1.msra.mxu0 %v4357
    %4463 = vmatprep.subr.mxu0 0.0
    %4464 = vmatpush1.msra.mxu0 %v4358
    %4465 = vmatprep.subr.mxu0 0.0
    %4466 = vmatpush1.msra.mxu0 %v4359
    %4467 = vmatprep.subr.mxu0 0.0
    %4468 = vmatpush1.msra.mxu0 %v4360
    %4469 = vmatprep.subr.mxu0 0.0
    %4470 = vmatpush1.msra.mxu0 %v4361
    %4471 = vmatprep.subr.mxu0 0.0
    %4472 = vmatpush1.msra.mxu0 %v4362
    %4473 = vmatprep.subr.mxu0 0.0
    %4474 = vmatpush1.msra.mxu0 %v4363
    %4475 = vmatprep.subr.mxu0 0.0
    %4476 = vmatpush1.msra.mxu0 %v4364
    %4477 = vmatprep.subr.mxu0 0.0
    %4478 = vmatpush1.msra.mxu0 %v4365
    %4479 = vmatprep.subr.mxu0 0.0
    %4480 = vmatpush1.msra.mxu0 %v4366
    %4481 = vmatprep.subr.mxu0 0.0
    %4482 = vmatpush1.msra.mxu0 0.0
    %4483 = vmatprep.subr.mxu0 0.0
    %4484 = vmatpush1.msra.mxu0 0.0
    %4485 = vmatprep.subr.mxu0 0.0
    %4486 = vmatpush1.msra.mxu0 0.0
    %4487 = vmatprep.subr.mxu0 0.0
    %4488 = vmatpush1.msra.mxu0 0.0
    %4489 = vmatprep.subr.mxu0 0.0
    %4490 = vmatpush1.msra.mxu0 0.0
    %4491 = vmatprep.subr.mxu0 0.0
    %4492 = vmatpush1.msra.mxu0 0.0
    %4493 = vmatprep.subr.mxu0 0.0
    %4494 = vmatpush1.msra.mxu0 0.0
    %4495 = vmatprep.subr.mxu0 0.0
    %4496 = vmatpush1.msra.mxu0 0.0
    %4497 = vmatprep.subr.mxu0 0.0
    %4498 = vmatpush1.msra.mxu0 0.0
    %4499 = vmatprep.subr.mxu0 0.0
    %4500 = vmatpush1.msra.mxu0 0.0
    %4501 = vmatprep.subr.mxu0 0.0
    %4502 = vmatpush1.msra.mxu0 0.0
    %4503 = vmatprep.subr.mxu0 0.0
    %4504 = vmatpush1.msra.mxu0 0.0
    %4505 = vmatprep.subr.mxu0 0.0
    %4506 = vmatpush1.msra.mxu0 0.0
    %4507 = vmatprep.subr.mxu0 0.0
    %4508 = vmatpush1.msra.mxu0 0.0
    %4509 = vmatprep.subr.mxu0 0.0
    %4510 = vmatpush1.msra.mxu0 0.0
    %4511 = vmatprep.subr.mxu0 0.0
    %4512 = vmatpush1.msra.mxu0 0.0
    %4513 = vmatprep.subr.mxu0 0.0
    %4514 = vmatpush1.msra.mxu0 0.0
    %4515 = vmatprep.subr.mxu0 0.0
    %4516 = vmatpush1.msra.mxu0 0.0
    %4517 = vmatprep.mubr.f32.mxu0 0.0
    %4518 = vmatmul.mubr.f32.gmra.mrb[0].mxu0 %v4381
    %v4519 = vpop.f32.mrb[0].mxu0
    %v4520 = vadd.f32 %v4450, %v4519
    %v4521 = vpop.f32.mrb[0].mxu0
    %4522 = vdwg.mxu0
    %v4523 = vadd.f32 %v4319, %v4520
    %s4524 = scalar_lea.vmem %s5, 3312
    %v4525 = vld [vmem:[%s4524] sm:$0xff]
    %v4526 = vld [vmem:[%s4524 + $0x8] sm:$0xff]
    %v4527 = vld [vmem:[%s4524 + $0x10] sm:$0xff]
    %v4528 = vld [vmem:[%s4524 + $0x18] sm:$0xff]
    %v4529 = vld [vmem:[%s4524 + $0x20] sm:$0xff]
    %v4530 = vld [vmem:[%s4524 + $0x28] sm:$0xff]
    %v4531 = vld [vmem:[%s4524 + $0x30] sm:$0xff]
    %v4532 = vld [vmem:[%s4524 + $0x38] sm:$0xff]
    %v4533 = vld [vmem:[%s4524 + $0x40] sm:$0xff]
    %v4534 = vld [vmem:[%s4524 + $0x48] sm:$0xff]
    %v4535 = vld [vmem:[%s4524 + $0x50] sm:$0xff]
    %v4536 = vld [vmem:[%s4524 + $0x58] sm:$0xff]
    %v4537 = vld [vmem:[%s4524 + $0x60] sm:$0xff]
    %v4538 = vld [vmem:[%s4524 + $0x68] sm:$0xff]
    %v4539 = vld [vmem:[%s4524 + $0x70] sm:$0xff]
    %v4540 = vld [vmem:[%s4524 + $0x78] sm:$0xff]
    %v4541 = vld [vmem:[%s4524 + $0x80] sm:$0xff]
    %v4542 = vld [vmem:[%s4524 + $0x88] sm:$0xff]
    %v4543 = vld [vmem:[%s4524 + $0x90] sm:$0xff]
    %v4544 = vld [vmem:[%s4524 + $0x98] sm:$0xff]
    %v4545 = vld [vmem:[%s4524 + $0xa0] sm:$0xff]
    %v4546 = vld [vmem:[%s4524 + $0xa8] sm:$0xff]
    %v4547 = vld [vmem:[%s4524 + $0xb0] sm:$0xff]
    %v4548 = vld [vmem:[%s4524 + $0xb8] sm:$0xff]
    %v4549 = vld [vmem:[%s4524 + $0xc0] sm:$0xff]
    %v4550 = vld [vmem:[%s4524 + $0xc8] sm:$0xff]
    %v4551 = vld [vmem:[%s4524 + $0xd0] sm:$0xff]
    %v4552 = vld [vmem:[%s4524 + $0xd8] sm:$0xff]
    %v4553 = vld [vmem:[%s4524 + $0xe0] sm:$0xff]
    %v4554 = vld [vmem:[%s4524 + $0xe8] sm:$0xff]
    %v4555 = vld [vmem:[%s4524 + $0xf0] sm:$0xff]
    %v4556 = vld [vmem:[%s4524 + $0xf8] sm:$0xff]
    %v4557 = vld [vmem:[%s4524 + $0x100] sm:$0xff]
    %v4558 = vld [vmem:[%s4524 + $0x108] sm:$0xff]
    %v4559 = vld [vmem:[%s4524 + $0x110] sm:$0xff]
    %v4560 = vld [vmem:[%s4524 + $0x118] sm:$0xff]
    %v4561 = vld [vmem:[%s4524 + $0x120] sm:$0xff]
    %v4562 = vld [vmem:[%s4524 + $0x128] sm:$0xff]
    %v4563 = vld [vmem:[%s4524 + $0x130] sm:$0xff]
    %v4564 = vld [vmem:[%s4524 + $0x138] sm:$0xff]
    %v4565 = vld [vmem:[%s4524 + $0x140] sm:$0xff]
    %v4566 = vld [vmem:[%s4524 + $0x148] sm:$0xff]
    %v4567 = vld [vmem:[%s4524 + $0x150] sm:$0xff]
    %v4568 = vld [vmem:[%s4524 + $0x158] sm:$0xff]
    %v4569 = vld [vmem:[%s4524 + $0x160] sm:$0xff]
    %v4570 = vld [vmem:[%s4524 + $0x168] sm:$0xff]
    %v4571 = vrot.slane %v2696, 2
    %v4572 = vrot.slane %v2705, 1
    %v4573 = vsel %vm2809, %v4572, %v4571
    %v4574 = vrot.slane %v2697, 2
    %v4575 = vrot.slane %v2706, 1
    %v4576 = vsel %vm2809, %v4575, %v4574
    %v4577 = vrot.slane %v2698, 2
    %v4578 = vrot.slane %v2707, 1
    %v4579 = vsel %vm2809, %v4578, %v4577
    %v4582 = vsel %vm2659, %v4579, 0
    %4584 = vmatprep.subr.mxu0 0.0
    %4585 = vmatpush1.msra.mxu0 %v4525
    %4586 = vmatprep.subr.mxu0 0.0
    %4587 = vmatpush1.msra.mxu0 %v4526
    %4588 = vmatprep.subr.mxu0 0.0
    %4589 = vmatpush1.msra.mxu0 %v4527
    %4590 = vmatprep.subr.mxu0 0.0
    %4591 = vmatpush1.msra.mxu0 %v4528
    %4592 = vmatprep.subr.mxu0 0.0
    %4593 = vmatpush1.msra.mxu0 %v4529
    %4594 = vmatprep.subr.mxu0 0.0
    %4595 = vmatpush1.msra.mxu0 %v4530
    %4596 = vmatprep.subr.mxu0 0.0
    %4597 = vmatpush1.msra.mxu0 %v4531
    %4598 = vmatprep.subr.mxu0 0.0
    %4599 = vmatpush1.msra.mxu0 %v4532
    %4600 = vmatprep.subr.mxu0 0.0
    %4601 = vmatpush1.msra.mxu0 %v4533
    %4602 = vmatprep.subr.mxu0 0.0
    %4603 = vmatpush1.msra.mxu0 %v4534
    %4604 = vmatprep.subr.mxu0 0.0
    %4605 = vmatpush1.msra.mxu0 %v4535
    %4606 = vmatprep.subr.mxu0 0.0
    %4607 = vmatpush1.msra.mxu0 %v4536
    %4608 = vmatprep.subr.mxu0 0.0
    %4609 = vmatpush1.msra.mxu0 %v4537
    %4610 = vmatprep.subr.mxu0 0.0
    %4611 = vmatpush1.msra.mxu0 %v4538
    %4612 = vmatprep.subr.mxu0 0.0
    %4613 = vmatpush1.msra.mxu0 %v4539
    %4614 = vmatprep.subr.mxu0 0.0
    %4615 = vmatpush1.msra.mxu0 %v4540
    %4616 = vmatprep.subr.mxu0 0.0
    %4617 = vmatpush1.msra.mxu0 %v4541
    %4618 = vmatprep.subr.mxu0 0.0
    %4619 = vmatpush1.msra.mxu0 %v4542
    %4620 = vmatprep.subr.mxu0 0.0
    %4621 = vmatpush1.msra.mxu0 %v4543
    %4622 = vmatprep.subr.mxu0 0.0
    %4623 = vmatpush1.msra.mxu0 %v4544
    %4624 = vmatprep.subr.mxu0 0.0
    %4625 = vmatpush1.msra.mxu0 %v4545
    %4626 = vmatprep.subr.mxu0 0.0
    %4627 = vmatpush1.msra.mxu0 %v4546
    %4628 = vmatprep.subr.mxu0 0.0
    %4629 = vmatpush1.msra.mxu0 %v4547
    %4630 = vmatprep.subr.mxu0 0.0
    %4631 = vmatpush1.msra.mxu0 %v4548
    %4632 = vmatprep.subr.mxu0 0.0
    %4633 = vmatpush1.msra.mxu0 %v4549
    %4634 = vmatprep.subr.mxu0 0.0
    %4635 = vmatpush1.msra.mxu0 %v4550
    %4636 = vmatprep.subr.mxu0 0.0
    %4637 = vmatpush1.msra.mxu0 %v4551
    %4638 = vmatprep.subr.mxu0 0.0
    %4639 = vmatpush1.msra.mxu0 %v4552
    %4640 = vmatprep.subr.mxu0 0.0
    %4641 = vmatpush1.msra.mxu0 %v4553
    %4642 = vmatprep.subr.mxu0 0.0
    %4643 = vmatpush1.msra.mxu0 %v4554
    %4644 = vmatprep.subr.mxu0 0.0
    %4645 = vmatpush1.msra.mxu0 %v4555
    %4646 = vmatprep.subr.mxu0 0.0
    %4647 = vmatpush1.msra.mxu0 %v4556
    %4648 = vmatprep.mubr.f32.mxu0 %v4576
    %4649 = vmatmul.mubr.f32.gmra.mrb[0].mxu0 %v4573
    %v4650 = vpop.f32.mrb[0].mxu0
    %v4651 = vadd.f32 0.0, %v4650
    %v4652 = vpop.f32.mrb[0].mxu0
    %4653 = vdwg.mxu0
    %4654 = vmatprep.subr.mxu0 0.0
    %4655 = vmatpush1.msra.mxu0 %v4557
    %4656 = vmatprep.subr.mxu0 0.0
    %4657 = vmatpush1.msra.mxu0 %v4558
    %4658 = vmatprep.subr.mxu0 0.0
    %4659 = vmatpush1.msra.mxu0 %v4559
    %4660 = vmatprep.subr.mxu0 0.0
    %4661 = vmatpush1.msra.mxu0 %v4560
    %4662 = vmatprep.subr.mxu0 0.0
    %4663 = vmatpush1.msra.mxu0 %v4561
    %4664 = vmatprep.subr.mxu0 0.0
    %4665 = vmatpush1.msra.mxu0 %v4562
    %4666 = vmatprep.subr.mxu0 0.0
    %4667 = vmatpush1.msra.mxu0 %v4563
    %4668 = vmatprep.subr.mxu0 0.0
    %4669 = vmatpush1.msra.mxu0 %v4564
    %4670 = vmatprep.subr.mxu0 0.0
    %4671 = vmatpush1.msra.mxu0 %v4565
    %4672 = vmatprep.subr.mxu0 0.0
    %4673 = vmatpush1.msra.mxu0 %v4566
    %4674 = vmatprep.subr.mxu0 0.0
    %4675 = vmatpush1.msra.mxu0 %v4567
    %4676 = vmatprep.subr.mxu0 0.0
    %4677 = vmatpush1.msra.mxu0 %v4568
    %4678 = vmatprep.subr.mxu0 0.0
    %4679 = vmatpush1.msra.mxu0 %v4569
    %4680 = vmatprep.subr.mxu0 0.0
    %4681 = vmatpush1.msra.mxu0 %v4570
    %4682 = vmatprep.subr.mxu0 0.0
    %4683 = vmatpush1.msra.mxu0 0.0
    %4684 = vmatprep.subr.mxu0 0.0
    %4685 = vmatpush1.msra.mxu0 0.0
    %4686 = vmatprep.subr.mxu0 0.0
    %4687 = vmatpush1.msra.mxu0 0.0
    %4688 = vmatprep.subr.mxu0 0.0
    %4689 = vmatpush1.msra.mxu0 0.0
    %4690 = vmatprep.subr.mxu0 0.0
    %4691 = vmatpush1.msra.mxu0 0.0
    %4692 = vmatprep.subr.mxu0 0.0
    %4693 = vmatpush1.msra.mxu0 0.0
    %4694 = vmatprep.subr.mxu0 0.0
    %4695 = vmatpush1.msra.mxu0 0.0
    %4696 = vmatprep.subr.mxu0 0.0
    %4697 = vmatpush1.msra.mxu0 0.0
    %4698 = vmatprep.subr.mxu0 0.0
    %4699 = vmatpush1.msra.mxu0 0.0
    %4700 = vmatprep.subr.mxu0 0.0
    %4701 = vmatpush1.msra.mxu0 0.0
    %4702 = vmatprep.subr.mxu0 0.0
    %4703 = vmatpush1.msra.mxu0 0.0
    %4704 = vmatprep.subr.mxu0 0.0
    %4705 = vmatpush1.msra.mxu0 0.0
    %4706 = vmatprep.subr.mxu0 0.0
    %4707 = vmatpush1.msra.mxu0 0.0
    %4708 = vmatprep.subr.mxu0 0.0
    %4709 = vmatpush1.msra.mxu0 0.0
    %4710 = vmatprep.subr.mxu0 0.0
    %4711 = vmatpush1.msra.mxu0 0.0
    %4712 = vmatprep.subr.mxu0 0.0
    %4713 = vmatpush1.msra.mxu0 0.0
    %4714 = vmatprep.subr.mxu0 0.0
    %4715 = vmatpush1.msra.mxu0 0.0
    %4716 = vmatprep.subr.mxu0 0.0
    %4717 = vmatpush1.msra.mxu0 0.0
    %4718 = vmatprep.mubr.f32.mxu0 0.0
    %4719 = vmatmul.mubr.f32.gmra.mrb[0].mxu0 %v4582
    %v4720 = vpop.f32.mrb[0].mxu0
    %v4721 = vadd.f32 %v4651, %v4720
    %v4722 = vpop.f32.mrb[0].mxu0
    %4723 = vdwg.mxu0
    %v4724 = vadd.f32 %v4523, %v4721
    %s4725 = scalar_lea.vmem %s5, 3680
    %v4726 = vld [vmem:[%s4725] sm:$0xff]
    %v4727 = vld [vmem:[%s4725 + $0x8] sm:$0xff]
    %v4728 = vld [vmem:[%s4725 + $0x10] sm:$0xff]
    %v4729 = vld [vmem:[%s4725 + $0x18] sm:$0xff]
    %v4730 = vld [vmem:[%s4725 + $0x20] sm:$0xff]
    %v4731 = vld [vmem:[%s4725 + $0x28] sm:$0xff]
    %v4732 = vld [vmem:[%s4725 + $0x30] sm:$0xff]
    %v4733 = vld [vmem:[%s4725 + $0x38] sm:$0xff]
    %v4734 = vld [vmem:[%s4725 + $0x40] sm:$0xff]
    %v4735 = vld [vmem:[%s4725 + $0x48] sm:$0xff]
    %v4736 = vld [vmem:[%s4725 + $0x50] sm:$0xff]
    %v4737 = vld [vmem:[%s4725 + $0x58] sm:$0xff]
    %v4738 = vld [vmem:[%s4725 + $0x60] sm:$0xff]
    %v4739 = vld [vmem:[%s4725 + $0x68] sm:$0xff]
    %v4740 = vld [vmem:[%s4725 + $0x70] sm:$0xff]
    %v4741 = vld [vmem:[%s4725 + $0x78] sm:$0xff]
    %v4742 = vld [vmem:[%s4725 + $0x80] sm:$0xff]
    %v4743 = vld [vmem:[%s4725 + $0x88] sm:$0xff]
    %v4744 = vld [vmem:[%s4725 + $0x90] sm:$0xff]
    %v4745 = vld [vmem:[%s4725 + $0x98] sm:$0xff]
    %v4746 = vld [vmem:[%s4725 + $0xa0] sm:$0xff]
    %v4747 = vld [vmem:[%s4725 + $0xa8] sm:$0xff]
    %v4748 = vld [vmem:[%s4725 + $0xb0] sm:$0xff]
    %v4749 = vld [vmem:[%s4725 + $0xb8] sm:$0xff]
    %v4750 = vld [vmem:[%s4725 + $0xc0] sm:$0xff]
    %v4751 = vld [vmem:[%s4725 + $0xc8] sm:$0xff]
    %v4752 = vld [vmem:[%s4725 + $0xd0] sm:$0xff]
    %v4753 = vld [vmem:[%s4725 + $0xd8] sm:$0xff]
    %v4754 = vld [vmem:[%s4725 + $0xe0] sm:$0xff]
    %v4755 = vld [vmem:[%s4725 + $0xe8] sm:$0xff]
    %v4756 = vld [vmem:[%s4725 + $0xf0] sm:$0xff]
    %v4757 = vld [vmem:[%s4725 + $0xf8] sm:$0xff]
    %v4758 = vld [vmem:[%s4725 + $0x100] sm:$0xff]
    %v4759 = vld [vmem:[%s4725 + $0x108] sm:$0xff]
    %v4760 = vld [vmem:[%s4725 + $0x110] sm:$0xff]
    %v4761 = vld [vmem:[%s4725 + $0x118] sm:$0xff]
    %v4762 = vld [vmem:[%s4725 + $0x120] sm:$0xff]
    %v4763 = vld [vmem:[%s4725 + $0x128] sm:$0xff]
    %v4764 = vld [vmem:[%s4725 + $0x130] sm:$0xff]
    %v4765 = vld [vmem:[%s4725 + $0x138] sm:$0xff]
    %v4766 = vld [vmem:[%s4725 + $0x140] sm:$0xff]
    %v4767 = vld [vmem:[%s4725 + $0x148] sm:$0xff]
    %v4768 = vld [vmem:[%s4725 + $0x150] sm:$0xff]
    %v4769 = vld [vmem:[%s4725 + $0x158] sm:$0xff]
    %v4770 = vld [vmem:[%s4725 + $0x160] sm:$0xff]
    %v4771 = vld [vmem:[%s4725 + $0x168] sm:$0xff]
    %v4772 = vrot.slane %v2696, 4
    %v4773 = vrot.slane %v2705, 3
    %v4774 = vsel %vm2809, %v4773, %v4772
    %v4775 = vrot.slane %v2697, 4
    %v4776 = vrot.slane %v2706, 3
    %v4777 = vsel %vm2809, %v4776, %v4775
    %v4778 = vrot.slane %v2698, 4
    %v4779 = vrot.slane %v2707, 3
    %v4780 = vsel %vm2809, %v4779, %v4778
    %v4783 = vsel %vm2659, %v4780, 0
    %4785 = vmatprep.subr.mxu0 0.0
    %4786 = vmatpush1.msra.mxu0 %v4726
    %4787 = vmatprep.subr.mxu0 0.0
    %4788 = vmatpush1.msra.mxu0 %v4727
    %4789 = vmatprep.subr.mxu0 0.0
    %4790 = vmatpush1.msra.mxu0 %v4728
    %4791 = vmatprep.subr.mxu0 0.0
    %4792 = vmatpush1.msra.mxu0 %v4729
    %4793 = vmatprep.subr.mxu0 0.0
    %4794 = vmatpush1.msra.mxu0 %v4730
    %4795 = vmatprep.subr.mxu0 0.0
    %4796 = vmatpush1.msra.mxu0 %v4731
    %4797 = vmatprep.subr.mxu0 0.0
    %4798 = vmatpush1.msra.mxu0 %v4732
    %4799 = vmatprep.subr.mxu0 0.0
    %4800 = vmatpush1.msra.mxu0 %v4733
    %4801 = vmatprep.subr.mxu0 0.0
    %4802 = vmatpush1.msra.mxu0 %v4734
    %4803 = vmatprep.subr.mxu0 0.0
    %4804 = vmatpush1.msra.mxu0 %v4735
    %4805 = vmatprep.subr.mxu0 0.0
    %4806 = vmatpush1.msra.mxu0 %v4736
    %4807 = vmatprep.subr.mxu0 0.0
    %4808 = vmatpush1.msra.mxu0 %v4737
    %4809 = vmatprep.subr.mxu0 0.0
    %4810 = vmatpush1.msra.mxu0 %v4738
    %4811 = vmatprep.subr.mxu0 0.0
    %4812 = vmatpush1.msra.mxu0 %v4739
    %4813 = vmatprep.subr.mxu0 0.0
    %4814 = vmatpush1.msra.mxu0 %v4740
    %4815 = vmatprep.subr.mxu0 0.0
    %4816 = vmatpush1.msra.mxu0 %v4741
    %4817 = vmatprep.subr.mxu0 0.0
    %4818 = vmatpush1.msra.mxu0 %v4742
    %4819 = vmatprep.subr.mxu0 0.0
    %4820 = vmatpush1.msra.mxu0 %v4743
    %4821 = vmatprep.subr.mxu0 0.0
    %4822 = vmatpush1.msra.mxu0 %v4744
    %4823 = vmatprep.subr.mxu0 0.0
    %4824 = vmatpush1.msra.mxu0 %v4745
    %4825 = vmatprep.subr.mxu0 0.0
    %4826 = vmatpush1.msra.mxu0 %v4746
    %4827 = vmatprep.subr.mxu0 0.0
    %4828 = vmatpush1.msra.mxu0 %v4747
    %4829 = vmatprep.subr.mxu0 0.0
    %4830 = vmatpush1.msra.mxu0 %v4748
    %4831 = vmatprep.subr.mxu0 0.0
    %4832 = vmatpush1.msra.mxu0 %v4749
    %4833 = vmatprep.subr.mxu0 0.0
    %4834 = vmatpush1.msra.mxu0 %v4750
    %4835 = vmatprep.subr.mxu0 0.0
    %4836 = vmatpush1.msra.mxu0 %v4751
    %4837 = vmatprep.subr.mxu0 0.0
    %4838 = vmatpush1.msra.mxu0 %v4752
    %4839 = vmatprep.subr.mxu0 0.0
    %4840 = vmatpush1.msra.mxu0 %v4753
    %4841 = vmatprep.subr.mxu0 0.0
    %4842 = vmatpush1.msra.mxu0 %v4754
    %4843 = vmatprep.subr.mxu0 0.0
    %4844 = vmatpush1.msra.mxu0 %v4755
    %4845 = vmatprep.subr.mxu0 0.0
    %4846 = vmatpush1.msra.mxu0 %v4756
    %4847 = vmatprep.subr.mxu0 0.0
    %4848 = vmatpush1.msra.mxu0 %v4757
    %4849 = vmatprep.mubr.f32.mxu0 %v4777
    %4850 = vmatmul.mubr.f32.gmra.mrb[0].mxu0 %v4774
    %v4851 = vpop.f32.mrb[0].mxu0
    %v4852 = vadd.f32 0.0, %v4851
    %v4853 = vpop.f32.mrb[0].mxu0
    %4854 = vdwg.mxu0
    %4855 = vmatprep.subr.mxu0 0.0
    %4856 = vmatpush1.msra.mxu0 %v4758
    %4857 = vmatprep.subr.mxu0 0.0
    %4858 = vmatpush1.msra.mxu0 %v4759
    %4859 = vmatprep.subr.mxu0 0.0
    %4860 = vmatpush1.msra.mxu0 %v4760
    %4861 = vmatprep.subr.mxu0 0.0
    %4862 = vmatpush1.msra.mxu0 %v4761
    %4863 = vmatprep.subr.mxu0 0.0
    %4864 = vmatpush1.msra.mxu0 %v4762
    %4865 = vmatprep.subr.mxu0 0.0
    %4866 = vmatpush1.msra.mxu0 %v4763
    %4867 = vmatprep.subr.mxu0 0.0
    %4868 = vmatpush1.msra.mxu0 %v4764
    %4869 = vmatprep.subr.mxu0 0.0
    %4870 = vmatpush1.msra.mxu0 %v4765
    %4871 = vmatprep.subr.mxu0 0.0
    %4872 = vmatpush1.msra.mxu0 %v4766
    %4873 = vmatprep.subr.mxu0 0.0
    %4874 = vmatpush1.msra.mxu0 %v4767
    %4875 = vmatprep.subr.mxu0 0.0
    %4876 = vmatpush1.msra.mxu0 %v4768
    %4877 = vmatprep.subr.mxu0 0.0
    %4878 = vmatpush1.msra.mxu0 %v4769
    %4879 = vmatprep.subr.mxu0 0.0
    %4880 = vmatpush1.msra.mxu0 %v4770
    %4881 = vmatprep.subr.mxu0 0.0
    %4882 = vmatpush1.msra.mxu0 %v4771
    %4883 = vmatprep.subr.mxu0 0.0
    %4884 = vmatpush1.msra.mxu0 0.0
    %4885 = vmatprep.subr.mxu0 0.0
    %4886 = vmatpush1.msra.mxu0 0.0
    %4887 = vmatprep.subr.mxu0 0.0
    %4888 = vmatpush1.msra.mxu0 0.0
    %4889 = vmatprep.subr.mxu0 0.0
    %4890 = vmatpush1.msra.mxu0 0.0
    %4891 = vmatprep.subr.mxu0 0.0
    %4892 = vmatpush1.msra.mxu0 0.0
    %4893 = vmatprep.subr.mxu0 0.0
    %4894 = vmatpush1.msra.mxu0 0.0
    %4895 = vmatprep.subr.mxu0 0.0
    %4896 = vmatpush1.msra.mxu0 0.0
    %4897 = vmatprep.subr.mxu0 0.0
    %4898 = vmatpush1.msra.mxu0 0.0
    %4899 = vmatprep.subr.mxu0 0.0
    %4900 = vmatpush1.msra.mxu0 0.0
    %4901 = vmatprep.subr.mxu0 0.0
    %4902 = vmatpush1.msra.mxu0 0.0
    %4903 = vmatprep.subr.mxu0 0.0
    %4904 = vmatpush1.msra.mxu0 0.0
    %4905 = vmatprep.subr.mxu0 0.0
    %4906 = vmatpush1.msra.mxu0 0.0
    %4907 = vmatprep.subr.mxu0 0.0
    %4908 = vmatpush1.msra.mxu0 0.0
    %4909 = vmatprep.subr.mxu0 0.0
    %4910 = vmatpush1.msra.mxu0 0.0
    %4911 = vmatprep.subr.mxu0 0.0
    %4912 = vmatpush1.msra.mxu0 0.0
    %4913 = vmatprep.subr.mxu0 0.0
    %4914 = vmatpush1.msra.mxu0 0.0
    %4915 = vmatprep.subr.mxu0 0.0
    %4916 = vmatpush1.msra.mxu0 0.0
    %4917 = vmatprep.subr.mxu0 0.0
    %4918 = vmatpush1.msra.mxu0 0.0
    %4919 = vmatprep.mubr.f32.mxu0 0.0
    %4920 = vmatmul.mubr.f32.gmra.mrb[0].mxu0 %v4783
    %v4921 = vpop.f32.mrb[0].mxu0
    %v4922 = vadd.f32 %v4852, %v4921
    %v4923 = vpop.f32.mrb[0].mxu0
    %4924 = vdwg.mxu0
    %v4925 = vadd.f32 %v4724, %v4922
    %s4926 = scalar_lea.vmem %s5, 4048
    %v4927 = vld [vmem:[%s4926] sm:$0xff]
    %v4928 = vld [vmem:[%s4926 + $0x8] sm:$0xff]
    %v4929 = vld [vmem:[%s4926 + $0x10] sm:$0xff]
    %v4930 = vld [vmem:[%s4926 + $0x18] sm:$0xff]
    %v4931 = vld [vmem:[%s4926 + $0x20] sm:$0xff]
    %v4932 = vld [vmem:[%s4926 + $0x28] sm:$0xff]
    %v4933 = vld [vmem:[%s4926 + $0x30] sm:$0xff]
    %v4934 = vld [vmem:[%s4926 + $0x38] sm:$0xff]
    %v4935 = vld [vmem:[%s4926 + $0x40] sm:$0xff]
    %v4936 = vld [vmem:[%s4926 + $0x48] sm:$0xff]
    %v4937 = vld [vmem:[%s4926 + $0x50] sm:$0xff]
    %v4938 = vld [vmem:[%s4926 + $0x58] sm:$0xff]
    %v4939 = vld [vmem:[%s4926 + $0x60] sm:$0xff]
    %v4940 = vld [vmem:[%s4926 + $0x68] sm:$0xff]
    %v4941 = vld [vmem:[%s4926 + $0x70] sm:$0xff]
    %v4942 = vld [vmem:[%s4926 + $0x78] sm:$0xff]
    %v4943 = vld [vmem:[%s4926 + $0x80] sm:$0xff]
    %v4944 = vld [vmem:[%s4926 + $0x88] sm:$0xff]
    %v4945 = vld [vmem:[%s4926 + $0x90] sm:$0xff]
    %v4946 = vld [vmem:[%s4926 + $0x98] sm:$0xff]
    %v4947 = vld [vmem:[%s4926 + $0xa0] sm:$0xff]
    %v4948 = vld [vmem:[%s4926 + $0xa8] sm:$0xff]
    %v4949 = vld [vmem:[%s4926 + $0xb0] sm:$0xff]
    %v4950 = vld [vmem:[%s4926 + $0xb8] sm:$0xff]
    %v4951 = vld [vmem:[%s4926 + $0xc0] sm:$0xff]
    %v4952 = vld [vmem:[%s4926 + $0xc8] sm:$0xff]
    %v4953 = vld [vmem:[%s4926 + $0xd0] sm:$0xff]
    %v4954 = vld [vmem:[%s4926 + $0xd8] sm:$0xff]
    %v4955 = vld [vmem:[%s4926 + $0xe0] sm:$0xff]
    %v4956 = vld [vmem:[%s4926 + $0xe8] sm:$0xff]
    %v4957 = vld [vmem:[%s4926 + $0xf0] sm:$0xff]
    %v4958 = vld [vmem:[%s4926 + $0xf8] sm:$0xff]
    %v4959 = vld [vmem:[%s4926 + $0x100] sm:$0xff]
    %v4960 = vld [vmem:[%s4926 + $0x108] sm:$0xff]
    %v4961 = vld [vmem:[%s4926 + $0x110] sm:$0xff]
    %v4962 = vld [vmem:[%s4926 + $0x118] sm:$0xff]
    %v4963 = vld [vmem:[%s4926 + $0x120] sm:$0xff]
    %v4964 = vld [vmem:[%s4926 + $0x128] sm:$0xff]
    %v4965 = vld [vmem:[%s4926 + $0x130] sm:$0xff]
    %v4966 = vld [vmem:[%s4926 + $0x138] sm:$0xff]
    %v4967 = vld [vmem:[%s4926 + $0x140] sm:$0xff]
    %v4968 = vld [vmem:[%s4926 + $0x148] sm:$0xff]
    %v4969 = vld [vmem:[%s4926 + $0x150] sm:$0xff]
    %v4970 = vld [vmem:[%s4926 + $0x158] sm:$0xff]
    %v4971 = vld [vmem:[%s4926 + $0x160] sm:$0xff]
    %v4972 = vld [vmem:[%s4926 + $0x168] sm:$0xff]
    %v4973 = vrot.slane %v2696, 6
    %v4974 = vrot.slane %v2705, 5
    %v4975 = vsel %vm2809, %v4974, %v4973
    %v4976 = vrot.slane %v2697, 6
    %v4977 = vrot.slane %v2706, 5
    %v4978 = vsel %vm2809, %v4977, %v4976
    %v4979 = vrot.slane %v2698, 6
    %v4980 = vrot.slane %v2707, 5
    %v4981 = vsel %vm2809, %v4980, %v4979
    %v4984 = vsel %vm2659, %v4981, 0
    %4986 = vmatprep.subr.mxu0 0.0
    %4987 = vmatpush1.msra.mxu0 %v4927
    %4988 = vmatprep.subr.mxu0 0.0
    %4989 = vmatpush1.msra.mxu0 %v4928
    %4990 = vmatprep.subr.mxu0 0.0
    %4991 = vmatpush1.msra.mxu0 %v4929
    %4992 = vmatprep.subr.mxu0 0.0
    %4993 = vmatpush1.msra.mxu0 %v4930
    %4994 = vmatprep.subr.mxu0 0.0
    %4995 = vmatpush1.msra.mxu0 %v4931
    %4996 = vmatprep.subr.mxu0 0.0
    %4997 = vmatpush1.msra.mxu0 %v4932
    %4998 = vmatprep.subr.mxu0 0.0
    %4999 = vmatpush1.msra.mxu0 %v4933
    %5000 = vmatprep.subr.mxu0 0.0
    %5001 = vmatpush1.msra.mxu0 %v4934
    %5002 = vmatprep.subr.mxu0 0.0
    %5003 = vmatpush1.msra.mxu0 %v4935
    %5004 = vmatprep.subr.mxu0 0.0
    %5005 = vmatpush1.msra.mxu0 %v4936
    %5006 = vmatprep.subr.mxu0 0.0
    %5007 = vmatpush1.msra.mxu0 %v4937
    %5008 = vmatprep.subr.mxu0 0.0
    %5009 = vmatpush1.msra.mxu0 %v4938
    %5010 = vmatprep.subr.mxu0 0.0
    %5011 = vmatpush1.msra.mxu0 %v4939
    %5012 = vmatprep.subr.mxu0 0.0
    %5013 = vmatpush1.msra.mxu0 %v4940
    %5014 = vmatprep.subr.mxu0 0.0
    %5015 = vmatpush1.msra.mxu0 %v4941
    %5016 = vmatprep.subr.mxu0 0.0
    %5017 = vmatpush1.msra.mxu0 %v4942
    %5018 = vmatprep.subr.mxu0 0.0
    %5019 = vmatpush1.msra.mxu0 %v4943
    %5020 = vmatprep.subr.mxu0 0.0
    %5021 = vmatpush1.msra.mxu0 %v4944
    %5022 = vmatprep.subr.mxu0 0.0
    %5023 = vmatpush1.msra.mxu0 %v4945
    %5024 = vmatprep.subr.mxu0 0.0
    %5025 = vmatpush1.msra.mxu0 %v4946
    %5026 = vmatprep.subr.mxu0 0.0
    %5027 = vmatpush1.msra.mxu0 %v4947
    %5028 = vmatprep.subr.mxu0 0.0
    %5029 = vmatpush1.msra.mxu0 %v4948
    %5030 = vmatprep.subr.mxu0 0.0
    %5031 = vmatpush1.msra.mxu0 %v4949
    %5032 = vmatprep.subr.mxu0 0.0
    %5033 = vmatpush1.msra.mxu0 %v4950
    %5034 = vmatprep.subr.mxu0 0.0
    %5035 = vmatpush1.msra.mxu0 %v4951
    %5036 = vmatprep.subr.mxu0 0.0
    %5037 = vmatpush1.msra.mxu0 %v4952
    %5038 = vmatprep.subr.mxu0 0.0
    %5039 = vmatpush1.msra.mxu0 %v4953
    %5040 = vmatprep.subr.mxu0 0.0
    %5041 = vmatpush1.msra.mxu0 %v4954
    %5042 = vmatprep.subr.mxu0 0.0
    %5043 = vmatpush1.msra.mxu0 %v4955
    %5044 = vmatprep.subr.mxu0 0.0
    %5045 = vmatpush1.msra.mxu0 %v4956
    %5046 = vmatprep.subr.mxu0 0.0
    %5047 = vmatpush1.msra.mxu0 %v4957
    %5048 = vmatprep.subr.mxu0 0.0
    %5049 = vmatpush1.msra.mxu0 %v4958
    %5050 = vmatprep.mubr.f32.mxu0 %v4978
    %5051 = vmatmul.mubr.f32.gmra.mrb[0].mxu0 %v4975
    %v5052 = vpop.f32.mrb[0].mxu0
    %v5053 = vadd.f32 0.0, %v5052
    %v5054 = vpop.f32.mrb[0].mxu0
    %5055 = vdwg.mxu0
    %5056 = vmatprep.subr.mxu0 0.0
    %5057 = vmatpush1.msra.mxu0 %v4959
    %5058 = vmatprep.subr.mxu0 0.0
    %5059 = vmatpush1.msra.mxu0 %v4960
    %5060 = vmatprep.subr.mxu0 0.0
    %5061 = vmatpush1.msra.mxu0 %v4961
    %5062 = vmatprep.subr.mxu0 0.0
    %5063 = vmatpush1.msra.mxu0 %v4962
    %5064 = vmatprep.subr.mxu0 0.0
    %5065 = vmatpush1.msra.mxu0 %v4963
    %5066 = vmatprep.subr.mxu0 0.0
    %5067 = vmatpush1.msra.mxu0 %v4964
    %5068 = vmatprep.subr.mxu0 0.0
    %5069 = vmatpush1.msra.mxu0 %v4965
    %5070 = vmatprep.subr.mxu0 0.0
    %5071 = vmatpush1.msra.mxu0 %v4966
    %5072 = vmatprep.subr.mxu0 0.0
    %5073 = vmatpush1.msra.mxu0 %v4967
    %5074 = vmatprep.subr.mxu0 0.0
    %5075 = vmatpush1.msra.mxu0 %v4968
    %5076 = vmatprep.subr.mxu0 0.0
    %5077 = vmatpush1.msra.mxu0 %v4969
    %5078 = vmatprep.subr.mxu0 0.0
    %5079 = vmatpush1.msra.mxu0 %v4970
    %5080 = vmatprep.subr.mxu0 0.0
    %5081 = vmatpush1.msra.mxu0 %v4971
    %5082 = vmatprep.subr.mxu0 0.0
    %5083 = vmatpush1.msra.mxu0 %v4972
    %5084 = vmatprep.subr.mxu0 0.0
    %5085 = vmatpush1.msra.mxu0 0.0
    %5086 = vmatprep.subr.mxu0 0.0
    %5087 = vmatpush1.msra.mxu0 0.0
    %5088 = vmatprep.subr.mxu0 0.0
    %5089 = vmatpush1.msra.mxu0 0.0
    %5090 = vmatprep.subr.mxu0 0.0
    %5091 = vmatpush1.msra.mxu0 0.0
    %5092 = vmatprep.subr.mxu0 0.0
    %5093 = vmatpush1.msra.mxu0 0.0
    %5094 = vmatprep.subr.mxu0 0.0
    %5095 = vmatpush1.msra.mxu0 0.0
    %5096 = vmatprep.subr.mxu0 0.0
    %5097 = vmatpush1.msra.mxu0 0.0
    %5098 = vmatprep.subr.mxu0 0.0
    %5099 = vmatpush1.msra.mxu0 0.0
    %5100 = vmatprep.subr.mxu0 0.0
    %5101 = vmatpush1.msra.mxu0 0.0
    %5102 = vmatprep.subr.mxu0 0.0
    %5103 = vmatpush1.msra.mxu0 0.0
    %5104 = vmatprep.subr.mxu0 0.0
    %5105 = vmatpush1.msra.mxu0 0.0
    %5106 = vmatprep.subr.mxu0 0.0
    %5107 = vmatpush1.msra.mxu0 0.0
    %5108 = vmatprep.subr.mxu0 0.0
    %5109 = vmatpush1.msra.mxu0 0.0
    %5110 = vmatprep.subr.mxu0 0.0
    %5111 = vmatpush1.msra.mxu0 0.0
    %5112 = vmatprep.subr.mxu0 0.0
    %5113 = vmatpush1.msra.mxu0 0.0
    %5114 = vmatprep.subr.mxu0 0.0
    %5115 = vmatpush1.msra.mxu0 0.0
    %5116 = vmatprep.subr.mxu0 0.0
    %5117 = vmatpush1.msra.mxu0 0.0
    %5118 = vmatprep.subr.mxu0 0.0
    %5119 = vmatpush1.msra.mxu0 0.0
    %5120 = vmatprep.mubr.f32.mxu0 0.0
    %5121 = vmatmul.mubr.f32.gmra.mrb[0].mxu0 %v4984
    %v5122 = vpop.f32.mrb[0].mxu0
    %v5123 = vadd.f32 %v5053, %v5122
    %v5124 = vpop.f32.mrb[0].mxu0
    %5125 = vdwg.mxu0
    %v5126 = vadd.f32 %v4925, %v5123
    %v5127 = vld [vmem:[%s6] sm:$0x1]
    %v5129 = vlaneseq
    %v5130 = vshrl.u32 %v5129, 7
    %v5131 = vsub.s32 0, %v5130
    %v5132 = vrot.slane %v5127, %v5131
    %v5134 = vadd.f32 %v5126, %v5132
    %vm5135 = vcmask 74752
    %5136 = vst.msk [vmem:[#allocation2] sm:$0x3] %vm5135, %v5134
    // Predicated region
    $region30: #{tpu_custom_call.1} parent=1 // pred_check
      _
    $region31: #{tpu_custom_call.1} parent=1 // pred_check_branch
      %5138 = sbr.rel (0) target = $region33
    $region32: #{tpu_custom_call.1} parent=1 // pred_region
      %s5140 = ssub.s32 32, 32
      %5141 = vsyncadd [#allocation3], %s5140
      %s5143 = sshll.u32 [#allocation2], 4
      %s5144 = int_to_ptr.vmem [resolvable:$true] %s5143
      %5146 = dma.vmem_to_hbm [thread:$0]  %s5144, 32, %s7, [#allocation3]
    $region33: #{tpu_custom_call.1} parent=1 // pred_fallthru
      _
    // Predicated region
    $region34: #{tpu_custom_call.1} parent=1 // pred_check
      _
    $region35: #{tpu_custom_call.1} parent=1 // pred_check_branch
      %5148 = sbr.rel (0) target = $region37
    $region36: #{tpu_custom_call.1} parent=1 // pred_region
      %5149 = dma.done [#allocation3], 32
    $region37: #{tpu_custom_call.1} parent=1 // pred_fallthru
      _
    %5150 = vsyncpa [#allocation3], 1

</llo_original>
